<compile_context>
chip_gen: v6e
topology: v6e:2x2x1
jax: 0.10.0
libtpu: 0.0.40
codegen_flags: <defaults>
</compile_context>

<pallas_src>
import math
from functools import partial

import jax
import jax.numpy as jnp
from jax import lax
from jax.experimental import pallas as pl
from jax.experimental.pallas import tpu as pltpu

_INV_SQRT2 = 1.0 / math.sqrt(2.0)
_BN_EPS = 1e-5
_LANES = 128


def _round_up(x, m):
    return (x + m - 1) // m * m


def _gelu(x):
    # exact (erf-based) GELU, matching torch.nn.GELU() default
    return 0.5 * x * (1.0 + lax.erf(x * _INV_SQRT2))


def _tpu_config():
    """Per-generation (row-tile cap, vmem_limit_bytes), derived from VMEM capacity."""
    try:
        cap = getattr(pltpu.get_tpu_info(), "vmem_capacity_bytes", None)
    except Exception:
        cap = None
    if not cap:
        return 512, 32 * 1024 * 1024                      # conservative fallback
    if cap >= 100 * 1024 * 1024:                          # v5e / v6e: 128 MiB VMEM
        return 1024, 96 * 1024 * 1024
    return 512, min(48 * 1024 * 1024, cap * 3 // 4)       # v7x: 64 MiB VMEM


def _pick_row_chunk(H):
    """Output-row chunk for pass A (accumulator stays vreg-resident)."""
    for r in (8, 4, 2):
        if H % r == 0:
            return r
    return H


def _pick_row_tile(M, cap):
    """Row tile for passes B/C: largest multiple-of-8 divisor of M <= cap, else pad M."""
    for t in range(cap, 7, -8):
        if M % t == 0:
            return t, M
    if M <= cap:
        t = _round_up(M, 8)
        return t, t
    return cap, _round_up(M, cap)


# --------------------------------------------------------------------------------------
# Pass A: depthwise conv + bias + GELU, per-block BN1 partial statistics.
# Block: one batch element x one 128-channel tile (whole spatial extent + halo).
# Inner fori_loop over 8-row output chunks keeps the f32 accumulator in vregs; W-taps roll
# only the small chunk instead of the full image.
# --------------------------------------------------------------------------------------
def _dw_gelu_stats_kernel(K, rh, xpad_ref, dww_ref, dwb_ref, h1_ref, s_ref, ss_ref):
    H, W, tc = h1_ref.shape
    Hp, Wp, _ = xpad_ref.shape
    n_chunks = H // rh

    wgt = dww_ref[...].astype(jnp.float32)        # (K*K, tc) — tiny, loop-invariant
    bias = dwb_ref[0, :].astype(jnp.float32)      # (tc,)

    def chunk_body(c, carry):
        s_acc, ss_acc = carry
        start = c * rh
        if rh % 8 == 0:
            start = pl.multiple_of(start, rh)
        # (rh + K - 1, Wp, tc) haloed input chunk
        xch = xpad_ref[pl.ds(start, rh + K - 1), :, :].astype(jnp.float32)

        acc = jnp.zeros((rh, W, tc), jnp.float32)
        for j in range(K):
            # W-direction tap: XLU roll of the small chunk, then an aligned [0:W] window.
            xj = xch if j == 0 else pltpu.roll(xch, Wp - j, axis=1)   # == jnp.roll(xch, -j, 1)
            xj = xj[:, :W, :]
            for i in range(K):
                # H-direction tap: cheap leading-dim slice; acc stays resident in vregs.
                acc = acc + xj[i:i + rh] * wgt[i * K + j, :]

        h = _gelu(acc + bias)                                          # f32
        h1_ref[pl.ds(start, rh), :, :] = h.astype(h1_ref.dtype)        # bf16 store (perf cfg)

        hf = h.reshape(rh * W, tc)                                     # stats stay in f32
        s_acc = s_acc + jnp.sum(hf, axis=0, keepdims=True)
        ss_acc = ss_acc + jnp.sum(hf * hf, axis=0, keepdims=True)
        return s_acc, ss_acc

    init = (jnp.zeros((1, tc), jnp.float32), jnp.zeros((1, tc), jnp.float32))
    s_fin, ss_fin = lax.fori_loop(0, n_chunks, chunk_body, init)
    s_ref[...] = s_fin
    ss_ref[...] = ss_fin


# --------------------------------------------------------------------------------------
# Pass B: BN1 affine + residual, 1x1 conv (MXU matmul) + bias + GELU, BN2 partial stats.
# Block: a (tm, Cp) row tile of the flattened (Mp, Cp) activations (Mp = padded N*H*W).
# --------------------------------------------------------------------------------------
def _pointwise_kernel(M_real, tm, needs_mask,
                      h1_ref, x_ref, s1_ref, b1_ref, pww_ref, pwb_ref,
                      out1_ref, h2_ref, ps_ref, pss_ref):
    out1 = (h1_ref[...].astype(jnp.float32) * s1_ref[0, :] + b1_ref[0, :]
            + x_ref[...].astype(jnp.float32))
    out1_ref[...] = out1.astype(out1_ref.dtype)

    # 1x1 conv == channel matmul; bf16 inputs (perf cfg) with f32 accumulation on the MXU.
    # TODO(synk): on v7x, single-buffer the constant weight block via pipeline_mode=pl.Buffered(1).
    pw = jnp.dot(out1.astype(pww_ref.dtype), pww_ref[...],
                 preferred_element_type=jnp.float32)
    h2 = _gelu(pw + pwb_ref[0, :].astype(jnp.float32))
    h2_ref[...] = h2.astype(h2_ref.dtype)

    if needs_mask:   # static: only when M was padded up to a tile multiple
        row = pl.program_id(0) * tm + lax.broadcasted_iota(jnp.int32, (tm, 1), 0)
        h2 = jnp.where(row < M_real, h2, 0.0)
    ps_ref[...] = jnp.sum(h2, axis=0, keepdims=True)
    pss_ref[...] = jnp.sum(h2 * h2, axis=0, keepdims=True)


# --------------------------------------------------------------------------------------
# Pass C: BN2 affine + residual.
# --------------------------------------------------------------------------------------
def _bn2_residual_kernel(h2_ref, out1_ref, s2_ref, b2_ref, o_ref):
    o_ref[...] = (h2_ref[...].astype(jnp.float32) * s2_ref[0, :] + b2_ref[0, :]
                  + out1_ref[...].astype(jnp.float32)).astype(o_ref.dtype)


def _bn_scale_shift(psum, psumsq, gamma, beta, count):
    # psum/psumsq: (G, 1, Cp) partial sums -> per-channel biased mean/var (training-mode BN)
    s = jnp.sum(psum, axis=0)                 # (1, Cp)
    ss = jnp.sum(psumsq, axis=0)              # (1, Cp)
    mean = s / count
    var = jnp.maximum(ss / count - mean * mean, 0.0)
    scale = gamma * lax.rsqrt(var + _BN_EPS)
    shift = beta - mean * scale
    return scale, shift


@partial(jax.jit, static_argnames=("kernel_size", "compute_dtype"))
def conv_mixer_layer_nhwc(x, params, *, kernel_size, compute_dtype=jnp.bfloat16):
    """x: (N, H, W, C) float32 -> (N, H, W, C) float32 (NHWC end-to-end, no transposes).
    compute_dtype controls the HBM intermediates (h1/out1/h2) and the MXU matmul inputs;
    all BN statistics / GELU / affine math stays f32."""
    N, H, W, C = x.shape
    K = kernel_size
    Cp = params["dw_w"].shape[-1]             # lane-padded channel count (multiple of 128)
    total = K - 1
    pad_lo = total // 2                        # torch padding='same' convention
    Hp = H + total
    Wp = _round_up(W + total, 8)               # sublane-aligned padded width (extra cols are 0)

    f32 = jnp.float32
    inter_dtype = compute_dtype
    tc = _LANES
    nc = Cp // tc
    tile_cap, vmem_limit = _tpu_config()

    # Single combined channel+spatial pad for the conv input; channel-only pad for the residual.
    xpad = jnp.pad(x, ((0, 0), (pad_lo, Hp - H - pad_lo),
                       (pad_lo, Wp - W - pad_lo), (0, Cp - C)))
    xc = jnp.pad(x, ((0, 0), (0, 0), (0, 0), (0, Cp - C))) if Cp != C else x

    # ---------------- pass A ----------------
    rh = _pick_row_chunk(H)
    h1, ps1, pss1 = pl.pallas_call(
        partial(_dw_gelu_stats_kernel, K, rh),
        grid=(N, nc),
        in_specs=[
            pl.BlockSpec((None, Hp, Wp, tc), lambda n, c: (n, 0, 0, c)),
            pl.BlockSpec((K * K, tc), lambda n, c: (0, c)),
            pl.BlockSpec((1, tc), lambda n, c: (0, c)),
        ],
        out_specs=(
            pl.BlockSpec((None, H, W, tc), lambda n, c: (n, 0, 0, c)),
            pl.BlockSpec((None, 1, tc), lambda n, c: (n, 0, c)),
            pl.BlockSpec((None, 1, tc), lambda n, c: (n, 0, c)),
        ),
        out_shape=(
            jax.ShapeDtypeStruct((N, H, W, Cp), inter_dtype),
            jax.ShapeDtypeStruct((N, 1, Cp), f32),
            jax.ShapeDtypeStruct((N, 1, Cp), f32),
        ),
        compiler_params=pltpu.CompilerParams(
            dimension_semantics=("parallel", "parallel"),
            vmem_limit_bytes=vmem_limit),
    )(xpad, params["dw_w"], params["dw_b"])

    count = jnp.float32(N * H * W)
    scale1, shift1 = _bn_scale_shift(ps1, pss1, params["bn1_g"], params["bn1_b"], count)

    # ---------------- pass B ----------------
    M = N * H * W
    tm, Mp = _pick_row_tile(M, tile_cap)
    needs_mask = Mp != M
    G = Mp // tm

    h1_2d = h1.reshape(M, Cp)
    x_2d = xc.reshape(M, Cp)
    if needs_mask:
        h1_2d = jnp.pad(h1_2d, ((0, Mp - M), (0, 0)))
        x_2d = jnp.pad(x_2d, ((0, Mp - M), (0, 0)))
    pw_w = params["pw_w"].astype(compute_dtype)

    out1_2d, h2_2d, ps2, pss2 = pl.pallas_call(
        partial(_pointwise_kernel, M, tm, needs_mask),
        grid=(G,),
        in_specs=[
            pl.BlockSpec((tm, Cp), lambda i: (i, 0)),
            pl.BlockSpec((tm, Cp), lambda i: (i, 0)),
            pl.BlockSpec((1, Cp), lambda i: (0, 0)),
            pl.BlockSpec((1, Cp), lambda i: (0, 0)),
            pl.BlockSpec((Cp, Cp), lambda i: (0, 0)),
            pl.BlockSpec((1, Cp), lambda i: (0, 0)),
        ],
        out_specs=(
            pl.BlockSpec((tm, Cp), lambda i: (i, 0)),
            pl.BlockSpec((tm, Cp), lambda i: (i, 0)),
            pl.BlockSpec((None, 1, Cp), lambda i: (i, 0, 0)),
            pl.BlockSpec((None, 1, Cp), lambda i: (i, 0, 0)),
        ),
        out_shape=(
            jax.ShapeDtypeStruct((Mp, Cp), inter_dtype),
            jax.ShapeDtypeStruct((Mp, Cp), inter_dtype),
            jax.ShapeDtypeStruct((G, 1, Cp), f32),
            jax.ShapeDtypeStruct((G, 1, Cp), f32),
        ),
        compiler_params=pltpu.CompilerParams(
            dimension_semantics=("parallel",),
            vmem_limit_bytes=vmem_limit),
    )(h1_2d, x_2d, scale1, shift1, pw_w, params["pw_b"])

    scale2, shift2 = _bn_scale_shift(ps2, pss2, params["bn2_g"], params["bn2_b"], count)

    # ---------------- pass C ----------------
    out_2d = pl.pallas_call(
        _bn2_residual_kernel,
        grid=(G,),
        in_specs=[
            pl.BlockSpec((tm, Cp), lambda i: (i, 0)),
            pl.BlockSpec((tm, Cp), lambda i: (i, 0)),
            pl.BlockSpec((1, Cp), lambda i: (0, 0)),
            pl.BlockSpec((1, Cp), lambda i: (0, 0)),
        ],
        out_specs=pl.BlockSpec((tm, Cp), lambda i: (i, 0)),
        out_shape=jax.ShapeDtypeStruct((Mp, Cp), f32),
        compiler_params=pltpu.CompilerParams(
            dimension_semantics=("parallel",),
            vmem_limit_bytes=vmem_limit),
    )(h2_2d, out1_2d, scale2, shift2)

    out = out_2d[:M].reshape(N, H, W, Cp)
    return out[..., :C] if Cp != C else out


@partial(jax.jit, static_argnames=("kernel_size", "compute_dtype"))
def conv_mixer_layer(x_nchw, params, *, kernel_size, compute_dtype=jnp.bfloat16):
    """PyTorch-layout wrapper: (N, C, H, W) -> (N, C, H, W).
    In a real model keep activations NHWC end-to-end and call conv_mixer_layer_nhwc directly."""
    x = jnp.transpose(x_nchw, (0, 2, 3, 1))
    y = conv_mixer_layer_nhwc(x, params, kernel_size=kernel_size, compute_dtype=compute_dtype)
    return jnp.transpose(y, (0, 3, 1, 2))


# --------------------------------------------------------------------------------------
# Parameter init (torch layout) + packing into padded kernel layout
# --------------------------------------------------------------------------------------
def init_params(key, dim, kernel_size):
    C, K = dim, kernel_size
    ks = jax.random.split(key, 8)
    return {
        "dw_w": jax.random.normal(ks[0], (C, 1, K, K), jnp.float32) * 0.2,   # groups=C conv
        "dw_b": jax.random.normal(ks[1], (C,), jnp.float32) * 0.1,
        "pw_w": jax.random.normal(ks[2], (C, C, 1, 1), jnp.float32) * 0.2,   # 1x1 conv
        "pw_b": jax.random.normal(ks[3], (C,), jnp.float32) * 0.1,
        "bn1_g": 1.0 + 0.1 * jax.random.normal(ks[4], (C,), jnp.float32),
        "bn1_b": 0.1 * jax.random.normal(ks[5], (C,), jnp.float32),
        "bn2_g": 1.0 + 0.1 * jax.random.normal(ks[6], (C,), jnp.float32),
        "bn2_b": 0.1 * jax.random.normal(ks[7], (C,), jnp.float32),
    }


def pack_params(tp, kernel_size):
    """Convert torch-layout params to the lane-padded kernel layout (done once, offline)."""
    C = tp["dw_b"].shape[0]
    K = kernel_size
    Cp = _round_up(C, _LANES)
    pc = Cp - C

    def pad_c(a):
        return jnp.pad(a, [(0, 0)] * (a.ndim - 1) + [(0, pc)]) if pc else a

    dw_w = pad_c(jnp.transpose(tp["dw_w"][:, 0], (1, 2, 0)).reshape(K * K, C))   # (K*K, Cp)
    pw_w = jnp.transpose(tp["pw_w"][:, :, 0, 0], (1, 0))                          # (Cin, Cout)
    if pc:
        pw_w = jnp.pad(pw_w, ((0, pc), (0, pc)))
    return {
        "dw_w": dw_w,
        "dw_b": pad_c(tp["dw_b"].reshape(1, C)),
        "pw_w": pw_w,
        "pw_b": pad_c(tp["pw_b"].reshape(1, C)),
        "bn1_g": pad_c(tp["bn1_g"].reshape(1, C)),
        "bn1_b": pad_c(tp["bn1_b"].reshape(1, C)),
        "bn2_g": pad_c(tp["bn2_g"].reshape(1, C)),
        "bn2_b": pad_c(tp["bn2_b"].reshape(1, C)),
    }


# --------------------------------------------------------------------------------------
# Plain-JAX reference matching the PyTorch module (training-mode BatchNorm)
# --------------------------------------------------------------------------------------
def reference_nchw(x, tp, K):
    C = x.shape[1]
    pad_lo = (K - 1) // 2
    pad = (pad_lo, K - 1 - pad_lo)

    dw = lax.conv_general_dilated(
        x, tp["dw_w"], (1, 1), [pad, pad],
        dimension_numbers=("NCHW", "OIHW", "NCHW"), feature_group_count=C)
    dw = dw + tp["dw_b"][None, :, None, None]
    h = _gelu(dw)
    mean = jnp.mean(h, axis=(0, 2, 3), keepdims=True)
    var = jnp.mean(jnp.square(h - mean), axis=(0, 2, 3), keepdims=True)
    h = (tp["bn1_g"][None, :, None, None] * (h - mean) * lax.rsqrt(var + _BN_EPS)
         + tp["bn1_b"][None, :, None, None])
    out1 = h + x

    pw = lax.conv_general_dilated(
        out1, tp["pw_w"], (1, 1), "VALID", dimension_numbers=("NCHW", "OIHW", "NCHW"))
    pw = pw + tp["pw_b"][None, :, None, None]
    h2 = _gelu(pw)
    mean2 = jnp.mean(h2, axis=(0, 2, 3), keepdims=True)
    var2 = jnp.mean(jnp.square(h2 - mean2), axis=(0, 2, 3), keepdims=True)
    h2 = (tp["bn2_g"][None, :, None, None] * (h2 - mean2) * lax.rsqrt(var2 + _BN_EPS)
          + tp["bn2_b"][None, :, None, None])
    return h2 + out1


if __name__ == "__main__":
    key = jax.random.PRNGKey(0)
    k_x, k_p, k_x2 = jax.random.split(key, 3)

    dim, kernel_size = 4, 3
    x = jax.random.normal(k_x, (2, dim, 16, 16), jnp.float32)   # NCHW, as in PyTorch

    tparams = init_params(k_p, dim, kernel_size)
    params = pack_params(tparams, kernel_size)
    ref = reference_nchw(x, tparams, kernel_size)

    # Strict check: f32 intermediates + f32 pointwise matmul
    out = conv_mixer_layer(x, params, kernel_size=kernel_size, compute_dtype=jnp.float32)
    out = jax.block_until_ready(out)
    err = float(jnp.max(jnp.abs(out - ref)))
    assert jnp.allclose(out, ref, atol=1e-4, rtol=1e-4), f"f32 path max abs err {err}"

    # Performance config (bf16 HBM intermediates + bf16 MXU inputs, f32 accumulation/stats)
    out_bf = conv_mixer_layer(x, params, kernel_size=kernel_size, compute_dtype=jnp.bfloat16)
    out_bf = jax.block_until_ready(out_bf)
    err_bf = float(jnp.max(jnp.abs(out_bf - ref)))
    assert jnp.allclose(out_bf, ref, atol=5e-2, rtol=5e-2), f"bf16 path max abs err {err_bf}"

    # Awkward spatial size: exercises the padded / masked row-tile path of passes B/C
    x2 = jax.random.normal(k_x2, (1, dim, 9, 9), jnp.float32)
    ref2 = reference_nchw(x2, tparams, kernel_size)
    out2 = conv_mixer_layer(x2, params, kernel_size=kernel_size, compute_dtype=jnp.float32)
    out2 = jax.block_until_ready(out2)
    err2 = float(jnp.max(jnp.abs(out2 - ref2)))
    assert jnp.allclose(out2, ref2, atol=1e-4, rtol=1e-4), f"masked path max abs err {err2}"

    print("KERNEL_OK")
</pallas_src>

<mosaic_0001>
module attributes {stable_mosaic.version = 11 : i64} {
  func.func @_dw_gelu_stats_kernel(%arg0: i32, %arg1: i32, %arg2: memref<1x18x24x128xf32, #tpu.memory_space<vmem>>, %arg3: memref<9x128xf32, #tpu.memory_space<vmem>>, %arg4: memref<1x128xf32, #tpu.memory_space<vmem>>, %arg5: memref<1x16x16x128xf32, #tpu.memory_space<vmem>>, %arg6: memref<1x1x128xf32, #tpu.memory_space<vmem>>, %arg7: memref<1x1x128xf32, #tpu.memory_space<vmem>>) attributes {dimension_semantics = [#tpu.dimension_semantics<parallel>, #tpu.dimension_semantics<parallel>], iteration_bounds = array<i64: 2, 1>, scalar_prefetch = 0 : i64, scratch_operands = 0 : i64, tpu.core_type = #tpu.core_type<tc>, window_params = [{transform_indices = @transform_0, window_bounds = array<i64: 1, 18, 24, 128>}, {transform_indices = @transform_1, window_bounds = array<i64: 9, 128>}, {transform_indices = @transform_2, window_bounds = array<i64: 1, 128>}, {transform_indices = @transform_3, window_bounds = array<i64: 1, 16, 16, 128>}, {transform_indices = @transform_4, window_bounds = array<i64: 1, 1, 128>}, {transform_indices = @transform_5, window_bounds = array<i64: 1, 1, 128>}]} {
    %c0 = arith.constant 0 : index
    %c0_0 = arith.constant 0 : index
    %0 = vector.load %arg3[%c0, %c0_0] : memref<9x128xf32, #tpu.memory_space<vmem>>, vector<9x128xf32>
    %c0_1 = arith.constant 0 : index
    %c0_2 = arith.constant 0 : index
    %1 = vector.load %arg4[%c0_1, %c0_2] : memref<1x128xf32, #tpu.memory_space<vmem>>, vector<1x128xf32>
    %2 = vector.shape_cast %1 : vector<1x128xf32> to vector<128xf32>
    %cst = arith.constant 0.000000e+00 : f32
    %3 = vector.broadcast %cst : f32 to vector<1x128xf32>
    %cst_3 = arith.constant 0.000000e+00 : f32
    %4 = vector.broadcast %cst_3 : f32 to vector<1x128xf32>
    %c0_i32 = arith.constant 0 : i32
    %c2_i32 = arith.constant 2 : i32
    %5 = arith.addi %c0_i32, %c2_i32 : i32
    %c1_i32 = arith.constant 1 : i32
    %6:2 = scf.for %arg8 = %c0_i32 to %5 step %c1_i32 iter_args(%arg9 = %3, %arg10 = %4) -> (vector<1x128xf32>, vector<1x128xf32>)  : i32 {
      %c8_i32 = arith.constant 8 : i32
      %13 = arith.muli %arg8, %c8_i32 : i32
      %14 = tpu.assume_multiple %13, 8 : i32
      %c0_11 = arith.constant 0 : index
      %15 = arith.index_cast %14 : i32 to index
      %c0_12 = arith.constant 0 : index
      %c0_13 = arith.constant 0 : index
      %16 = vector.load %arg2[%c0_11, %15, %c0_12, %c0_13] : memref<1x18x24x128xf32, #tpu.memory_space<vmem>>, vector<1x10x24x128xf32>
      %17 = vector.shape_cast %16 : vector<1x10x24x128xf32> to vector<10x24x128xf32>
      %cst_14 = arith.constant 0.000000e+00 : f32
      %18 = vector.broadcast %cst_14 : f32 to vector<8x16x128xf32>
      %19 = vector.extract_strided_slice %17 {offsets = [0, 0, 0], sizes = [10, 16, 128], strides = [1, 1, 1]} : vector<10x24x128xf32> to vector<10x16x128xf32>
      %20 = vector.extract_strided_slice %19 {offsets = [0, 0, 0], sizes = [8, 16, 128], strides = [1, 1, 1]} : vector<10x16x128xf32> to vector<8x16x128xf32>
      %21 = vector.extract_strided_slice %0 {offsets = [0, 0], sizes = [1, 128], strides = [1, 1]} : vector<9x128xf32> to vector<1x128xf32>
      %22 = vector.shape_cast %21 : vector<1x128xf32> to vector<128xf32>
      %23 = vector.shape_cast %22 : vector<128xf32> to vector<1x1x128xf32>
      %24 = vector.broadcast %23 : vector<1x1x128xf32> to vector<8x16x128xf32>
      %25 = arith.mulf %20, %24 : vector<8x16x128xf32>
      %26 = arith.addf %18, %25 : vector<8x16x128xf32>
      %27 = vector.extract_strided_slice %19 {offsets = [1, 0, 0], sizes = [8, 16, 128], strides = [1, 1, 1]} : vector<10x16x128xf32> to vector<8x16x128xf32>
      %28 = vector.extract_strided_slice %0 {offsets = [3, 0], sizes = [1, 128], strides = [1, 1]} : vector<9x128xf32> to vector<1x128xf32>
      %29 = vector.shape_cast %28 : vector<1x128xf32> to vector<128xf32>
      %30 = vector.shape_cast %29 : vector<128xf32> to vector<1x1x128xf32>
      %31 = vector.broadcast %30 : vector<1x1x128xf32> to vector<8x16x128xf32>
      %32 = arith.mulf %27, %31 : vector<8x16x128xf32>
      %33 = arith.addf %26, %32 : vector<8x16x128xf32>
      %34 = vector.extract_strided_slice %19 {offsets = [2, 0, 0], sizes = [8, 16, 128], strides = [1, 1, 1]} : vector<10x16x128xf32> to vector<8x16x128xf32>
      %35 = vector.extract_strided_slice %0 {offsets = [6, 0], sizes = [1, 128], strides = [1, 1]} : vector<9x128xf32> to vector<1x128xf32>
      %36 = vector.shape_cast %35 : vector<1x128xf32> to vector<128xf32>
      %37 = vector.shape_cast %36 : vector<128xf32> to vector<1x1x128xf32>
      %38 = vector.broadcast %37 : vector<1x1x128xf32> to vector<8x16x128xf32>
      %39 = arith.mulf %34, %38 : vector<8x16x128xf32>
      %40 = arith.addf %33, %39 : vector<8x16x128xf32>
      %c23_i32 = arith.constant 23 : i32
      %41 = tpu.dynamic_rotate %17 by %c23_i32 dim 1 : vector<10x24x128xf32>, i32 -> vector<10x24x128xf32>
      %42 = vector.extract_strided_slice %41 {offsets = [0, 0, 0], sizes = [10, 16, 128], strides = [1, 1, 1]} : vector<10x24x128xf32> to vector<10x16x128xf32>
      %43 = vector.extract_strided_slice %42 {offsets = [0, 0, 0], sizes = [8, 16, 128], strides = [1, 1, 1]} : vector<10x16x128xf32> to vector<8x16x128xf32>
      %44 = vector.extract_strided_slice %0 {offsets = [1, 0], sizes = [1, 128], strides = [1, 1]} : vector<9x128xf32> to vector<1x128xf32>
      %45 = vector.shape_cast %44 : vector<1x128xf32> to vector<128xf32>
      %46 = vector.shape_cast %45 : vector<128xf32> to vector<1x1x128xf32>
      %47 = vector.broadcast %46 : vector<1x1x128xf32> to vector<8x16x128xf32>
      %48 = arith.mulf %43, %47 : vector<8x16x128xf32>
      %49 = arith.addf %40, %48 : vector<8x16x128xf32>
      %50 = vector.extract_strided_slice %42 {offsets = [1, 0, 0], sizes = [8, 16, 128], strides = [1, 1, 1]} : vector<10x16x128xf32> to vector<8x16x128xf32>
      %51 = vector.extract_strided_slice %0 {offsets = [4, 0], sizes = [1, 128], strides = [1, 1]} : vector<9x128xf32> to vector<1x128xf32>
      %52 = vector.shape_cast %51 : vector<1x128xf32> to vector<128xf32>
      %53 = vector.shape_cast %52 : vector<128xf32> to vector<1x1x128xf32>
      %54 = vector.broadcast %53 : vector<1x1x128xf32> to vector<8x16x128xf32>
      %55 = arith.mulf %50, %54 : vector<8x16x128xf32>
      %56 = arith.addf %49, %55 : vector<8x16x128xf32>
      %57 = vector.extract_strided_slice %42 {offsets = [2, 0, 0], sizes = [8, 16, 128], strides = [1, 1, 1]} : vector<10x16x128xf32> to vector<8x16x128xf32>
      %58 = vector.extract_strided_slice %0 {offsets = [7, 0], sizes = [1, 128], strides = [1, 1]} : vector<9x128xf32> to vector<1x128xf32>
      %59 = vector.shape_cast %58 : vector<1x128xf32> to vector<128xf32>
      %60 = vector.shape_cast %59 : vector<128xf32> to vector<1x1x128xf32>
      %61 = vector.broadcast %60 : vector<1x1x128xf32> to vector<8x16x128xf32>
      %62 = arith.mulf %57, %61 : vector<8x16x128xf32>
      %63 = arith.addf %56, %62 : vector<8x16x128xf32>
      %c22_i32 = arith.constant 22 : i32
      %64 = tpu.dynamic_rotate %17 by %c22_i32 dim 1 : vector<10x24x128xf32>, i32 -> vector<10x24x128xf32>
      %65 = vector.extract_strided_slice %64 {offsets = [0, 0, 0], sizes = [10, 16, 128], strides = [1, 1, 1]} : vector<10x24x128xf32> to vector<10x16x128xf32>
      %66 = vector.extract_strided_slice %65 {offsets = [0, 0, 0], sizes = [8, 16, 128], strides = [1, 1, 1]} : vector<10x16x128xf32> to vector<8x16x128xf32>
      %67 = vector.extract_strided_slice %0 {offsets = [2, 0], sizes = [1, 128], strides = [1, 1]} : vector<9x128xf32> to vector<1x128xf32>
      %68 = vector.shape_cast %67 : vector<1x128xf32> to vector<128xf32>
      %69 = vector.shape_cast %68 : vector<128xf32> to vector<1x1x128xf32>
      %70 = vector.broadcast %69 : vector<1x1x128xf32> to vector<8x16x128xf32>
      %71 = arith.mulf %66, %70 : vector<8x16x128xf32>
      %72 = arith.addf %63, %71 : vector<8x16x128xf32>
      %73 = vector.extract_strided_slice %65 {offsets = [1, 0, 0], sizes = [8, 16, 128], strides = [1, 1, 1]} : vector<10x16x128xf32> to vector<8x16x128xf32>
      %74 = vector.extract_strided_slice %0 {offsets = [5, 0], sizes = [1, 128], strides = [1, 1]} : vector<9x128xf32> to vector<1x128xf32>
      %75 = vector.shape_cast %74 : vector<1x128xf32> to vector<128xf32>
      %76 = vector.shape_cast %75 : vector<128xf32> to vector<1x1x128xf32>
      %77 = vector.broadcast %76 : vector<1x1x128xf32> to vector<8x16x128xf32>
      %78 = arith.mulf %73, %77 : vector<8x16x128xf32>
      %79 = arith.addf %72, %78 : vector<8x16x128xf32>
      %80 = vector.extract_strided_slice %65 {offsets = [2, 0, 0], sizes = [8, 16, 128], strides = [1, 1, 1]} : vector<10x16x128xf32> to vector<8x16x128xf32>
      %81 = vector.extract_strided_slice %0 {offsets = [8, 0], sizes = [1, 128], strides = [1, 1]} : vector<9x128xf32> to vector<1x128xf32>
      %82 = vector.shape_cast %81 : vector<1x128xf32> to vector<128xf32>
      %83 = vector.shape_cast %82 : vector<128xf32> to vector<1x1x128xf32>
      %84 = vector.broadcast %83 : vector<1x1x128xf32> to vector<8x16x128xf32>
      %85 = arith.mulf %80, %84 : vector<8x16x128xf32>
      %86 = arith.addf %79, %85 : vector<8x16x128xf32>
      %87 = vector.shape_cast %2 : vector<128xf32> to vector<1x1x128xf32>
      %88 = vector.broadcast %87 : vector<1x1x128xf32> to vector<8x16x128xf32>
      %89 = arith.addf %86, %88 : vector<8x16x128xf32>
      %cst_15 = arith.constant 5.000000e-01 : f32
      %90 = vector.broadcast %cst_15 : f32 to vector<8x16x128xf32>
      %91 = arith.mulf %90, %89 : vector<8x16x128xf32>
      %cst_16 = arith.constant 0.707106769 : f32
      %92 = vector.broadcast %cst_16 : f32 to vector<8x16x128xf32>
      %93 = arith.mulf %89, %92 : vector<8x16x128xf32>
      %94 = math.erf %93 : vector<8x16x128xf32>
      %cst_17 = arith.constant 1.000000e+00 : f32
      %95 = vector.broadcast %cst_17 : f32 to vector<8x16x128xf32>
      %96 = arith.addf %95, %94 : vector<8x16x128xf32>
      %97 = arith.mulf %91, %96 : vector<8x16x128xf32>
      %c0_18 = arith.constant 0 : index
      %98 = arith.index_cast %14 : i32 to index
      %c0_19 = arith.constant 0 : index
      %c0_20 = arith.constant 0 : index
      %99 = vector.load %arg5[%c0_18, %98, %c0_19, %c0_20] : memref<1x16x16x128xf32, #tpu.memory_space<vmem>>, vector<1x8x16x128xf32>
      %100 = vector.shape_cast %99 : vector<1x8x16x128xf32> to vector<8x16x128xf32>
      %101 = vector.shape_cast %97 : vector<8x16x128xf32> to vector<1x8x16x128xf32>
      tpu.vector_store %arg5[%c0_18, %98, %c0_19, %c0_20], %101 {strides = array<i32>} : memref<1x16x16x128xf32, #tpu.memory_space<vmem>>, vector<1x8x16x128xf32>,
      %102 = vector.shape_cast %97 : vector<8x16x128xf32> to vector<128x128xf32>
      %cst_21 = arith.constant dense<0.000000e+00> : vector<128xf32>
      %103 = vector.multi_reduction <add>, %102, %cst_21 [0] : vector<128x128xf32> to vector<128xf32>
      %104 = vector.shape_cast %103 : vector<128xf32> to vector<1x128xf32>
      %105 = arith.addf %arg9, %104 : vector<1x128xf32>
      %106 = arith.mulf %102, %102 : vector<128x128xf32>
      %cst_22 = arith.constant dense<0.000000e+00> : vector<128xf32>
      %107 = vector.multi_reduction <add>, %106, %cst_22 [0] : vector<128x128xf32> to vector<128xf32>
      %108 = vector.shape_cast %107 : vector<128xf32> to vector<1x128xf32>
      %109 = arith.addf %arg10, %108 : vector<1x128xf32>
      scf.yield %105, %109 : vector<1x128xf32>, vector<1x128xf32>
    }
    %c2_i32_4 = arith.constant 2 : i32
    %c0_5 = arith.constant 0 : index
    %c0_6 = arith.constant 0 : index
    %c0_7 = arith.constant 0 : index
    %7 = vector.load %arg6[%c0_5, %c0_6, %c0_7] : memref<1x1x128xf32, #tpu.memory_space<vmem>>, vector<1x1x128xf32>
    %8 = vector.shape_cast %7 : vector<1x1x128xf32> to vector<1x128xf32>
    %9 = vector.shape_cast %6#0 : vector<1x128xf32> to vector<1x1x128xf32>
    tpu.vector_store %arg6[%c0_5, %c0_6, %c0_7], %9 {strides = array<i32>} : memref<1x1x128xf32, #tpu.memory_space<vmem>>, vector<1x1x128xf32>,
    %c0_8 = arith.constant 0 : index
    %c0_9 = arith.constant 0 : index
    %c0_10 = arith.constant 0 : index
    %10 = vector.load %arg7[%c0_8, %c0_9, %c0_10] : memref<1x1x128xf32, #tpu.memory_space<vmem>>, vector<1x1x128xf32>
    %11 = vector.shape_cast %10 : vector<1x1x128xf32> to vector<1x128xf32>
    %12 = vector.shape_cast %6#1 : vector<1x128xf32> to vector<1x1x128xf32>
    tpu.vector_store %arg7[%c0_8, %c0_9, %c0_10], %12 {strides = array<i32>} : memref<1x1x128xf32, #tpu.memory_space<vmem>>, vector<1x1x128xf32>,
    return
  }
  func.func @transform_0(%arg0: i32, %arg1: i32) -> (i32, i32, i32, i32) {
    %c0_i32 = arith.constant 0 : i32
    %c0_i32_0 = arith.constant 0 : i32
    %c0_i32_1 = arith.constant 0 : i32
    return %arg0, %c0_i32, %c0_i32_0, %arg1 : i32, i32, i32, i32
  }
  func.func @transform_1(%arg0: i32, %arg1: i32) -> (i32, i32) {
    %c0_i32 = arith.constant 0 : i32
    %c0_i32_0 = arith.constant 0 : i32
    return %c0_i32, %arg1 : i32, i32
  }
  func.func @transform_2(%arg0: i32, %arg1: i32) -> (i32, i32) {
    %c0_i32 = arith.constant 0 : i32
    %c0_i32_0 = arith.constant 0 : i32
    return %c0_i32, %arg1 : i32, i32
  }
  func.func @transform_3(%arg0: i32, %arg1: i32) -> (i32, i32, i32, i32) {
    %c0_i32 = arith.constant 0 : i32
    %c0_i32_0 = arith.constant 0 : i32
    %c0_i32_1 = arith.constant 0 : i32
    return %arg0, %c0_i32, %c0_i32_0, %arg1 : i32, i32, i32, i32
  }
  func.func @transform_4(%arg0: i32, %arg1: i32) -> (i32, i32, i32) {
    %c0_i32 = arith.constant 0 : i32
    %c0_i32_0 = arith.constant 0 : i32
    return %arg0, %c0_i32, %arg1 : i32, i32, i32
  }
  func.func @transform_5(%arg0: i32, %arg1: i32) -> (i32, i32, i32) {
    %c0_i32 = arith.constant 0 : i32
    %c0_i32_0 = arith.constant 0 : i32
    return %arg0, %c0_i32, %arg1 : i32, i32, i32
  }
}

module attributes {stable_mosaic.version = 11 : i64} {
  func.func @_bn2_residual_kernel(%arg0: i32, %arg1: memref<512x128xf32, #tpu.memory_space<vmem>>, %arg2: memref<512x128xf32, #tpu.memory_space<vmem>>, %arg3: memref<1x128xf32, #tpu.memory_space<vmem>>, %arg4: memref<1x128xf32, #tpu.memory_space<vmem>>, %arg5: memref<512x128xf32, #tpu.memory_space<vmem>>) attributes {dimension_semantics = [#tpu.dimension_semantics<parallel>], iteration_bounds = array<i64: 1>, scalar_prefetch = 0 : i64, scratch_operands = 0 : i64, tpu.core_type = #tpu.core_type<tc>, window_params = [{transform_indices = @transform_0, window_bounds = array<i64: 512, 128>}, {transform_indices = @transform_1, window_bounds = array<i64: 512, 128>}, {pipeline_mode = #tpu.pipeline_mode<synchronous>, transform_indices = @transform_2, window_bounds = array<i64: 1, 128>}, {pipeline_mode = #tpu.pipeline_mode<synchronous>, transform_indices = @transform_3, window_bounds = array<i64: 1, 128>}, {transform_indices = @transform_4, window_bounds = array<i64: 512, 128>}]} {
    %c0 = arith.constant 0 : index
    %c0_0 = arith.constant 0 : index
    %0 = vector.load %arg1[%c0, %c0_0] : memref<512x128xf32, #tpu.memory_space<vmem>>, vector<512x128xf32>
    %c0_1 = arith.constant 0 : index
    %c0_2 = arith.constant 0 : index
    %1 = vector.load %arg3[%c0_1, %c0_2] : memref<1x128xf32, #tpu.memory_space<vmem>>, vector<1x128xf32>
    %2 = vector.shape_cast %1 : vector<1x128xf32> to vector<128xf32>
    %3 = vector.shape_cast %2 : vector<128xf32> to vector<1x128xf32>
    %4 = vector.broadcast %3 : vector<1x128xf32> to vector<512x128xf32>
    %5 = arith.mulf %0, %4 : vector<512x128xf32>
    %c0_3 = arith.constant 0 : index
    %c0_4 = arith.constant 0 : index
    %6 = vector.load %arg4[%c0_3, %c0_4] : memref<1x128xf32, #tpu.memory_space<vmem>>, vector<1x128xf32>
    %7 = vector.shape_cast %6 : vector<1x128xf32> to vector<128xf32>
    %8 = vector.shape_cast %7 : vector<128xf32> to vector<1x128xf32>
    %9 = vector.broadcast %8 : vector<1x128xf32> to vector<512x128xf32>
    %10 = arith.addf %5, %9 : vector<512x128xf32>
    %c0_5 = arith.constant 0 : index
    %c0_6 = arith.constant 0 : index
    %11 = vector.load %arg2[%c0_5, %c0_6] : memref<512x128xf32, #tpu.memory_space<vmem>>, vector<512x128xf32>
    %12 = arith.addf %10, %11 : vector<512x128xf32>
    %c0_7 = arith.constant 0 : index
    %c0_8 = arith.constant 0 : index
    %13 = vector.load %arg5[%c0_7, %c0_8] : memref<512x128xf32, #tpu.memory_space<vmem>>, vector<512x128xf32>
    tpu.vector_store %arg5[%c0_7, %c0_8], %12 {strides = array<i32>} : memref<512x128xf32, #tpu.memory_space<vmem>>, vector<512x128xf32>,
    return
  }
  func.func @transform_0(%arg0: i32) -> (i32, i32) {
    %c0_i32 = arith.constant 0 : i32
    %c0_i32_0 = arith.constant 0 : i32
    return %arg0, %c0_i32 : i32, i32
  }
  func.func @transform_1(%arg0: i32) -> (i32, i32) {
    %c0_i32 = arith.constant 0 : i32
    %c0_i32_0 = arith.constant 0 : i32
    return %arg0, %c0_i32 : i32, i32
  }
  func.func @transform_2(%arg0: i32) -> (i32, i32) {
    %c0_i32 = arith.constant 0 : i32
    %c0_i32_0 = arith.constant 0 : i32
    %c0_i32_1 = arith.constant 0 : i32
    return %c0_i32, %c0_i32_0 : i32, i32
  }
  func.func @transform_3(%arg0: i32) -> (i32, i32) {
    %c0_i32 = arith.constant 0 : i32
    %c0_i32_0 = arith.constant 0 : i32
    %c0_i32_1 = arith.constant 0 : i32
    return %c0_i32, %c0_i32_0 : i32, i32
  }
  func.func @transform_4(%arg0: i32) -> (i32, i32) {
    %c0_i32 = arith.constant 0 : i32
    %c0_i32_0 = arith.constant 0 : i32
    return %arg0, %c0_i32 : i32, i32
  }
}

module attributes {stable_mosaic.version = 11 : i64} {
  func.func @_pointwise_kernel(%arg0: i32, %arg1: memref<512x128xf32, #tpu.memory_space<vmem>>, %arg2: memref<512x128xf32, #tpu.memory_space<vmem>>, %arg3: memref<1x128xf32, #tpu.memory_space<vmem>>, %arg4: memref<1x128xf32, #tpu.memory_space<vmem>>, %arg5: memref<128x128xf32, #tpu.memory_space<vmem>>, %arg6: memref<1x128xf32, #tpu.memory_space<vmem>>, %arg7: memref<512x128xf32, #tpu.memory_space<vmem>>, %arg8: memref<512x128xf32, #tpu.memory_space<vmem>>, %arg9: memref<1x1x128xf32, #tpu.memory_space<vmem>>, %arg10: memref<1x1x128xf32, #tpu.memory_space<vmem>>) attributes {dimension_semantics = [#tpu.dimension_semantics<parallel>], iteration_bounds = array<i64: 1>, scalar_prefetch = 0 : i64, scratch_operands = 0 : i64, tpu.core_type = #tpu.core_type<tc>, window_params = [{transform_indices = @transform_0, window_bounds = array<i64: 512, 128>}, {transform_indices = @transform_1, window_bounds = array<i64: 512, 128>}, {pipeline_mode = #tpu.pipeline_mode<synchronous>, transform_indices = @transform_2, window_bounds = array<i64: 1, 128>}, {pipeline_mode = #tpu.pipeline_mode<synchronous>, transform_indices = @transform_3, window_bounds = array<i64: 1, 128>}, {pipeline_mode = #tpu.pipeline_mode<synchronous>, transform_indices = @transform_4, window_bounds = array<i64: 128, 128>}, {pipeline_mode = #tpu.pipeline_mode<synchronous>, transform_indices = @transform_5, window_bounds = array<i64: 1, 128>}, {transform_indices = @transform_6, window_bounds = array<i64: 512, 128>}, {transform_indices = @transform_7, window_bounds = array<i64: 512, 128>}, {transform_indices = @transform_8, window_bounds = array<i64: 1, 1, 128>}, {transform_indices = @transform_9, window_bounds = array<i64: 1, 1, 128>}]} {
    %c0 = arith.constant 0 : index
    %c0_0 = arith.constant 0 : index
    %0 = vector.load %arg1[%c0, %c0_0] : memref<512x128xf32, #tpu.memory_space<vmem>>, vector<512x128xf32>
    %c0_1 = arith.constant 0 : index
    %c0_2 = arith.constant 0 : index
    %1 = vector.load %arg3[%c0_1, %c0_2] : memref<1x128xf32, #tpu.memory_space<vmem>>, vector<1x128xf32>
    %2 = vector.shape_cast %1 : vector<1x128xf32> to vector<128xf32>
    %3 = vector.shape_cast %2 : vector<128xf32> to vector<1x128xf32>
    %4 = vector.broadcast %3 : vector<1x128xf32> to vector<512x128xf32>
    %5 = arith.mulf %0, %4 : vector<512x128xf32>
    %c0_3 = arith.constant 0 : index
    %c0_4 = arith.constant 0 : index
    %6 = vector.load %arg4[%c0_3, %c0_4] : memref<1x128xf32, #tpu.memory_space<vmem>>, vector<1x128xf32>
    %7 = vector.shape_cast %6 : vector<1x128xf32> to vector<128xf32>
    %8 = vector.shape_cast %7 : vector<128xf32> to vector<1x128xf32>
    %9 = vector.broadcast %8 : vector<1x128xf32> to vector<512x128xf32>
    %10 = arith.addf %5, %9 : vector<512x128xf32>
    %c0_5 = arith.constant 0 : index
    %c0_6 = arith.constant 0 : index
    %11 = vector.load %arg2[%c0_5, %c0_6] : memref<512x128xf32, #tpu.memory_space<vmem>>, vector<512x128xf32>
    %12 = arith.addf %10, %11 : vector<512x128xf32>
    %c0_7 = arith.constant 0 : index
    %c0_8 = arith.constant 0 : index
    %13 = vector.load %arg7[%c0_7, %c0_8] : memref<512x128xf32, #tpu.memory_space<vmem>>, vector<512x128xf32>
    tpu.vector_store %arg7[%c0_7, %c0_8], %12 {strides = array<i32>} : memref<512x128xf32, #tpu.memory_space<vmem>>, vector<512x128xf32>,
    %c0_9 = arith.constant 0 : index
    %c0_10 = arith.constant 0 : index
    %14 = vector.load %arg5[%c0_9, %c0_10] : memref<128x128xf32, #tpu.memory_space<vmem>>, vector<128x128xf32>
    %cst = arith.constant dense<0.000000e+00> : vector<512x128xf32>
    %15 = tpu.matmul %12, %14, %cst {dimension_numbers = #tpu.dot_dimension_numbers<[1], [0], [0], [1], [0, 0, 1, 1], [], []>} : vector<512x128xf32>, vector<128x128xf32>, vector<512x128xf32> -> vector<512x128xf32>
    %c0_11 = arith.constant 0 : index
    %c0_12 = arith.constant 0 : index
    %16 = vector.load %arg6[%c0_11, %c0_12] : memref<1x128xf32, #tpu.memory_space<vmem>>, vector<1x128xf32>
    %17 = vector.shape_cast %16 : vector<1x128xf32> to vector<128xf32>
    %18 = vector.shape_cast %17 : vector<128xf32> to vector<1x128xf32>
    %19 = vector.broadcast %18 : vector<1x128xf32> to vector<512x128xf32>
    %20 = arith.addf %15, %19 : vector<512x128xf32>
    %cst_13 = arith.constant 5.000000e-01 : f32
    %21 = vector.broadcast %cst_13 : f32 to vector<512x128xf32>
    %22 = arith.mulf %21, %20 : vector<512x128xf32>
    %cst_14 = arith.constant 0.707106769 : f32
    %23 = vector.broadcast %cst_14 : f32 to vector<512x128xf32>
    %24 = arith.mulf %20, %23 : vector<512x128xf32>
    %25 = math.erf %24 : vector<512x128xf32>
    %cst_15 = arith.constant 1.000000e+00 : f32
    %26 = vector.broadcast %cst_15 : f32 to vector<512x128xf32>
    %27 = arith.addf %26, %25 : vector<512x128xf32>
    %28 = arith.mulf %22, %27 : vector<512x128xf32>
    %c0_16 = arith.constant 0 : index
    %c0_17 = arith.constant 0 : index
    %29 = vector.load %arg8[%c0_16, %c0_17] : memref<512x128xf32, #tpu.memory_space<vmem>>, vector<512x128xf32>
    tpu.vector_store %arg8[%c0_16, %c0_17], %28 {strides = array<i32>} : memref<512x128xf32, #tpu.memory_space<vmem>>, vector<512x128xf32>,
    %cst_18 = arith.constant dense<0.000000e+00> : vector<128xf32>
    %30 = vector.multi_reduction <add>, %28, %cst_18 [0] : vector<512x128xf32> to vector<128xf32>
    %31 = vector.shape_cast %30 : vector<128xf32> to vector<1x128xf32>
    %c0_19 = arith.constant 0 : index
    %c0_20 = arith.constant 0 : index
    %c0_21 = arith.constant 0 : index
    %32 = vector.load %arg9[%c0_19, %c0_20, %c0_21] : memref<1x1x128xf32, #tpu.memory_space<vmem>>, vector<1x1x128xf32>
    %33 = vector.shape_cast %32 : vector<1x1x128xf32> to vector<1x128xf32>
    %34 = vector.shape_cast %31 : vector<1x128xf32> to vector<1x1x128xf32>
    tpu.vector_store %arg9[%c0_19, %c0_20, %c0_21], %34 {strides = array<i32>} : memref<1x1x128xf32, #tpu.memory_space<vmem>>, vector<1x1x128xf32>,
    %35 = arith.mulf %28, %28 : vector<512x128xf32>
    %cst_22 = arith.constant dense<0.000000e+00> : vector<128xf32>
    %36 = vector.multi_reduction <add>, %35, %cst_22 [0] : vector<512x128xf32> to vector<128xf32>
    %37 = vector.shape_cast %36 : vector<128xf32> to vector<1x128xf32>
    %c0_23 = arith.constant 0 : index
    %c0_24 = arith.constant 0 : index
    %c0_25 = arith.constant 0 : index
    %38 = vector.load %arg10[%c0_23, %c0_24, %c0_25] : memref<1x1x128xf32, #tpu.memory_space<vmem>>, vector<1x1x128xf32>
    %39 = vector.shape_cast %38 : vector<1x1x128xf32> to vector<1x128xf32>
    %40 = vector.shape_cast %37 : vector<1x128xf32> to vector<1x1x128xf32>
    tpu.vector_store %arg10[%c0_23, %c0_24, %c0_25], %40 {strides = array<i32>} : memref<1x1x128xf32, #tpu.memory_space<vmem>>, vector<1x1x128xf32>,
    return
  }
  func.func @transform_0(%arg0: i32) -> (i32, i32) {
    %c0_i32 = arith.constant 0 : i32
    %c0_i32_0 = arith.constant 0 : i32
    return %arg0, %c0_i32 : i32, i32
  }
  func.func @transform_1(%arg0: i32) -> (i32, i32) {
    %c0_i32 = arith.constant 0 : i32
    %c0_i32_0 = arith.constant 0 : i32
    return %arg0, %c0_i32 : i32, i32
  }
  func.func @transform_2(%arg0: i32) -> (i32, i32) {
    %c0_i32 = arith.constant 0 : i32
    %c0_i32_0 = arith.constant 0 : i32
    %c0_i32_1 = arith.constant 0 : i32
    return %c0_i32, %c0_i32_0 : i32, i32
  }
  func.func @transform_3(%arg0: i32) -> (i32, i32) {
    %c0_i32 = arith.constant 0 : i32
    %c0_i32_0 = arith.constant 0 : i32
    %c0_i32_1 = arith.constant 0 : i32
    return %c0_i32, %c0_i32_0 : i32, i32
  }
  func.func @transform_4(%arg0: i32) -> (i32, i32) {
    %c0_i32 = arith.constant 0 : i32
    %c0_i32_0 = arith.constant 0 : i32
    %c0_i32_1 = arith.constant 0 : i32
    return %c0_i32, %c0_i32_0 : i32, i32
  }
  func.func @transform_5(%arg0: i32) -> (i32, i32) {
    %c0_i32 = arith.constant 0 : i32
    %c0_i32_0 = arith.constant 0 : i32
    %c0_i32_1 = arith.constant 0 : i32
    return %c0_i32, %c0_i32_0 : i32, i32
  }
  func.func @transform_6(%arg0: i32) -> (i32, i32) {
    %c0_i32 = arith.constant 0 : i32
    %c0_i32_0 = arith.constant 0 : i32
    return %arg0, %c0_i32 : i32, i32
  }
  func.func @transform_7(%arg0: i32) -> (i32, i32) {
    %c0_i32 = arith.constant 0 : i32
    %c0_i32_0 = arith.constant 0 : i32
    return %arg0, %c0_i32 : i32, i32
  }
  func.func @transform_8(%arg0: i32) -> (i32, i32, i32) {
    %c0_i32 = arith.constant 0 : i32
    %c0_i32_0 = arith.constant 0 : i32
    %c0_i32_1 = arith.constant 0 : i32
    return %arg0, %c0_i32, %c0_i32_0 : i32, i32, i32
  }
  func.func @transform_9(%arg0: i32) -> (i32, i32, i32) {
    %c0_i32 = arith.constant 0 : i32
    %c0_i32_0 = arith.constant 0 : i32
    %c0_i32_1 = arith.constant 0 : i32
    return %arg0, %c0_i32, %c0_i32_0 : i32, i32, i32
  }
}

</mosaic_0001>

<llo_original>
// kernel: conv_mixer_layer_nhwc.5
$region0: #{conv_mixer_layer_nhwc.5}
  #allocation0 [shape = 'u32[]', space=smem, size = 0x4, offset = 0x4, fixed_abs, tag = 'smem constant byte address 0x4 - core index']
  #allocation1 [shape = 'u32[144,128]{1,0:T(1,128)}', space=vmem, size = 0x12000, scoped, tag = 'internal scratch']
  %s0 = inlined_call_operand.vmem [shape: f32[512,128], index: 0, kind: input, shape index: {}]
  %s1 = inlined_call_operand.vmem [shape: f32[512,128], index: 1, kind: input, shape index: {}]
  %s2 = inlined_call_operand.vmem [shape: f32[1,128], index: 2, kind: input, shape index: {}]
  %s3 = inlined_call_operand.vmem [shape: f32[1,128], index: 3, kind: input, shape index: {}]
  %s4 = inlined_call_operand.vmem [shape: f32[512,128], index: 4, kind: output, shape index: {}]
  %s5 = sld [smem:[#allocation0]]
  $region26: #{conv_mixer_layer_nhwc.5} parent=0
    _
  %s7 = ssub.s32 1, %s5
  %s8 = scalar_select 0, %s7, %s5
  // Predicated region
  $region2: #{conv_mixer_layer_nhwc.5} parent=0 // pred_check
    _
  $region3: #{conv_mixer_layer_nhwc.5} parent=0 // pred_check_branch
    %10 = sbr.rel (0) target = $region5
  $region4: #{conv_mixer_layer_nhwc.5} parent=0 // pred_region
    _
  $region5: #{conv_mixer_layer_nhwc.5} parent=0 // pred_fallthru
    _
  // Predicated region
  $region6: #{conv_mixer_layer_nhwc.5} parent=0 // pred_check
    _
  $region7: #{conv_mixer_layer_nhwc.5} parent=0 // pred_check_branch
    %12 = sbr.rel (0) target = $region9
  $region8: #{conv_mixer_layer_nhwc.5} parent=0 // pred_region
    _
  $region9: #{conv_mixer_layer_nhwc.5} parent=0 // pred_fallthru
    _
  // Predicated region
  $region10: #{conv_mixer_layer_nhwc.5} parent=0 // pred_check
    _
  $region11: #{conv_mixer_layer_nhwc.5} parent=0 // pred_check_branch
    %14 = sbr.rel (0) target = $region13
  $region12: #{conv_mixer_layer_nhwc.5} parent=0 // pred_region
    _
  $region13: #{conv_mixer_layer_nhwc.5} parent=0 // pred_fallthru
    _
  // Predicated region
  $region14: #{conv_mixer_layer_nhwc.5} parent=0 // pred_check
    _
  $region15: #{conv_mixer_layer_nhwc.5} parent=0 // pred_check_branch
    %16 = sbr.rel (0) target = $region17
  $region16: #{conv_mixer_layer_nhwc.5} parent=0 // pred_region
    _
  $region17: #{conv_mixer_layer_nhwc.5} parent=0 // pred_fallthru
    _
  %v17 = vld [vmem:[%s0] sm:$0xff]
  %v18 = vld [vmem:[%s0 + $0x8] sm:$0xff]
  %v19 = vld [vmem:[%s0 + $0x10] sm:$0xff]
  %v20 = vld [vmem:[%s0 + $0x18] sm:$0xff]
  %v21 = vld [vmem:[%s0 + $0x20] sm:$0xff]
  %v22 = vld [vmem:[%s0 + $0x28] sm:$0xff]
  %v23 = vld [vmem:[%s0 + $0x30] sm:$0xff]
  %v24 = vld [vmem:[%s0 + $0x38] sm:$0xff]
  %v25 = vld [vmem:[%s0 + $0x40] sm:$0xff]
  %v26 = vld [vmem:[%s0 + $0x48] sm:$0xff]
  %v27 = vld [vmem:[%s0 + $0x50] sm:$0xff]
  %v28 = vld [vmem:[%s0 + $0x58] sm:$0xff]
  %v29 = vld [vmem:[%s0 + $0x60] sm:$0xff]
  %v30 = vld [vmem:[%s0 + $0x68] sm:$0xff]
  %v31 = vld [vmem:[%s0 + $0x70] sm:$0xff]
  %v32 = vld [vmem:[%s0 + $0x78] sm:$0xff]
  %v33 = vld [vmem:[%s0 + $0x80] sm:$0xff]
  %v34 = vld [vmem:[%s0 + $0x88] sm:$0xff]
  %v35 = vld [vmem:[%s0 + $0x90] sm:$0xff]
  %v36 = vld [vmem:[%s0 + $0x98] sm:$0xff]
  %v37 = vld [vmem:[%s0 + $0xa0] sm:$0xff]
  %v38 = vld [vmem:[%s0 + $0xa8] sm:$0xff]
  %v39 = vld [vmem:[%s0 + $0xb0] sm:$0xff]
  %v40 = vld [vmem:[%s0 + $0xb8] sm:$0xff]
  %v41 = vld [vmem:[%s0 + $0xc0] sm:$0xff]
  %v42 = vld [vmem:[%s0 + $0xc8] sm:$0xff]
  %v43 = vld [vmem:[%s0 + $0xd0] sm:$0xff]
  %v44 = vld [vmem:[%s0 + $0xd8] sm:$0xff]
  %v45 = vld [vmem:[%s0 + $0xe0] sm:$0xff]
  %v46 = vld [vmem:[%s0 + $0xe8] sm:$0xff]
  %v47 = vld [vmem:[%s0 + $0xf0] sm:$0xff]
  %v48 = vld [vmem:[%s0 + $0xf8] sm:$0xff]
  %v49 = vld [vmem:[%s0 + $0x100] sm:$0xff]
  %v50 = vld [vmem:[%s0 + $0x108] sm:$0xff]
  %v51 = vld [vmem:[%s0 + $0x110] sm:$0xff]
  %v52 = vld [vmem:[%s0 + $0x118] sm:$0xff]
  %v53 = vld [vmem:[%s0 + $0x120] sm:$0xff]
  %v54 = vld [vmem:[%s0 + $0x128] sm:$0xff]
  %v55 = vld [vmem:[%s0 + $0x130] sm:$0xff]
  %v56 = vld [vmem:[%s0 + $0x138] sm:$0xff]
  %v57 = vld [vmem:[%s0 + $0x140] sm:$0xff]
  %v58 = vld [vmem:[%s0 + $0x148] sm:$0xff]
  %v59 = vld [vmem:[%s0 + $0x150] sm:$0xff]
  %v60 = vld [vmem:[%s0 + $0x158] sm:$0xff]
  %v61 = vld [vmem:[%s0 + $0x160] sm:$0xff]
  %v62 = vld [vmem:[%s0 + $0x168] sm:$0xff]
  %v63 = vld [vmem:[%s0 + $0x170] sm:$0xff]
  %v64 = vld [vmem:[%s0 + $0x178] sm:$0xff]
  %v65 = vld [vmem:[%s0 + $0x180] sm:$0xff]
  %v66 = vld [vmem:[%s0 + $0x188] sm:$0xff]
  %v67 = vld [vmem:[%s0 + $0x190] sm:$0xff]
  %v68 = vld [vmem:[%s0 + $0x198] sm:$0xff]
  %v69 = vld [vmem:[%s0 + $0x1a0] sm:$0xff]
  %v70 = vld [vmem:[%s0 + $0x1a8] sm:$0xff]
  %v71 = vld [vmem:[%s0 + $0x1b0] sm:$0xff]
  %v72 = vld [vmem:[%s0 + $0x1b8] sm:$0xff]
  %v73 = vld [vmem:[%s0 + $0x1c0] sm:$0xff]
  %v74 = vld [vmem:[%s0 + $0x1c8] sm:$0xff]
  %v75 = vld [vmem:[%s0 + $0x1d0] sm:$0xff]
  %v76 = vld [vmem:[%s0 + $0x1d8] sm:$0xff]
  %v77 = vld [vmem:[%s0 + $0x1e0] sm:$0xff]
  %v78 = vld [vmem:[%s0 + $0x1e8] sm:$0xff]
  %v79 = vld [vmem:[%s0 + $0x1f0] sm:$0xff]
  %v80 = vld [vmem:[%s0 + $0x1f8] sm:$0xff]
  %v81 = vld [vmem:[%s2] sm:$0x1]
  %v83 = vlaneseq
  %v84 = vshrl.u32 %v83, 7
  %v85 = vsub.s32 0, %v84
  %v86 = vrot.slane %v81, %v85
  %v88 = vmul.f32 %v17, %v86
  %v89 = vmul.f32 %v18, %v86
  %v90 = vmul.f32 %v19, %v86
  %v91 = vmul.f32 %v20, %v86
  %v92 = vmul.f32 %v21, %v86
  %v93 = vmul.f32 %v22, %v86
  %v94 = vmul.f32 %v23, %v86
  %v95 = vmul.f32 %v24, %v86
  %v96 = vmul.f32 %v25, %v86
  %v97 = vmul.f32 %v26, %v86
  %v98 = vmul.f32 %v27, %v86
  %v99 = vmul.f32 %v28, %v86
  %v100 = vmul.f32 %v29, %v86
  %v101 = vmul.f32 %v30, %v86
  %v102 = vmul.f32 %v31, %v86
  %v103 = vmul.f32 %v32, %v86
  %v104 = vmul.f32 %v33, %v86
  %v105 = vmul.f32 %v34, %v86
  %v106 = vmul.f32 %v35, %v86
  %v107 = vmul.f32 %v36, %v86
  %v108 = vmul.f32 %v37, %v86
  %v109 = vmul.f32 %v38, %v86
  %v110 = vmul.f32 %v39, %v86
  %v111 = vmul.f32 %v40, %v86
  %v112 = vmul.f32 %v41, %v86
  %v113 = vmul.f32 %v42, %v86
  %v114 = vmul.f32 %v43, %v86
  %v115 = vmul.f32 %v44, %v86
  %v116 = vmul.f32 %v45, %v86
  %v117 = vmul.f32 %v46, %v86
  %v118 = vmul.f32 %v47, %v86
  %v119 = vmul.f32 %v48, %v86
  %v120 = vmul.f32 %v49, %v86
  %v121 = vmul.f32 %v50, %v86
  %v122 = vmul.f32 %v51, %v86
  %v123 = vmul.f32 %v52, %v86
  %v124 = vmul.f32 %v53, %v86
  %v125 = vmul.f32 %v54, %v86
  %v126 = vmul.f32 %v55, %v86
  %v127 = vmul.f32 %v56, %v86
  %v128 = vmul.f32 %v57, %v86
  %v129 = vmul.f32 %v58, %v86
  %v130 = vmul.f32 %v59, %v86
  %v131 = vmul.f32 %v60, %v86
  %v132 = vmul.f32 %v61, %v86
  %v133 = vmul.f32 %v62, %v86
  %v134 = vmul.f32 %v63, %v86
  %v135 = vmul.f32 %v64, %v86
  %v136 = vmul.f32 %v65, %v86
  %v137 = vmul.f32 %v66, %v86
  %v138 = vmul.f32 %v67, %v86
  %v139 = vmul.f32 %v68, %v86
  %v140 = vmul.f32 %v69, %v86
  %v141 = vmul.f32 %v70, %v86
  %v142 = vmul.f32 %v71, %v86
  %v143 = vmul.f32 %v72, %v86
  %v144 = vmul.f32 %v73, %v86
  %v145 = vmul.f32 %v74, %v86
  %v146 = vmul.f32 %v75, %v86
  %v147 = vmul.f32 %v76, %v86
  %v148 = vmul.f32 %v77, %v86
  %v149 = vmul.f32 %v78, %v86
  %v150 = vmul.f32 %v79, %v86
  %v151 = vmul.f32 %v80, %v86
  %v152 = vld [vmem:[%s3] sm:$0x1]
  %v154 = vlaneseq
  %v155 = vshrl.u32 %v154, 7
  %v156 = vsub.s32 0, %v155
  %v157 = vrot.slane %v152, %v156
  %v159 = vadd.f32 %v88, %v157
  %v160 = vadd.f32 %v89, %v157
  %v161 = vadd.f32 %v90, %v157
  %v162 = vadd.f32 %v91, %v157
  %v163 = vadd.f32 %v92, %v157
  %v164 = vadd.f32 %v93, %v157
  %v165 = vadd.f32 %v94, %v157
  %v166 = vadd.f32 %v95, %v157
  %v167 = vadd.f32 %v96, %v157
  %v168 = vadd.f32 %v97, %v157
  %v169 = vadd.f32 %v98, %v157
  %v170 = vadd.f32 %v99, %v157
  %v171 = vadd.f32 %v100, %v157
  %v172 = vadd.f32 %v101, %v157
  %v173 = vadd.f32 %v102, %v157
  %v174 = vadd.f32 %v103, %v157
  %v175 = vadd.f32 %v104, %v157
  %v176 = vadd.f32 %v105, %v157
  %v177 = vadd.f32 %v106, %v157
  %v178 = vadd.f32 %v107, %v157
  %v179 = vadd.f32 %v108, %v157
  %v180 = vadd.f32 %v109, %v157
  %v181 = vadd.f32 %v110, %v157
  %v182 = vadd.f32 %v111, %v157
  %v183 = vadd.f32 %v112, %v157
  %v184 = vadd.f32 %v113, %v157
  %v185 = vadd.f32 %v114, %v157
  %v186 = vadd.f32 %v115, %v157
  %v187 = vadd.f32 %v116, %v157
  %v188 = vadd.f32 %v117, %v157
  %v189 = vadd.f32 %v118, %v157
  %v190 = vadd.f32 %v119, %v157
  %v191 = vadd.f32 %v120, %v157
  %v192 = vadd.f32 %v121, %v157
  %v193 = vadd.f32 %v122, %v157
  %v194 = vadd.f32 %v123, %v157
  %v195 = vadd.f32 %v124, %v157
  %v196 = vadd.f32 %v125, %v157
  %v197 = vadd.f32 %v126, %v157
  %v198 = vadd.f32 %v127, %v157
  %v199 = vadd.f32 %v128, %v157
  %v200 = vadd.f32 %v129, %v157
  %v201 = vadd.f32 %v130, %v157
  %v202 = vadd.f32 %v131, %v157
  %v203 = vadd.f32 %v132, %v157
  %v204 = vadd.f32 %v133, %v157
  %v205 = vadd.f32 %v134, %v157
  %v206 = vadd.f32 %v135, %v157
  %v207 = vadd.f32 %v136, %v157
  %v208 = vadd.f32 %v137, %v157
  %v209 = vadd.f32 %v138, %v157
  %v210 = vadd.f32 %v139, %v157
  %v211 = vadd.f32 %v140, %v157
  %v212 = vadd.f32 %v141, %v157
  %v213 = vadd.f32 %v142, %v157
  %v214 = vadd.f32 %v143, %v157
  %v215 = vadd.f32 %v144, %v157
  %v216 = vadd.f32 %v145, %v157
  %v217 = vadd.f32 %v146, %v157
  %v218 = vadd.f32 %v147, %v157
  %v219 = vadd.f32 %v148, %v157
  %v220 = vadd.f32 %v149, %v157
  %v221 = vadd.f32 %v150, %v157
  %v222 = vadd.f32 %v151, %v157
  %v223 = vld [vmem:[%s1] sm:$0xff]
  %v224 = vld [vmem:[%s1 + $0x8] sm:$0xff]
  %v225 = vld [vmem:[%s1 + $0x10] sm:$0xff]
  %v226 = vld [vmem:[%s1 + $0x18] sm:$0xff]
  %v227 = vld [vmem:[%s1 + $0x20] sm:$0xff]
  %v228 = vld [vmem:[%s1 + $0x28] sm:$0xff]
  %v229 = vld [vmem:[%s1 + $0x30] sm:$0xff]
  %v230 = vld [vmem:[%s1 + $0x38] sm:$0xff]
  %v231 = vld [vmem:[%s1 + $0x40] sm:$0xff]
  %v232 = vld [vmem:[%s1 + $0x48] sm:$0xff]
  %v233 = vld [vmem:[%s1 + $0x50] sm:$0xff]
  %v234 = vld [vmem:[%s1 + $0x58] sm:$0xff]
  %v235 = vld [vmem:[%s1 + $0x60] sm:$0xff]
  %v236 = vld [vmem:[%s1 + $0x68] sm:$0xff]
  %v237 = vld [vmem:[%s1 + $0x70] sm:$0xff]
  %v238 = vld [vmem:[%s1 + $0x78] sm:$0xff]
  %v239 = vld [vmem:[%s1 + $0x80] sm:$0xff]
  %v240 = vld [vmem:[%s1 + $0x88] sm:$0xff]
  %v241 = vld [vmem:[%s1 + $0x90] sm:$0xff]
  %v242 = vld [vmem:[%s1 + $0x98] sm:$0xff]
  %v243 = vld [vmem:[%s1 + $0xa0] sm:$0xff]
  %v244 = vld [vmem:[%s1 + $0xa8] sm:$0xff]
  %v245 = vld [vmem:[%s1 + $0xb0] sm:$0xff]
  %v246 = vld [vmem:[%s1 + $0xb8] sm:$0xff]
  %v247 = vld [vmem:[%s1 + $0xc0] sm:$0xff]
  %v248 = vld [vmem:[%s1 + $0xc8] sm:$0xff]
  %v249 = vld [vmem:[%s1 + $0xd0] sm:$0xff]
  %v250 = vld [vmem:[%s1 + $0xd8] sm:$0xff]
  %v251 = vld [vmem:[%s1 + $0xe0] sm:$0xff]
  %v252 = vld [vmem:[%s1 + $0xe8] sm:$0xff]
  %v253 = vld [vmem:[%s1 + $0xf0] sm:$0xff]
  %v254 = vld [vmem:[%s1 + $0xf8] sm:$0xff]
  %v255 = vld [vmem:[%s1 + $0x100] sm:$0xff]
  %v256 = vld [vmem:[%s1 + $0x108] sm:$0xff]
  %v257 = vld [vmem:[%s1 + $0x110] sm:$0xff]
  %v258 = vld [vmem:[%s1 + $0x118] sm:$0xff]
  %v259 = vld [vmem:[%s1 + $0x120] sm:$0xff]
  %v260 = vld [vmem:[%s1 + $0x128] sm:$0xff]
  %v261 = vld [vmem:[%s1 + $0x130] sm:$0xff]
  %v262 = vld [vmem:[%s1 + $0x138] sm:$0xff]
  %v263 = vld [vmem:[%s1 + $0x140] sm:$0xff]
  %v264 = vld [vmem:[%s1 + $0x148] sm:$0xff]
  %v265 = vld [vmem:[%s1 + $0x150] sm:$0xff]
  %v266 = vld [vmem:[%s1 + $0x158] sm:$0xff]
  %v267 = vld [vmem:[%s1 + $0x160] sm:$0xff]
  %v268 = vld [vmem:[%s1 + $0x168] sm:$0xff]
  %v269 = vld [vmem:[%s1 + $0x170] sm:$0xff]
  %v270 = vld [vmem:[%s1 + $0x178] sm:$0xff]
  %v271 = vld [vmem:[%s1 + $0x180] sm:$0xff]
  %v272 = vld [vmem:[%s1 + $0x188] sm:$0xff]
  %v273 = vld [vmem:[%s1 + $0x190] sm:$0xff]
  %v274 = vld [vmem:[%s1 + $0x198] sm:$0xff]
  %v275 = vld [vmem:[%s1 + $0x1a0] sm:$0xff]
  %v276 = vld [vmem:[%s1 + $0x1a8] sm:$0xff]
  %v277 = vld [vmem:[%s1 + $0x1b0] sm:$0xff]
  %v278 = vld [vmem:[%s1 + $0x1b8] sm:$0xff]
  %v279 = vld [vmem:[%s1 + $0x1c0] sm:$0xff]
  %v280 = vld [vmem:[%s1 + $0x1c8] sm:$0xff]
  %v281 = vld [vmem:[%s1 + $0x1d0] sm:$0xff]
  %v282 = vld [vmem:[%s1 + $0x1d8] sm:$0xff]
  %v283 = vld [vmem:[%s1 + $0x1e0] sm:$0xff]
  %v284 = vld [vmem:[%s1 + $0x1e8] sm:$0xff]
  %v285 = vld [vmem:[%s1 + $0x1f0] sm:$0xff]
  %v286 = vld [vmem:[%s1 + $0x1f8] sm:$0xff]
  %v287 = vadd.f32 %v159, %v223
  %v288 = vadd.f32 %v160, %v224
  %v289 = vadd.f32 %v161, %v225
  %v290 = vadd.f32 %v162, %v226
  %v291 = vadd.f32 %v163, %v227
  %v292 = vadd.f32 %v164, %v228
  %v293 = vadd.f32 %v165, %v229
  %v294 = vadd.f32 %v166, %v230
  %v295 = vadd.f32 %v167, %v231
  %v296 = vadd.f32 %v168, %v232
  %v297 = vadd.f32 %v169, %v233
  %v298 = vadd.f32 %v170, %v234
  %v299 = vadd.f32 %v171, %v235
  %v300 = vadd.f32 %v172, %v236
  %v301 = vadd.f32 %v173, %v237
  %v302 = vadd.f32 %v174, %v238
  %v303 = vadd.f32 %v175, %v239
  %v304 = vadd.f32 %v176, %v240
  %v305 = vadd.f32 %v177, %v241
  %v306 = vadd.f32 %v178, %v242
  %v307 = vadd.f32 %v179, %v243
  %v308 = vadd.f32 %v180, %v244
  %v309 = vadd.f32 %v181, %v245
  %v310 = vadd.f32 %v182, %v246
  %v311 = vadd.f32 %v183, %v247
  %v312 = vadd.f32 %v184, %v248
  %v313 = vadd.f32 %v185, %v249
  %v314 = vadd.f32 %v186, %v250
  %v315 = vadd.f32 %v187, %v251
  %v316 = vadd.f32 %v188, %v252
  %v317 = vadd.f32 %v189, %v253
  %v318 = vadd.f32 %v190, %v254
  %v319 = vadd.f32 %v191, %v255
  %v320 = vadd.f32 %v192, %v256
  %v321 = vadd.f32 %v193, %v257
  %v322 = vadd.f32 %v194, %v258
  %v323 = vadd.f32 %v195, %v259
  %v324 = vadd.f32 %v196, %v260
  %v325 = vadd.f32 %v197, %v261
  %v326 = vadd.f32 %v198, %v262
  %v327 = vadd.f32 %v199, %v263
  %v328 = vadd.f32 %v200, %v264
  %v329 = vadd.f32 %v201, %v265
  %v330 = vadd.f32 %v202, %v266
  %v331 = vadd.f32 %v203, %v267
  %v332 = vadd.f32 %v204, %v268
  %v333 = vadd.f32 %v205, %v269
  %v334 = vadd.f32 %v206, %v270
  %v335 = vadd.f32 %v207, %v271
  %v336 = vadd.f32 %v208, %v272
  %v337 = vadd.f32 %v209, %v273
  %v338 = vadd.f32 %v210, %v274
  %v339 = vadd.f32 %v211, %v275
  %v340 = vadd.f32 %v212, %v276
  %v341 = vadd.f32 %v213, %v277
  %v342 = vadd.f32 %v214, %v278
  %v343 = vadd.f32 %v215, %v279
  %v344 = vadd.f32 %v216, %v280
  %v345 = vadd.f32 %v217, %v281
  %v346 = vadd.f32 %v218, %v282
  %v347 = vadd.f32 %v219, %v283
  %v348 = vadd.f32 %v220, %v284
  %v349 = vadd.f32 %v221, %v285
  %v350 = vadd.f32 %v222, %v286
  %351 = vst [vmem:[%s4] sm:$0xff] %v287
  %352 = vst [vmem:[%s4 + $0x8] sm:$0xff] %v288
  %353 = vst [vmem:[%s4 + $0x10] sm:$0xff] %v289
  %354 = vst [vmem:[%s4 + $0x18] sm:$0xff] %v290
  %355 = vst [vmem:[%s4 + $0x20] sm:$0xff] %v291
  %356 = vst [vmem:[%s4 + $0x28] sm:$0xff] %v292
  %357 = vst [vmem:[%s4 + $0x30] sm:$0xff] %v293
  %358 = vst [vmem:[%s4 + $0x38] sm:$0xff] %v294
  %359 = vst [vmem:[%s4 + $0x40] sm:$0xff] %v295
  %360 = vst [vmem:[%s4 + $0x48] sm:$0xff] %v296
  %361 = vst [vmem:[%s4 + $0x50] sm:$0xff] %v297
  %362 = vst [vmem:[%s4 + $0x58] sm:$0xff] %v298
  %363 = vst [vmem:[%s4 + $0x60] sm:$0xff] %v299
  %364 = vst [vmem:[%s4 + $0x68] sm:$0xff] %v300
  %365 = vst [vmem:[%s4 + $0x70] sm:$0xff] %v301
  %366 = vst [vmem:[%s4 + $0x78] sm:$0xff] %v302
  %367 = vst [vmem:[%s4 + $0x80] sm:$0xff] %v303
  %368 = vst [vmem:[%s4 + $0x88] sm:$0xff] %v304
  %369 = vst [vmem:[%s4 + $0x90] sm:$0xff] %v305
  %370 = vst [vmem:[%s4 + $0x98] sm:$0xff] %v306
  %371 = vst [vmem:[%s4 + $0xa0] sm:$0xff] %v307
  %372 = vst [vmem:[%s4 + $0xa8] sm:$0xff] %v308
  %373 = vst [vmem:[%s4 + $0xb0] sm:$0xff] %v309
  %374 = vst [vmem:[%s4 + $0xb8] sm:$0xff] %v310
  %375 = vst [vmem:[%s4 + $0xc0] sm:$0xff] %v311
  %376 = vst [vmem:[%s4 + $0xc8] sm:$0xff] %v312
  %377 = vst [vmem:[%s4 + $0xd0] sm:$0xff] %v313
  %378 = vst [vmem:[%s4 + $0xd8] sm:$0xff] %v314
  %379 = vst [vmem:[%s4 + $0xe0] sm:$0xff] %v315
  %380 = vst [vmem:[%s4 + $0xe8] sm:$0xff] %v316
  %381 = vst [vmem:[%s4 + $0xf0] sm:$0xff] %v317
  %382 = vst [vmem:[%s4 + $0xf8] sm:$0xff] %v318
  %383 = vst [vmem:[%s4 + $0x100] sm:$0xff] %v319
  %384 = vst [vmem:[%s4 + $0x108] sm:$0xff] %v320
  %385 = vst [vmem:[%s4 + $0x110] sm:$0xff] %v321
  %386 = vst [vmem:[%s4 + $0x118] sm:$0xff] %v322
  %387 = vst [vmem:[%s4 + $0x120] sm:$0xff] %v323
  %388 = vst [vmem:[%s4 + $0x128] sm:$0xff] %v324
  %389 = vst [vmem:[%s4 + $0x130] sm:$0xff] %v325
  %390 = vst [vmem:[%s4 + $0x138] sm:$0xff] %v326
  %391 = vst [vmem:[%s4 + $0x140] sm:$0xff] %v327
  %392 = vst [vmem:[%s4 + $0x148] sm:$0xff] %v328
  %393 = vst [vmem:[%s4 + $0x150] sm:$0xff] %v329
  %394 = vst [vmem:[%s4 + $0x158] sm:$0xff] %v330
  %395 = vst [vmem:[%s4 + $0x160] sm:$0xff] %v331
  %396 = vst [vmem:[%s4 + $0x168] sm:$0xff] %v332
  %397 = vst [vmem:[%s4 + $0x170] sm:$0xff] %v333
  %398 = vst [vmem:[%s4 + $0x178] sm:$0xff] %v334
  %399 = vst [vmem:[%s4 + $0x180] sm:$0xff] %v335
  %400 = vst [vmem:[%s4 + $0x188] sm:$0xff] %v336
  %401 = vst [vmem:[%s4 + $0x190] sm:$0xff] %v337
  %402 = vst [vmem:[%s4 + $0x198] sm:$0xff] %v338
  %403 = vst [vmem:[%s4 + $0x1a0] sm:$0xff] %v339
  %404 = vst [vmem:[%s4 + $0x1a8] sm:$0xff] %v340
  %405 = vst [vmem:[%s4 + $0x1b0] sm:$0xff] %v341
  %406 = vst [vmem:[%s4 + $0x1b8] sm:$0xff] %v342
  %407 = vst [vmem:[%s4 + $0x1c0] sm:$0xff] %v343
  %408 = vst [vmem:[%s4 + $0x1c8] sm:$0xff] %v344
  %409 = vst [vmem:[%s4 + $0x1d0] sm:$0xff] %v345
  %410 = vst [vmem:[%s4 + $0x1d8] sm:$0xff] %v346
  %411 = vst [vmem:[%s4 + $0x1e0] sm:$0xff] %v347
  %412 = vst [vmem:[%s4 + $0x1e8] sm:$0xff] %v348
  %413 = vst [vmem:[%s4 + $0x1f0] sm:$0xff] %v349
  %414 = vst [vmem:[%s4 + $0x1f8] sm:$0xff] %v350
  // Predicated region
  $region18: #{conv_mixer_layer_nhwc.5} parent=0 // pred_check
    _
  $region19: #{conv_mixer_layer_nhwc.5} parent=0 // pred_check_branch
    %416 = sbr.rel (0) target = $region21
  $region20: #{conv_mixer_layer_nhwc.5} parent=0 // pred_region
    _
  $region21: #{conv_mixer_layer_nhwc.5} parent=0 // pred_fallthru
    _
  // Predicated region
  $region22: #{conv_mixer_layer_nhwc.5} parent=0 // pred_check
    _
  $region23: #{conv_mixer_layer_nhwc.5} parent=0 // pred_check_branch
    %418 = sbr.rel (0) target = $region25
  $region24: #{conv_mixer_layer_nhwc.5} parent=0 // pred_region
    _
  $region25: #{conv_mixer_layer_nhwc.5} parent=0 // pred_fallthru
    _

// kernel: conv_mixer_layer_nhwc.3
$region0: #{conv_mixer_layer_nhwc.3}
  #allocation0 [shape = 'u32[]', space=smem, size = 0x4, offset = 0x4, fixed_abs, tag = 'smem constant byte address 0x4 - core index']
  #allocation1 [shape = 'u32[144,128]{1,0:T(1,128)}', space=vmem, size = 0x12000, scoped, tag = 'internal scratch']
  %s0 = inlined_call_operand.vmem [shape: f32[2,18,24,128], index: 0, kind: input, shape index: {}]
  %s1 = inlined_call_operand.vmem [shape: f32[9,128], index: 1, kind: input, shape index: {}]
  %s2 = inlined_call_operand.vmem [shape: f32[1,128], index: 2, kind: input, shape index: {}]
  %s3 = inlined_call_operand.vmem [shape: f32[2,16,16,128], index: 3, kind: output, shape index: {0}]
  %s4 = inlined_call_operand.vmem [shape: f32[2,1,128], index: 4, kind: output, shape index: {1}]
  %s5 = inlined_call_operand.vmem [shape: f32[2,1,128], index: 5, kind: output, shape index: {2}]
  %6 = xla_tuple %s3, %s4, %s5
  %s7 = sld [smem:[#allocation0]]
  $region68: #{conv_mixer_layer_nhwc.3} parent=0
    _
  %s9 = ssub.s32 1, %s7
  %s10 = scalar_select 0, %s9, %s7
  loop: start=0, step=1, limit=4
  $region2: #{conv_mixer_layer_nhwc.3} parent=0 // loop_pre_header
    _
  $region3: #{conv_mixer_layer_nhwc.3} parent=0 // loop_header
    %s12 = sphi 0, %s16
    %p13 = scmp.ge.s32.totalorder %s12, 4
    %s19 = sphi 0, %s31
    %s20 = sphi 0, %s27
    %s21 = sphi 0, %s19
    %s22 = sphi 0, %s20
    %s23 = sphi 0, %s21
    %s24 = sphi 0, %s22
    %s36 = sphi 0, %s38
    %s39 = sphi 0, %s36
    %s40 = sphi 0, %s39
    %s56 = sphi 0, %s40
    %s62 = sphi 0, %s64
    %s65 = sphi 0, %s62
    %s66 = sphi 0, %s65
    %s82 = sphi 0, %s66
    %s88 = sphi 0, %s90
    %s91 = sphi 0, %s88
    %s92 = sphi 0, %s91
    %s108 = sphi 0, %s92
    %s116 = sphi 0, %s118
    %s119 = sphi 0, %s116
    %s120 = sphi 0, %s119
    %s136 = sphi 0, %s120
    %s144 = sphi 0, %s146
    %s147 = sphi 0, %s144
    %s148 = sphi 0, %s147
    %s164 = sphi 0, %s148
    %s172 = sphi 0, %s174
    %s175 = sphi 0, %s172
    %s176 = sphi 0, %s175
    %s192 = sphi 0, %s176
  $region4: #{conv_mixer_layer_nhwc.3} parent=0 // loop_header_branch
    %15 = sbr.rel (%p13) target = $region8
  $region5: #{conv_mixer_layer_nhwc.3} parent=0 // loop_body
    %s17 = ssub.s32 %s12, 1
    %s18 = ssub.s32 %s12, 2
    %s25 = sadd.s32 1, %s20
    %p26 = scmp.ge.s32.totalorder %s25, 1
    %s27 = scalar_select %p26, 0, %s25
    %s28 = sadd.s32 1, %s19
    %s29 = scalar_select %p26, %s28, %s19
    %p30 = scmp.ge.s32.totalorder %s29, 2
    %s31 = scalar_select %p30, 0, %s29
    %s32 = ssub.s32 %s19, %s31
    %s33 = ssub.s32 %s20, %s27
    %s34 = sor.u32 %s32, %s33
    %p35 = scmp.eq.s32.totalorder %s34, 0
    %s37 = sadd.s32 %s36, 1
    %s38 = scalar_select %p35, %s36, %s37
    %p41 = pneg %p35
    %p42 = scmp.eq.s32.totalorder %s12, 1
    %p43 = por %p41, %p42
    %p44 = scmp.ne.s32.totalorder %s36, %s39
    %p45 = scmp.eq.s32.totalorder %s12, 0
    %p46 = por %p44, %p45
    %p47 = scmp.ne.s32.totalorder %s36, %s39
    %p48 = scmp.eq.s32.totalorder %s17, 1
    %p49 = por %p47, %p48
    %p50 = scmp.ne.s32.totalorder %s39, %s40
    %p51 = scmp.eq.s32.totalorder %s17, 0
    %p52 = por %p50, %p51
    %p53 = scmp.ne.s32.totalorder %s39, %s40
    %p54 = scmp.eq.s32.totalorder %s18, 1
    %p55 = por %p53, %p54
    %p57 = scmp.ne.s32.totalorder %s40, %s56
    %p58 = scmp.eq.s32.totalorder %s18, 0
    %p59 = por %p57, %p58
    %s60 = ssub.s32 %s20, %s27
    %p61 = scmp.eq.s32.totalorder %s60, 0
    %s63 = sadd.s32 %s62, 1
    %s64 = scalar_select %p61, %s62, %s63
    %p67 = pneg %p61
    %p68 = scmp.eq.s32.totalorder %s12, 1
    %p69 = por %p67, %p68
    %p70 = scmp.ne.s32.totalorder %s62, %s65
    %p71 = scmp.eq.s32.totalorder %s12, 0
    %p72 = por %p70, %p71
    %p73 = scmp.ne.s32.totalorder %s62, %s65
    %p74 = scmp.eq.s32.totalorder %s17, 1
    %p75 = por %p73, %p74
    %p76 = scmp.ne.s32.totalorder %s65, %s66
    %p77 = scmp.eq.s32.totalorder %s17, 0
    %p78 = por %p76, %p77
    %p79 = scmp.ne.s32.totalorder %s65, %s66
    %p80 = scmp.eq.s32.totalorder %s18, 1
    %p81 = por %p79, %p80
    %p83 = scmp.ne.s32.totalorder %s66, %s82
    %p84 = scmp.eq.s32.totalorder %s18, 0
    %p85 = por %p83, %p84
    %s86 = ssub.s32 %s20, %s27
    %p87 = scmp.eq.s32.totalorder %s86, 0
    %s89 = sadd.s32 %s88, 1
    %s90 = scalar_select %p87, %s88, %s89
    %p93 = pneg %p87
    %p94 = scmp.eq.s32.totalorder %s12, 1
    %p95 = por %p93, %p94
    %p96 = scmp.ne.s32.totalorder %s88, %s91
    %p97 = scmp.eq.s32.totalorder %s12, 0
    %p98 = por %p96, %p97
    %p99 = scmp.ne.s32.totalorder %s88, %s91
    %p100 = scmp.eq.s32.totalorder %s17, 1
    %p101 = por %p99, %p100
    %p102 = scmp.ne.s32.totalorder %s91, %s92
    %p103 = scmp.eq.s32.totalorder %s17, 0
    %p104 = por %p102, %p103
    %p105 = scmp.ne.s32.totalorder %s91, %s92
    %p106 = scmp.eq.s32.totalorder %s18, 1
    %p107 = por %p105, %p106
    %p109 = scmp.ne.s32.totalorder %s92, %s108
    %p110 = scmp.eq.s32.totalorder %s18, 0
    %p111 = por %p109, %p110
    %s112 = ssub.s32 %s19, %s31
    %s113 = ssub.s32 %s20, %s27
    %s114 = sor.u32 %s112, %s113
    %p115 = scmp.eq.s32.totalorder %s114, 0
    %s117 = sadd.s32 %s116, 1
    %s118 = scalar_select %p115, %s116, %s117
    %p121 = pneg %p115
    %p122 = scmp.eq.s32.totalorder %s12, 1
    %p123 = por %p121, %p122
    %p124 = scmp.ne.s32.totalorder %s116, %s119
    %p125 = scmp.eq.s32.totalorder %s12, 0
    %p126 = por %p124, %p125
    %p127 = scmp.ne.s32.totalorder %s116, %s119
    %p128 = scmp.eq.s32.totalorder %s17, 1
    %p129 = por %p127, %p128
    %p130 = scmp.ne.s32.totalorder %s119, %s120
    %p131 = scmp.eq.s32.totalorder %s17, 0
    %p132 = por %p130, %p131
    %p133 = scmp.ne.s32.totalorder %s119, %s120
    %p134 = scmp.eq.s32.totalorder %s18, 1
    %p135 = por %p133, %p134
    %p137 = scmp.ne.s32.totalorder %s120, %s136
    %p138 = scmp.eq.s32.totalorder %s18, 0
    %p139 = por %p137, %p138
    %s140 = ssub.s32 %s19, %s31
    %s141 = ssub.s32 %s20, %s27
    %s142 = sor.u32 %s140, %s141
    %p143 = scmp.eq.s32.totalorder %s142, 0
    %s145 = sadd.s32 %s144, 1
    %s146 = scalar_select %p143, %s144, %s145
    %p149 = pneg %p143
    %p150 = scmp.eq.s32.totalorder %s12, 1
    %p151 = por %p149, %p150
    %p152 = scmp.ne.s32.totalorder %s144, %s147
    %p153 = scmp.eq.s32.totalorder %s12, 0
    %p154 = por %p152, %p153
    %p155 = scmp.ne.s32.totalorder %s144, %s147
    %p156 = scmp.eq.s32.totalorder %s17, 1
    %p157 = por %p155, %p156
    %p158 = scmp.ne.s32.totalorder %s147, %s148
    %p159 = scmp.eq.s32.totalorder %s17, 0
    %p160 = por %p158, %p159
    %p161 = scmp.ne.s32.totalorder %s147, %s148
    %p162 = scmp.eq.s32.totalorder %s18, 1
    %p163 = por %p161, %p162
    %p165 = scmp.ne.s32.totalorder %s148, %s164
    %p166 = scmp.eq.s32.totalorder %s18, 0
    %p167 = por %p165, %p166
    %s168 = ssub.s32 %s19, %s31
    %s169 = ssub.s32 %s20, %s27
    %s170 = sor.u32 %s168, %s169
    %p171 = scmp.eq.s32.totalorder %s170, 0
    %s173 = sadd.s32 %s172, 1
    %s174 = scalar_select %p171, %s172, %s173
    %p177 = pneg %p171
    %p178 = scmp.eq.s32.totalorder %s12, 1
    %p179 = por %p177, %p178
    %p180 = scmp.ne.s32.totalorder %s172, %s175
    %p181 = scmp.eq.s32.totalorder %s12, 0
    %p182 = por %p180, %p181
    %p183 = scmp.ne.s32.totalorder %s172, %s175
    %p184 = scmp.eq.s32.totalorder %s17, 1
    %p185 = por %p183, %p184
    %p186 = scmp.ne.s32.totalorder %s175, %s176
    %p187 = scmp.eq.s32.totalorder %s17, 0
    %p188 = por %p186, %p187
    %p189 = scmp.ne.s32.totalorder %s175, %s176
    %p190 = scmp.eq.s32.totalorder %s18, 1
    %p191 = por %p189, %p190
    %p193 = scmp.ne.s32.totalorder %s176, %s192
    %p194 = scmp.eq.s32.totalorder %s18, 0
    %p195 = por %p193, %p194
    %p196 = scmp.le.s32.totalorder 1, %s12
    %p197 = scmp.lt.s32.totalorder %s12, 3
    %p198 = pnand %p196, %p197
    %p199 = pneg %p198
    // Predicated region
    $region9: #{conv_mixer_layer_nhwc.3} parent=5 // pred_check
      _
    $region10: #{conv_mixer_layer_nhwc.3} parent=5 // pred_check_branch
      %201 = sbr.rel (%p198) target = $region12
    $region11: #{conv_mixer_layer_nhwc.3} parent=5 // pred_region
      %s202 = ssub.s32 %s12, 1
      // Predicated region
      $region13: #{conv_mixer_layer_nhwc.3} parent=11 // pred_check
        %p203 = pneg %p78
      $region14: #{conv_mixer_layer_nhwc.3} parent=11 // pred_check_branch
        %205 = sbr.rel (%p203) target = $region16
      $region15: #{conv_mixer_layer_nhwc.3} parent=11 // pred_region
        %p206 = scmp.lt.s32.totalorder %s22, 0
        %s207 = scalar_select %p206, %s22, 0
        %s208 = smul.addr %s207, 8
        %s209 = scalar_lea.vmem %s1, %s208
      $region16: #{conv_mixer_layer_nhwc.3} parent=11 // pred_fallthru
        _
      // Predicated region
      $region17: #{conv_mixer_layer_nhwc.3} parent=11 // pred_check
        %p210 = pneg %p104
      $region18: #{conv_mixer_layer_nhwc.3} parent=11 // pred_check_branch
        %212 = sbr.rel (%p210) target = $region20
      $region19: #{conv_mixer_layer_nhwc.3} parent=11 // pred_region
        %p213 = scmp.lt.s32.totalorder %s22, 0
        %s214 = scalar_select %p213, %s22, 0
        %s215 = scalar_lea.vmem %s2, %s214
      $region20: #{conv_mixer_layer_nhwc.3} parent=11 // pred_fallthru
        _
    $region12: #{conv_mixer_layer_nhwc.3} parent=5 // pred_fallthru
      _
    %p216 = scmp.lt.s32.totalorder %s12, 2
    // Predicated region
    $region21: #{conv_mixer_layer_nhwc.3} parent=5 // pred_check
      %p217 = pneg %p216
    $region22: #{conv_mixer_layer_nhwc.3} parent=5 // pred_check_branch
      %219 = sbr.rel (%p217) target = $region24
    $region23: #{conv_mixer_layer_nhwc.3} parent=5 // pred_region
      // Predicated region
      $region25: #{conv_mixer_layer_nhwc.3} parent=23 // pred_check
        %p220 = pneg %p46
      $region26: #{conv_mixer_layer_nhwc.3} parent=23 // pred_check_branch
        %222 = sbr.rel (%p220) target = $region28
      $region27: #{conv_mixer_layer_nhwc.3} parent=23 // pred_region
        %p223 = scmp.lt.s32.totalorder %s19, 1
        %s224 = scalar_select %p223, %s19, 1
        %p225 = scmp.lt.s32.totalorder %s20, 0
        %s226 = scalar_select %p225, %s20, 0
        %s227 = smul.addr %s224, 54
        %s228 = sadd.s32 %s226, %s227
        %s229 = smul.addr %s228, 8
        %s230 = scalar_lea.vmem %s0, %s229
      $region28: #{conv_mixer_layer_nhwc.3} parent=23 // pred_fallthru
        _
    $region24: #{conv_mixer_layer_nhwc.3} parent=5 // pred_fallthru
      _
    %p231 = scmp.le.s32.totalorder 1, %s12
    %p232 = scmp.lt.s32.totalorder %s12, 3
    %p233 = pnand %p231, %p232
    %p234 = pneg %p233
    // Predicated region
    $region29: #{conv_mixer_layer_nhwc.3} parent=5 // pred_check
      _
    $region30: #{conv_mixer_layer_nhwc.3} parent=5 // pred_check_branch
      %236 = sbr.rel (%p233) target = $region32
    $region31: #{conv_mixer_layer_nhwc.3} parent=5 // pred_region
      %s237 = ssub.s32 %s12, 1
      %p238 = scmp.lt.s32.totalorder %s21, 1
      %s239 = scalar_select %p238, %s21, 1
      %p240 = scmp.lt.s32.totalorder %s22, 0
      %s241 = scalar_select %p240, %s22, 0
      %s242 = smul.addr %s239, 54
      %s243 = sadd.s32 %s241, %s242
      %s244 = smul.addr %s243, 8
      %s245 = scalar_lea.vmem %s0, %s244
      %p246 = pneg %p52
      %p247 = pneg %p49
      %p248 = scmp.lt.s32.totalorder %s22, 0
      %s249 = scalar_select %p248, %s22, 0
      %s250 = smul.addr %s249, 8
      %s251 = scalar_lea.vmem %s1, %s250
      %p252 = pneg %p78
      %p253 = pneg %p75
      %p254 = scmp.lt.s32.totalorder %s22, 0
      %s255 = scalar_select %p254, %s22, 0
      %s256 = scalar_lea.vmem %s2, %s255
      %p257 = pneg %p104
      %p258 = pneg %p101
      %p259 = pneg %p132
      %p260 = pneg %p129
      %p261 = scmp.lt.s32.totalorder %s21, 1
      %s262 = scalar_select %p261, %s21, 1
      %p263 = scmp.lt.s32.totalorder %s22, 0
      %s264 = scalar_select %p263, %s22, 0
      %s265 = smul.addr %s262, 32
      %s266 = sadd.s32 %s264, %s265
      %s267 = smul.addr %s266, 8
      %s268 = scalar_lea.vmem %s3, %s267
      %p269 = pneg %p160
      %p270 = pneg %p157
      %p271 = scmp.lt.s32.totalorder %s21, 1
      %s272 = scalar_select %p271, %s21, 1
      %p273 = scmp.lt.s32.totalorder %s22, 0
      %s274 = scalar_select %p273, %s22, 0
      %s275 = sadd.s32 %s274, %s272
      %s276 = scalar_lea.vmem %s4, %s275
      %p277 = pneg %p188
      %p278 = pneg %p185
      %p279 = scmp.lt.s32.totalorder %s21, 1
      %s280 = scalar_select %p279, %s21, 1
      %p281 = scmp.lt.s32.totalorder %s22, 0
      %s282 = scalar_select %p281, %s22, 0
      %s283 = sadd.s32 %s282, %s280
      %s284 = scalar_lea.vmem %s5, %s283
      %p285 = scmp.lt.s32.totalorder %s21, 1
      %s286 = scalar_select %p285, %s21, 1
      %p287 = scmp.lt.s32.totalorder %s22, 0
      %s288 = scalar_select %p287, %s22, 0
      %s289 = smul.addr %s286, 54
      %s290 = sadd.s32 %s288, %s289
      %s291 = smul.addr %s290, 8
      %s292 = scalar_lea.vmem %s0, %s291
      %p293 = scmp.lt.s32.totalorder %s22, 0
      %s294 = scalar_select %p293, %s22, 0
      %s295 = smul.addr %s294, 8
      %s296 = scalar_lea.vmem %s1, %s295
      %p297 = scmp.lt.s32.totalorder %s22, 0
      %s298 = scalar_select %p297, %s22, 0
      %s299 = scalar_lea.vmem %s2, %s298
      %p300 = scmp.lt.s32.totalorder %s21, 1
      %s301 = scalar_select %p300, %s21, 1
      %p302 = scmp.lt.s32.totalorder %s22, 0
      %s303 = scalar_select %p302, %s22, 0
      %s304 = smul.addr %s301, 32
      %s305 = sadd.s32 %s303, %s304
      %s306 = smul.addr %s305, 8
      %s307 = scalar_lea.vmem %s3, %s306
      %p308 = scmp.lt.s32.totalorder %s21, 1
      %s309 = scalar_select %p308, %s21, 1
      %p310 = scmp.lt.s32.totalorder %s22, 0
      %s311 = scalar_select %p310, %s22, 0
      %s312 = sadd.s32 %s311, %s309
      %s313 = scalar_lea.vmem %s4, %s312
      %p314 = scmp.lt.s32.totalorder %s21, 1
      %s315 = scalar_select %p314, %s21, 1
      %p316 = scmp.lt.s32.totalorder %s22, 0
      %s317 = scalar_select %p316, %s22, 0
      %s318 = sadd.s32 %s317, %s315
      %s319 = scalar_lea.vmem %s5, %s318
      %v320 = vld [vmem:[%s296] sm:$0xff]
      %v321 = vld [vmem:[%s296 + $0x8] sm:$0x1]
      %v322 = vld [vmem:[%s299] sm:$0x1]
      loop: start=0, step=1, limit=2
      $region33: #{conv_mixer_layer_nhwc.3} parent=31 // loop_pre_header
        _
      $region34: #{conv_mixer_layer_nhwc.3} parent=31 // loop_header
        %s324 = sphi 0, %s328
        %p325 = scmp.ge.s32.totalorder %s324, 2
        %v329 = vphi 0.0, %v933
        %v330 = vphi 0.0, %v971
      $region35: #{conv_mixer_layer_nhwc.3} parent=31 // loop_header_branch
        %327 = sbr.rel (%p325) target = $region39
      $region36: #{conv_mixer_layer_nhwc.3} parent=31 // loop_body
        %s331 = smul.u32 %s324, 8
        %s332 = smul.u32 %s331, 24
        %s333 = scalar_lea.vmem %s292, %s332
        %v334 = vld [vmem:[%s333] sm:$0xff]
        %v335 = vld [vmem:[%s333 + $0x8] sm:$0xff]
        %v336 = vld [vmem:[%s333 + $0x10] sm:$0xff]
        %v337 = vld [vmem:[%s333 + $0x18] sm:$0xff]
        %v338 = vld [vmem:[%s333 + $0x20] sm:$0xff]
        %v339 = vld [vmem:[%s333 + $0x28] sm:$0xff]
        %v340 = vld [vmem:[%s333 + $0x30] sm:$0xff]
        %v341 = vld [vmem:[%s333 + $0x38] sm:$0xff]
        %v342 = vld [vmem:[%s333 + $0x40] sm:$0xff]
        %v343 = vld [vmem:[%s333 + $0x48] sm:$0xff]
        %v344 = vld [vmem:[%s333 + $0x50] sm:$0xff]
        %v345 = vld [vmem:[%s333 + $0x58] sm:$0xff]
        %v346 = vld [vmem:[%s333 + $0x60] sm:$0xff]
        %v347 = vld [vmem:[%s333 + $0x68] sm:$0xff]
        %v348 = vld [vmem:[%s333 + $0x70] sm:$0xff]
        %v349 = vld [vmem:[%s333 + $0x78] sm:$0xff]
        %v350 = vld [vmem:[%s333 + $0x80] sm:$0xff]
        %v351 = vld [vmem:[%s333 + $0x88] sm:$0xff]
        %v352 = vld [vmem:[%s333 + $0x90] sm:$0xff]
        %v353 = vld [vmem:[%s333 + $0x98] sm:$0xff]
        %v354 = vld [vmem:[%s333 + $0xa0] sm:$0xff]
        %v355 = vld [vmem:[%s333 + $0xa8] sm:$0xff]
        %v356 = vld [vmem:[%s333 + $0xb0] sm:$0xff]
        %v357 = vld [vmem:[%s333 + $0xb8] sm:$0xff]
        %v358 = vld [vmem:[%s333 + $0xc0] sm:$0xff]
        %v359 = vld [vmem:[%s333 + $0xc8] sm:$0xff]
        %v360 = vld [vmem:[%s333 + $0xd0] sm:$0xff]
        %v361 = vld [vmem:[%s333 + $0xd8] sm:$0xff]
        %v362 = vld [vmem:[%s333 + $0xe0] sm:$0xff]
        %v363 = vld [vmem:[%s333 + $0xe8] sm:$0xff]
        %v364 = vlaneseq
        %v365 = vshrl.u32 %v364, 7
        %v366 = vsub.s32 0, %v365
        %v367 = vrot.slane %v320, %v366
        %v368 = vmul.f32 %v334, %v367
        %v369 = vmul.f32 %v335, %v367
        %v370 = vmul.f32 %v337, %v367
        %v371 = vmul.f32 %v338, %v367
        %v372 = vmul.f32 %v340, %v367
        %v373 = vmul.f32 %v341, %v367
        %v374 = vmul.f32 %v343, %v367
        %v375 = vmul.f32 %v344, %v367
        %v376 = vmul.f32 %v346, %v367
        %v377 = vmul.f32 %v347, %v367
        %v378 = vmul.f32 %v349, %v367
        %v379 = vmul.f32 %v350, %v367
        %v380 = vmul.f32 %v352, %v367
        %v381 = vmul.f32 %v353, %v367
        %v382 = vmul.f32 %v355, %v367
        %v383 = vmul.f32 %v356, %v367
        %v384 = vadd.f32 %v368, 0.0
        %v385 = vadd.f32 %v369, 0.0
        %v386 = vadd.f32 %v370, 0.0
        %v387 = vadd.f32 %v371, 0.0
        %v388 = vadd.f32 %v372, 0.0
        %v389 = vadd.f32 %v373, 0.0
        %v390 = vadd.f32 %v374, 0.0
        %v391 = vadd.f32 %v375, 0.0
        %v392 = vadd.f32 %v376, 0.0
        %v393 = vadd.f32 %v377, 0.0
        %v394 = vadd.f32 %v378, 0.0
        %v395 = vadd.f32 %v379, 0.0
        %v396 = vadd.f32 %v380, 0.0
        %v397 = vadd.f32 %v381, 0.0
        %v398 = vadd.f32 %v382, 0.0
        %v399 = vadd.f32 %v383, 0.0
        %v400 = vlaneseq
        %v401 = vshrl.u32 %v400, 7
        %v402 = vsub.s32 3, %v401
        %v403 = vrot.slane %v320, %v402
        %v404 = vmul.f32 %v337, %v403
        %v405 = vmul.f32 %v338, %v403
        %v406 = vmul.f32 %v340, %v403
        %v407 = vmul.f32 %v341, %v403
        %v408 = vmul.f32 %v343, %v403
        %v409 = vmul.f32 %v344, %v403
        %v410 = vmul.f32 %v346, %v403
        %v411 = vmul.f32 %v347, %v403
        %v412 = vmul.f32 %v349, %v403
        %v413 = vmul.f32 %v350, %v403
        %v414 = vmul.f32 %v352, %v403
        %v415 = vmul.f32 %v353, %v403
        %v416 = vmul.f32 %v355, %v403
        %v417 = vmul.f32 %v356, %v403
        %v418 = vmul.f32 %v358, %v403
        %v419 = vmul.f32 %v359, %v403
        %v420 = vadd.f32 %v384, %v404
        %v421 = vadd.f32 %v385, %v405
        %v422 = vadd.f32 %v386, %v406
        %v423 = vadd.f32 %v387, %v407
        %v424 = vadd.f32 %v388, %v408
        %v425 = vadd.f32 %v389, %v409
        %v426 = vadd.f32 %v390, %v410
        %v427 = vadd.f32 %v391, %v411
        %v428 = vadd.f32 %v392, %v412
        %v429 = vadd.f32 %v393, %v413
        %v430 = vadd.f32 %v394, %v414
        %v431 = vadd.f32 %v395, %v415
        %v432 = vadd.f32 %v396, %v416
        %v433 = vadd.f32 %v397, %v417
        %v434 = vadd.f32 %v398, %v418
        %v435 = vadd.f32 %v399, %v419
        %v436 = vlaneseq
        %v437 = vshrl.u32 %v436, 7
        %v438 = vsub.s32 6, %v437
        %v439 = vrot.slane %v320, %v438
        %v440 = vmul.f32 %v340, %v439
        %v441 = vmul.f32 %v341, %v439
        %v442 = vmul.f32 %v343, %v439
        %v443 = vmul.f32 %v344, %v439
        %v444 = vmul.f32 %v346, %v439
        %v445 = vmul.f32 %v347, %v439
        %v446 = vmul.f32 %v349, %v439
        %v447 = vmul.f32 %v350, %v439
        %v448 = vmul.f32 %v352, %v439
        %v449 = vmul.f32 %v353, %v439
        %v450 = vmul.f32 %v355, %v439
        %v451 = vmul.f32 %v356, %v439
        %v452 = vmul.f32 %v358, %v439
        %v453 = vmul.f32 %v359, %v439
        %v454 = vmul.f32 %v361, %v439
        %v455 = vmul.f32 %v362, %v439
        %v456 = vadd.f32 %v420, %v440
        %v457 = vadd.f32 %v421, %v441
        %v458 = vadd.f32 %v422, %v442
        %v459 = vadd.f32 %v423, %v443
        %v460 = vadd.f32 %v424, %v444
        %v461 = vadd.f32 %v425, %v445
        %v462 = vadd.f32 %v426, %v446
        %v463 = vadd.f32 %v427, %v447
        %v464 = vadd.f32 %v428, %v448
        %v465 = vadd.f32 %v429, %v449
        %v466 = vadd.f32 %v430, %v450
        %v467 = vadd.f32 %v431, %v451
        %v468 = vadd.f32 %v432, %v452
        %v469 = vadd.f32 %v433, %v453
        %v470 = vadd.f32 %v434, %v454
        %v471 = vadd.f32 %v435, %v455
        %v472 = vrot.slane %v334, 1
        %v473 = vrot.slane %v337, 1
        %v474 = vrot.slane %v340, 1
        %v475 = vrot.slane %v343, 1
        %v476 = vrot.slane %v346, 1
        %v477 = vrot.slane %v349, 1
        %v478 = vrot.slane %v352, 1
        %v479 = vrot.slane %v355, 1
        %v480 = vrot.slane %v358, 1
        %v481 = vrot.slane %v361, 1
        %v482 = vrot.slane %v335, 1
        %v483 = vrot.slane %v338, 1
        %v484 = vrot.slane %v341, 1
        %v485 = vrot.slane %v344, 1
        %v486 = vrot.slane %v347, 1
        %v487 = vrot.slane %v350, 1
        %v488 = vrot.slane %v353, 1
        %v489 = vrot.slane %v356, 1
        %v490 = vrot.slane %v359, 1
        %v491 = vrot.slane %v362, 1
        %v492 = vrot.slane %v336, 1
        %v493 = vrot.slane %v339, 1
        %v494 = vrot.slane %v342, 1
        %v495 = vrot.slane %v345, 1
        %v496 = vrot.slane %v348, 1
        %v497 = vrot.slane %v351, 1
        %v498 = vrot.slane %v354, 1
        %v499 = vrot.slane %v357, 1
        %v500 = vrot.slane %v360, 1
        %v501 = vrot.slane %v363, 1
        %v502 = vlaneseq
        %v503 = vshrl.u32 %v502, 7
        %vm504 = vcmp.lt.s32.totalorder %v503, 7
        %v505 = vsel %vm504, %v482, %v492
        %v506 = vsel %vm504, %v483, %v493
        %v507 = vsel %vm504, %v484, %v494
        %v508 = vsel %vm504, %v485, %v495
        %v509 = vsel %vm504, %v486, %v496
        %v510 = vsel %vm504, %v487, %v497
        %v511 = vsel %vm504, %v488, %v498
        %v512 = vsel %vm504, %v489, %v499
        %v513 = vsel %vm504, %v490, %v500
        %v514 = vsel %vm504, %v491, %v501
        %v515 = vsel %vm504, %v472, %v482
        %v516 = vsel %vm504, %v473, %v483
        %v517 = vsel %vm504, %v474, %v484
        %v518 = vsel %vm504, %v475, %v485
        %v519 = vsel %vm504, %v476, %v486
        %v520 = vsel %vm504, %v477, %v487
        %v521 = vsel %vm504, %v478, %v488
        %v522 = vsel %vm504, %v479, %v489
        %v523 = vsel %vm504, %v480, %v490
        %v524 = vsel %vm504, %v481, %v491
        %v525 = vlaneseq
        %v526 = vshrl.u32 %v525, 7
        %v527 = vsub.s32 1, %v526
        %v528 = vrot.slane %v320, %v527
        %v529 = vmul.f32 %v515, %v528
        %v530 = vmul.f32 %v505, %v528
        %v531 = vmul.f32 %v516, %v528
        %v532 = vmul.f32 %v506, %v528
        %v533 = vmul.f32 %v517, %v528
        %v534 = vmul.f32 %v507, %v528
        %v535 = vmul.f32 %v518, %v528
        %v536 = vmul.f32 %v508, %v528
        %v537 = vmul.f32 %v519, %v528
        %v538 = vmul.f32 %v509, %v528
        %v539 = vmul.f32 %v520, %v528
        %v540 = vmul.f32 %v510, %v528
        %v541 = vmul.f32 %v521, %v528
        %v542 = vmul.f32 %v511, %v528
        %v543 = vmul.f32 %v522, %v528
        %v544 = vmul.f32 %v512, %v528
        %v545 = vadd.f32 %v456, %v529
        %v546 = vadd.f32 %v457, %v530
        %v547 = vadd.f32 %v458, %v531
        %v548 = vadd.f32 %v459, %v532
        %v549 = vadd.f32 %v460, %v533
        %v550 = vadd.f32 %v461, %v534
        %v551 = vadd.f32 %v462, %v535
        %v552 = vadd.f32 %v463, %v536
        %v553 = vadd.f32 %v464, %v537
        %v554 = vadd.f32 %v465, %v538
        %v555 = vadd.f32 %v466, %v539
        %v556 = vadd.f32 %v467, %v540
        %v557 = vadd.f32 %v468, %v541
        %v558 = vadd.f32 %v469, %v542
        %v559 = vadd.f32 %v470, %v543
        %v560 = vadd.f32 %v471, %v544
        %v561 = vlaneseq
        %v562 = vshrl.u32 %v561, 7
        %v563 = vsub.s32 4, %v562
        %v564 = vrot.slane %v320, %v563
        %v565 = vmul.f32 %v516, %v564
        %v566 = vmul.f32 %v506, %v564
        %v567 = vmul.f32 %v517, %v564
        %v568 = vmul.f32 %v507, %v564
        %v569 = vmul.f32 %v518, %v564
        %v570 = vmul.f32 %v508, %v564
        %v571 = vmul.f32 %v519, %v564
        %v572 = vmul.f32 %v509, %v564
        %v573 = vmul.f32 %v520, %v564
        %v574 = vmul.f32 %v510, %v564
        %v575 = vmul.f32 %v521, %v564
        %v576 = vmul.f32 %v511, %v564
        %v577 = vmul.f32 %v522, %v564
        %v578 = vmul.f32 %v512, %v564
        %v579 = vmul.f32 %v523, %v564
        %v580 = vmul.f32 %v513, %v564
        %v581 = vadd.f32 %v545, %v565
        %v582 = vadd.f32 %v546, %v566
        %v583 = vadd.f32 %v547, %v567
        %v584 = vadd.f32 %v548, %v568
        %v585 = vadd.f32 %v549, %v569
        %v586 = vadd.f32 %v550, %v570
        %v587 = vadd.f32 %v551, %v571
        %v588 = vadd.f32 %v552, %v572
        %v589 = vadd.f32 %v553, %v573
        %v590 = vadd.f32 %v554, %v574
        %v591 = vadd.f32 %v555, %v575
        %v592 = vadd.f32 %v556, %v576
        %v593 = vadd.f32 %v557, %v577
        %v594 = vadd.f32 %v558, %v578
        %v595 = vadd.f32 %v559, %v579
        %v596 = vadd.f32 %v560, %v580
        %v597 = vlaneseq
        %v598 = vshrl.u32 %v597, 7
        %v599 = vsub.s32 7, %v598
        %v600 = vrot.slane %v320, %v599
        %v601 = vmul.f32 %v517, %v600
        %v602 = vmul.f32 %v507, %v600
        %v603 = vmul.f32 %v518, %v600
        %v604 = vmul.f32 %v508, %v600
        %v605 = vmul.f32 %v519, %v600
        %v606 = vmul.f32 %v509, %v600
        %v607 = vmul.f32 %v520, %v600
        %v608 = vmul.f32 %v510, %v600
        %v609 = vmul.f32 %v521, %v600
        %v610 = vmul.f32 %v511, %v600
        %v611 = vmul.f32 %v522, %v600
        %v612 = vmul.f32 %v512, %v600
        %v613 = vmul.f32 %v523, %v600
        %v614 = vmul.f32 %v513, %v600
        %v615 = vmul.f32 %v524, %v600
        %v616 = vmul.f32 %v514, %v600
        %v617 = vadd.f32 %v581, %v601
        %v618 = vadd.f32 %v582, %v602
        %v619 = vadd.f32 %v583, %v603
        %v620 = vadd.f32 %v584, %v604
        %v621 = vadd.f32 %v585, %v605
        %v622 = vadd.f32 %v586, %v606
        %v623 = vadd.f32 %v587, %v607
        %v624 = vadd.f32 %v588, %v608
        %v625 = vadd.f32 %v589, %v609
        %v626 = vadd.f32 %v590, %v610
        %v627 = vadd.f32 %v591, %v611
        %v628 = vadd.f32 %v592, %v612
        %v629 = vadd.f32 %v593, %v613
        %v630 = vadd.f32 %v594, %v614
        %v631 = vadd.f32 %v595, %v615
        %v632 = vadd.f32 %v596, %v616
        %v633 = vrot.slane %v334, 2
        %v634 = vrot.slane %v337, 2
        %v635 = vrot.slane %v340, 2
        %v636 = vrot.slane %v343, 2
        %v637 = vrot.slane %v346, 2
        %v638 = vrot.slane %v349, 2
        %v639 = vrot.slane %v352, 2
        %v640 = vrot.slane %v355, 2
        %v641 = vrot.slane %v358, 2
        %v642 = vrot.slane %v361, 2
        %v643 = vrot.slane %v335, 2
        %v644 = vrot.slane %v338, 2
        %v645 = vrot.slane %v341, 2
        %v646 = vrot.slane %v344, 2
        %v647 = vrot.slane %v347, 2
        %v648 = vrot.slane %v350, 2
        %v649 = vrot.slane %v353, 2
        %v650 = vrot.slane %v356, 2
        %v651 = vrot.slane %v359, 2
        %v652 = vrot.slane %v362, 2
        %v653 = vrot.slane %v336, 2
        %v654 = vrot.slane %v339, 2
        %v655 = vrot.slane %v342, 2
        %v656 = vrot.slane %v345, 2
        %v657 = vrot.slane %v348, 2
        %v658 = vrot.slane %v351, 2
        %v659 = vrot.slane %v354, 2
        %v660 = vrot.slane %v357, 2
        %v661 = vrot.slane %v360, 2
        %v662 = vrot.slane %v363, 2
        %vm663 = vcmp.lt.s32.totalorder %v503, 6
        %v664 = vsel %vm663, %v643, %v653
        %v665 = vsel %vm663, %v644, %v654
        %v666 = vsel %vm663, %v645, %v655
        %v667 = vsel %vm663, %v646, %v656
        %v668 = vsel %vm663, %v647, %v657
        %v669 = vsel %vm663, %v648, %v658
        %v670 = vsel %vm663, %v649, %v659
        %v671 = vsel %vm663, %v650, %v660
        %v672 = vsel %vm663, %v651, %v661
        %v673 = vsel %vm663, %v652, %v662
        %v674 = vsel %vm663, %v633, %v643
        %v675 = vsel %vm663, %v634, %v644
        %v676 = vsel %vm663, %v635, %v645
        %v677 = vsel %vm663, %v636, %v646
        %v678 = vsel %vm663, %v637, %v647
        %v679 = vsel %vm663, %v638, %v648
        %v680 = vsel %vm663, %v639, %v649
        %v681 = vsel %vm663, %v640, %v650
        %v682 = vsel %vm663, %v641, %v651
        %v683 = vsel %vm663, %v642, %v652
        %v684 = vlaneseq
        %v685 = vshrl.u32 %v684, 7
        %v686 = vsub.s32 2, %v685
        %v687 = vrot.slane %v320, %v686
        %v688 = vmul.f32 %v674, %v687
        %v689 = vmul.f32 %v664, %v687
        %v690 = vmul.f32 %v675, %v687
        %v691 = vmul.f32 %v665, %v687
        %v692 = vmul.f32 %v676, %v687
        %v693 = vmul.f32 %v666, %v687
        %v694 = vmul.f32 %v677, %v687
        %v695 = vmul.f32 %v667, %v687
        %v696 = vmul.f32 %v678, %v687
        %v697 = vmul.f32 %v668, %v687
        %v698 = vmul.f32 %v679, %v687
        %v699 = vmul.f32 %v669, %v687
        %v700 = vmul.f32 %v680, %v687
        %v701 = vmul.f32 %v670, %v687
        %v702 = vmul.f32 %v681, %v687
        %v703 = vmul.f32 %v671, %v687
        %v704 = vadd.f32 %v617, %v688
        %v705 = vadd.f32 %v618, %v689
        %v706 = vadd.f32 %v619, %v690
        %v707 = vadd.f32 %v620, %v691
        %v708 = vadd.f32 %v621, %v692
        %v709 = vadd.f32 %v622, %v693
        %v710 = vadd.f32 %v623, %v694
        %v711 = vadd.f32 %v624, %v695
        %v712 = vadd.f32 %v625, %v696
        %v713 = vadd.f32 %v626, %v697
        %v714 = vadd.f32 %v627, %v698
        %v715 = vadd.f32 %v628, %v699
        %v716 = vadd.f32 %v629, %v700
        %v717 = vadd.f32 %v630, %v701
        %v718 = vadd.f32 %v631, %v702
        %v719 = vadd.f32 %v632, %v703
        %v720 = vlaneseq
        %v721 = vshrl.u32 %v720, 7
        %v722 = vsub.s32 5, %v721
        %v723 = vrot.slane %v320, %v722
        %v724 = vmul.f32 %v675, %v723
        %v725 = vmul.f32 %v665, %v723
        %v726 = vmul.f32 %v676, %v723
        %v727 = vmul.f32 %v666, %v723
        %v728 = vmul.f32 %v677, %v723
        %v729 = vmul.f32 %v667, %v723
        %v730 = vmul.f32 %v678, %v723
        %v731 = vmul.f32 %v668, %v723
        %v732 = vmul.f32 %v679, %v723
        %v733 = vmul.f32 %v669, %v723
        %v734 = vmul.f32 %v680, %v723
        %v735 = vmul.f32 %v670, %v723
        %v736 = vmul.f32 %v681, %v723
        %v737 = vmul.f32 %v671, %v723
        %v738 = vmul.f32 %v682, %v723
        %v739 = vmul.f32 %v672, %v723
        %v740 = vadd.f32 %v704, %v724
        %v741 = vadd.f32 %v705, %v725
        %v742 = vadd.f32 %v706, %v726
        %v743 = vadd.f32 %v707, %v727
        %v744 = vadd.f32 %v708, %v728
        %v745 = vadd.f32 %v709, %v729
        %v746 = vadd.f32 %v710, %v730
        %v747 = vadd.f32 %v711, %v731
        %v748 = vadd.f32 %v712, %v732
        %v749 = vadd.f32 %v713, %v733
        %v750 = vadd.f32 %v714, %v734
        %v751 = vadd.f32 %v715, %v735
        %v752 = vadd.f32 %v716, %v736
        %v753 = vadd.f32 %v717, %v737
        %v754 = vadd.f32 %v718, %v738
        %v755 = vadd.f32 %v719, %v739
        %v756 = vlaneseq
        %v757 = vshrl.u32 %v756, 7
        %v758 = vsub.s32 0, %v757
        %v759 = vrot.slane %v321, %v758
        %v760 = vmul.f32 %v676, %v759
        %v761 = vmul.f32 %v666, %v759
        %v762 = vmul.f32 %v677, %v759
        %v763 = vmul.f32 %v667, %v759
        %v764 = vmul.f32 %v678, %v759
        %v765 = vmul.f32 %v668, %v759
        %v766 = vmul.f32 %v679, %v759
        %v767 = vmul.f32 %v669, %v759
        %v768 = vmul.f32 %v680, %v759
        %v769 = vmul.f32 %v670, %v759
        %v770 = vmul.f32 %v681, %v759
        %v771 = vmul.f32 %v671, %v759
        %v772 = vmul.f32 %v682, %v759
        %v773 = vmul.f32 %v672, %v759
        %v774 = vmul.f32 %v683, %v759
        %v775 = vmul.f32 %v673, %v759
        %v776 = vadd.f32 %v740, %v760
        %v777 = vadd.f32 %v741, %v761
        %v778 = vadd.f32 %v742, %v762
        %v779 = vadd.f32 %v743, %v763
        %v780 = vadd.f32 %v744, %v764
        %v781 = vadd.f32 %v745, %v765
        %v782 = vadd.f32 %v746, %v766
        %v783 = vadd.f32 %v747, %v767
        %v784 = vadd.f32 %v748, %v768
        %v785 = vadd.f32 %v749, %v769
        %v786 = vadd.f32 %v750, %v770
        %v787 = vadd.f32 %v751, %v771
        %v788 = vadd.f32 %v752, %v772
        %v789 = vadd.f32 %v753, %v773
        %v790 = vadd.f32 %v754, %v774
        %v791 = vadd.f32 %v755, %v775
        %v793 = vlaneseq
        %v794 = vshrl.u32 %v793, 7
        %v795 = vsub.s32 0, %v794
        %v796 = vrot.slane %v322, %v795
        %v798 = vadd.f32 %v776, %v796
        %v799 = vadd.f32 %v777, %v796
        %v800 = vadd.f32 %v778, %v796
        %v801 = vadd.f32 %v779, %v796
        %v802 = vadd.f32 %v780, %v796
        %v803 = vadd.f32 %v781, %v796
        %v804 = vadd.f32 %v782, %v796
        %v805 = vadd.f32 %v783, %v796
        %v806 = vadd.f32 %v784, %v796
        %v807 = vadd.f32 %v785, %v796
        %v808 = vadd.f32 %v786, %v796
        %v809 = vadd.f32 %v787, %v796
        %v810 = vadd.f32 %v788, %v796
        %v811 = vadd.f32 %v789, %v796
        %v812 = vadd.f32 %v790, %v796
        %v813 = vadd.f32 %v791, %v796
        %v814 = vmul.f32 %v798, 0.5
        %v815 = vmul.f32 %v799, 0.5
        %v816 = vmul.f32 %v800, 0.5
        %v817 = vmul.f32 %v801, 0.5
        %v818 = vmul.f32 %v802, 0.5
        %v819 = vmul.f32 %v803, 0.5
        %v820 = vmul.f32 %v804, 0.5
        %v821 = vmul.f32 %v805, 0.5
        %v822 = vmul.f32 %v806, 0.5
        %v823 = vmul.f32 %v807, 0.5
        %v824 = vmul.f32 %v808, 0.5
        %v825 = vmul.f32 %v809, 0.5
        %v826 = vmul.f32 %v810, 0.5
        %v827 = vmul.f32 %v811, 0.5
        %v828 = vmul.f32 %v812, 0.5
        %v829 = vmul.f32 %v813, 0.5
        %v830 = vmul.f32 %v798, 0.70710677
        %v831 = vmul.f32 %v799, 0.70710677
        %v832 = vmul.f32 %v800, 0.70710677
        %v833 = vmul.f32 %v801, 0.70710677
        %v834 = vmul.f32 %v802, 0.70710677
        %v835 = vmul.f32 %v803, 0.70710677
        %v836 = vmul.f32 %v804, 0.70710677
        %v837 = vmul.f32 %v805, 0.70710677
        %v838 = vmul.f32 %v806, 0.70710677
        %v839 = vmul.f32 %v807, 0.70710677
        %v840 = vmul.f32 %v808, 0.70710677
        %v841 = vmul.f32 %v809, 0.70710677
        %v842 = vmul.f32 %v810, 0.70710677
        %v843 = vmul.f32 %v811, 0.70710677
        %v844 = vmul.f32 %v812, 0.70710677
        %v845 = vmul.f32 %v813, 0.70710677
        %v846 = verf.f32.pop %v830
        %v847 = verf.f32.pop %v831
        %v848 = verf.f32.pop %v832
        %v849 = verf.f32.pop %v833
        %v850 = verf.f32.pop %v834
        %v851 = verf.f32.pop %v835
        %v852 = verf.f32.pop %v836
        %v853 = verf.f32.pop %v837
        %v854 = verf.f32.pop %v838
        %v855 = verf.f32.pop %v839
        %v856 = verf.f32.pop %v840
        %v857 = verf.f32.pop %v841
        %v858 = verf.f32.pop %v842
        %v859 = verf.f32.pop %v843
        %v860 = verf.f32.pop %v844
        %v861 = verf.f32.pop %v845
        %v862 = vadd.f32 %v846, 1.0
        %v863 = vadd.f32 %v847, 1.0
        %v864 = vadd.f32 %v848, 1.0
        %v865 = vadd.f32 %v849, 1.0
        %v866 = vadd.f32 %v850, 1.0
        %v867 = vadd.f32 %v851, 1.0
        %v868 = vadd.f32 %v852, 1.0
        %v869 = vadd.f32 %v853, 1.0
        %v870 = vadd.f32 %v854, 1.0
        %v871 = vadd.f32 %v855, 1.0
        %v872 = vadd.f32 %v856, 1.0
        %v873 = vadd.f32 %v857, 1.0
        %v874 = vadd.f32 %v858, 1.0
        %v875 = vadd.f32 %v859, 1.0
        %v876 = vadd.f32 %v860, 1.0
        %v877 = vadd.f32 %v861, 1.0
        %v878 = vmul.f32 %v814, %v862
        %v879 = vmul.f32 %v815, %v863
        %v880 = vmul.f32 %v816, %v864
        %v881 = vmul.f32 %v817, %v865
        %v882 = vmul.f32 %v818, %v866
        %v883 = vmul.f32 %v819, %v867
        %v884 = vmul.f32 %v820, %v868
        %v885 = vmul.f32 %v821, %v869
        %v886 = vmul.f32 %v822, %v870
        %v887 = vmul.f32 %v823, %v871
        %v888 = vmul.f32 %v824, %v872
        %v889 = vmul.f32 %v825, %v873
        %v890 = vmul.f32 %v826, %v874
        %v891 = vmul.f32 %v827, %v875
        %v892 = vmul.f32 %v828, %v876
        %v893 = vmul.f32 %v829, %v877
        %s894 = smul.u32 %s331, 16
        %s895 = scalar_lea.vmem %s307, %s894
        %896 = vst [vmem:[%s895] sm:$0xff] %v878
        %897 = vst [vmem:[%s895 + $0x8] sm:$0xff] %v879
        %898 = vst [vmem:[%s895 + $0x10] sm:$0xff] %v880
        %899 = vst [vmem:[%s895 + $0x18] sm:$0xff] %v881
        %900 = vst [vmem:[%s895 + $0x20] sm:$0xff] %v882
        %901 = vst [vmem:[%s895 + $0x28] sm:$0xff] %v883
        %902 = vst [vmem:[%s895 + $0x30] sm:$0xff] %v884
        %903 = vst [vmem:[%s895 + $0x38] sm:$0xff] %v885
        %904 = vst [vmem:[%s895 + $0x40] sm:$0xff] %v886
        %905 = vst [vmem:[%s895 + $0x48] sm:$0xff] %v887
        %906 = vst [vmem:[%s895 + $0x50] sm:$0xff] %v888
        %907 = vst [vmem:[%s895 + $0x58] sm:$0xff] %v889
        %908 = vst [vmem:[%s895 + $0x60] sm:$0xff] %v890
        %909 = vst [vmem:[%s895 + $0x68] sm:$0xff] %v891
        %910 = vst [vmem:[%s895 + $0x70] sm:$0xff] %v892
        %911 = vst [vmem:[%s895 + $0x78] sm:$0xff] %v893
        %v912 = vadd.f32 %v878, %v879
        %v913 = vadd.f32 %v912, %v880
        %v914 = vadd.f32 %v913, %v881
        %v915 = vadd.f32 %v914, %v882
        %v916 = vadd.f32 %v915, %v883
        %v917 = vadd.f32 %v916, %v884
        %v918 = vadd.f32 %v917, %v885
        %v919 = vadd.f32 %v918, %v886
        %v920 = vadd.f32 %v919, %v887
        %v921 = vadd.f32 %v920, %v888
        %v922 = vadd.f32 %v921, %v889
        %v923 = vadd.f32 %v922, %v890
        %v924 = vadd.f32 %v923, %v891
        %v925 = vadd.f32 %v924, %v892
        %v926 = vadd.f32 %v925, %v893
        %v927 = vrot.slane %v926, 4
        %v928 = vadd.f32 %v926, %v927
        %v929 = vrot.slane %v928, 2
        %v930 = vadd.f32 %v928, %v929
        %v931 = vrot.slane %v930, 1
        %v932 = vadd.f32 %v930, %v931
        %v933 = vadd.f32 %v329, %v932
        %v934 = vmul.f32 %v878, %v878
        %v935 = vmul.f32 %v879, %v879
        %v936 = vmul.f32 %v880, %v880
        %v937 = vmul.f32 %v881, %v881
        %v938 = vmul.f32 %v882, %v882
        %v939 = vmul.f32 %v883, %v883
        %v940 = vmul.f32 %v884, %v884
        %v941 = vmul.f32 %v885, %v885
        %v942 = vmul.f32 %v886, %v886
        %v943 = vmul.f32 %v887, %v887
        %v944 = vmul.f32 %v888, %v888
        %v945 = vmul.f32 %v889, %v889
        %v946 = vmul.f32 %v890, %v890
        %v947 = vmul.f32 %v891, %v891
        %v948 = vmul.f32 %v892, %v892
        %v949 = vmul.f32 %v893, %v893
        %v950 = vadd.f32 %v934, %v935
        %v951 = vadd.f32 %v950, %v936
        %v952 = vadd.f32 %v951, %v937
        %v953 = vadd.f32 %v952, %v938
        %v954 = vadd.f32 %v953, %v939
        %v955 = vadd.f32 %v954, %v940
        %v956 = vadd.f32 %v955, %v941
        %v957 = vadd.f32 %v956, %v942
        %v958 = vadd.f32 %v957, %v943
        %v959 = vadd.f32 %v958, %v944
        %v960 = vadd.f32 %v959, %v945
        %v961 = vadd.f32 %v960, %v946
        %v962 = vadd.f32 %v961, %v947
        %v963 = vadd.f32 %v962, %v948
        %v964 = vadd.f32 %v963, %v949
        %v965 = vrot.slane %v964, 4
        %v966 = vadd.f32 %v964, %v965
        %v967 = vrot.slane %v966, 2
        %v968 = vadd.f32 %v966, %v967
        %v969 = vrot.slane %v968, 1
        %v970 = vadd.f32 %v968, %v969
        %v971 = vadd.f32 %v330, %v970
      $region37: #{conv_mixer_layer_nhwc.3} parent=31 // loop_footer
        %s328 = sadd.s32 1, %s324
      $region38: #{conv_mixer_layer_nhwc.3} parent=31 // loop_footer_branch
        %323 = sbr.rel target = $region34
      $region39: #{conv_mixer_layer_nhwc.3} parent=31 // loop_exit
        _
      %972 = vst [vmem:[%s313] sm:$0x1] %v329
      %973 = vst [vmem:[%s319] sm:$0x1] %v330
      %p974 = scmp.lt.s32.totalorder %s21, 1
      %s975 = scalar_select %p974, %s21, 1
      %p976 = scmp.lt.s32.totalorder %s22, 0
      %s977 = scalar_select %p976, %s22, 0
      %s978 = smul.addr %s975, 32
      %s979 = sadd.s32 %s977, %s978
      %s980 = smul.addr %s979, 8
      %s981 = scalar_lea.vmem %s3, %s980
      %p982 = scmp.lt.s32.totalorder %s21, 1
      %s983 = scalar_select %p982, %s21, 1
      %p984 = scmp.lt.s32.totalorder %s22, 0
      %s985 = scalar_select %p984, %s22, 0
      %s986 = sadd.s32 %s985, %s983
      %s987 = scalar_lea.vmem %s4, %s986
      %p988 = scmp.lt.s32.totalorder %s21, 1
      %s989 = scalar_select %p988, %s21, 1
      %p990 = scmp.lt.s32.totalorder %s22, 0
      %s991 = scalar_select %p990, %s22, 0
      %s992 = sadd.s32 %s991, %s989
      %s993 = scalar_lea.vmem %s5, %s992
      // Predicated region
      $region40: #{conv_mixer_layer_nhwc.3} parent=31 // pred_check
        %p994 = pneg %p129
      $region41: #{conv_mixer_layer_nhwc.3} parent=31 // pred_check_branch
        %996 = sbr.rel (%p994) target = $region43
      $region42: #{conv_mixer_layer_nhwc.3} parent=31 // pred_region
        _
      $region43: #{conv_mixer_layer_nhwc.3} parent=31 // pred_fallthru
        _
      // Predicated region
      $region44: #{conv_mixer_layer_nhwc.3} parent=31 // pred_check
        %p997 = pneg %p157
      $region45: #{conv_mixer_layer_nhwc.3} parent=31 // pred_check_branch
        %999 = sbr.rel (%p997) target = $region47
      $region46: #{conv_mixer_layer_nhwc.3} parent=31 // pred_region
        _
      $region47: #{conv_mixer_layer_nhwc.3} parent=31 // pred_fallthru
        _
      // Predicated region
      $region48: #{conv_mixer_layer_nhwc.3} parent=31 // pred_check
        %p1000 = pneg %p185
      $region49: #{conv_mixer_layer_nhwc.3} parent=31 // pred_check_branch
        %1002 = sbr.rel (%p1000) target = $region51
      $region50: #{conv_mixer_layer_nhwc.3} parent=31 // pred_region
        _
      $region51: #{conv_mixer_layer_nhwc.3} parent=31 // pred_fallthru
        _
    $region32: #{conv_mixer_layer_nhwc.3} parent=5 // pred_fallthru
      _
    %p1003 = scmp.le.s32.totalorder 2, %s12
    // Predicated region
    $region52: #{conv_mixer_layer_nhwc.3} parent=5 // pred_check
      %p1004 = pneg %p1003
    $region53: #{conv_mixer_layer_nhwc.3} parent=5 // pred_check_branch
      %1006 = sbr.rel (%p1004) target = $region55
    $region54: #{conv_mixer_layer_nhwc.3} parent=5 // pred_region
      %s1007 = ssub.s32 %s12, 2
      // Predicated region
      $region56: #{conv_mixer_layer_nhwc.3} parent=54 // pred_check
        %p1008 = pneg %p135
      $region57: #{conv_mixer_layer_nhwc.3} parent=54 // pred_check_branch
        %1010 = sbr.rel (%p1008) target = $region59
      $region58: #{conv_mixer_layer_nhwc.3} parent=54 // pred_region
        %p1011 = scmp.lt.s32.totalorder %s23, 1
        %s1012 = scalar_select %p1011, %s23, 1
        %p1013 = scmp.lt.s32.totalorder %s24, 0
        %s1014 = scalar_select %p1013, %s24, 0
        %s1015 = smul.addr %s1012, 32
        %s1016 = sadd.s32 %s1014, %s1015
        %s1017 = smul.addr %s1016, 8
        %s1018 = scalar_lea.vmem %s3, %s1017
      $region59: #{conv_mixer_layer_nhwc.3} parent=54 // pred_fallthru
        _
      // Predicated region
      $region60: #{conv_mixer_layer_nhwc.3} parent=54 // pred_check
        %p1019 = pneg %p163
      $region61: #{conv_mixer_layer_nhwc.3} parent=54 // pred_check_branch
        %1021 = sbr.rel (%p1019) target = $region63
      $region62: #{conv_mixer_layer_nhwc.3} parent=54 // pred_region
        %p1022 = scmp.lt.s32.totalorder %s23, 1
        %s1023 = scalar_select %p1022, %s23, 1
        %p1024 = scmp.lt.s32.totalorder %s24, 0
        %s1025 = scalar_select %p1024, %s24, 0
        %s1026 = sadd.s32 %s1025, %s1023
        %s1027 = scalar_lea.vmem %s4, %s1026
      $region63: #{conv_mixer_layer_nhwc.3} parent=54 // pred_fallthru
        _
      // Predicated region
      $region64: #{conv_mixer_layer_nhwc.3} parent=54 // pred_check
        %p1028 = pneg %p191
      $region65: #{conv_mixer_layer_nhwc.3} parent=54 // pred_check_branch
        %1030 = sbr.rel (%p1028) target = $region67
      $region66: #{conv_mixer_layer_nhwc.3} parent=54 // pred_region
        %p1031 = scmp.lt.s32.totalorder %s23, 1
        %s1032 = scalar_select %p1031, %s23, 1
        %p1033 = scmp.lt.s32.totalorder %s24, 0
        %s1034 = scalar_select %p1033, %s24, 0
        %s1035 = sadd.s32 %s1034, %s1032
        %s1036 = scalar_lea.vmem %s5, %s1035
      $region67: #{conv_mixer_layer_nhwc.3} parent=54 // pred_fallthru
        _
    $region55: #{conv_mixer_layer_nhwc.3} parent=5 // pred_fallthru
      _
  $region6: #{conv_mixer_layer_nhwc.3} parent=0 // loop_footer
    %s16 = sadd.s32 1, %s12
  $region7: #{conv_mixer_layer_nhwc.3} parent=0 // loop_footer_branch
    %11 = sbr.rel target = $region3
  $region8: #{conv_mixer_layer_nhwc.3} parent=0 // loop_exit
    _

// kernel: conv_mixer_layer_nhwc.4
$region0: #{conv_mixer_layer_nhwc.4}
  #allocation0 [shape = 'u32[]', space=smem, size = 0x4, offset = 0x4, fixed_abs, tag = 'smem constant byte address 0x4 - core index']
  #allocation1 [shape = 'u32[144,128]{1,0:T(1,128)}', space=vmem, size = 0x12000, scoped, tag = 'internal scratch']
  %s0 = inlined_call_operand.vmem [shape: f32[512,128], index: 0, kind: input, shape index: {}]
  %s1 = inlined_call_operand.vmem [shape: f32[512,128], index: 1, kind: input, shape index: {}]
  %s2 = inlined_call_operand.vmem [shape: f32[1,128], index: 2, kind: input, shape index: {}]
  %s3 = inlined_call_operand.vmem [shape: f32[1,128], index: 3, kind: input, shape index: {}]
  %s4 = inlined_call_operand.vmem [shape: f32[128,128], index: 4, kind: input, shape index: {}]
  %s5 = inlined_call_operand.vmem [shape: f32[1,128], index: 5, kind: input, shape index: {}]
  %s6 = inlined_call_operand.vmem [shape: f32[512,128], index: 6, kind: output, shape index: {0}]
  %s7 = inlined_call_operand.vmem [shape: f32[512,128], index: 7, kind: output, shape index: {1}]
  %s8 = inlined_call_operand.vmem [shape: f32[1,1,128], index: 8, kind: output, shape index: {2}]
  %s9 = inlined_call_operand.vmem [shape: f32[1,1,128], index: 9, kind: output, shape index: {3}]
  %10 = xla_tuple %s6, %s7, %s8, %s9
  %s11 = sld [smem:[#allocation0]]
  $region58: #{conv_mixer_layer_nhwc.4} parent=0
    _
  %s13 = ssub.s32 1, %s11
  %s14 = scalar_select 0, %s13, %s11
  // Predicated region
  $region2: #{conv_mixer_layer_nhwc.4} parent=0 // pred_check
    _
  $region3: #{conv_mixer_layer_nhwc.4} parent=0 // pred_check_branch
    %16 = sbr.rel (0) target = $region5
  $region4: #{conv_mixer_layer_nhwc.4} parent=0 // pred_region
    _
  $region5: #{conv_mixer_layer_nhwc.4} parent=0 // pred_fallthru
    _
  // Predicated region
  $region6: #{conv_mixer_layer_nhwc.4} parent=0 // pred_check
    _
  $region7: #{conv_mixer_layer_nhwc.4} parent=0 // pred_check_branch
    %18 = sbr.rel (0) target = $region9
  $region8: #{conv_mixer_layer_nhwc.4} parent=0 // pred_region
    _
  $region9: #{conv_mixer_layer_nhwc.4} parent=0 // pred_fallthru
    _
  // Predicated region
  $region10: #{conv_mixer_layer_nhwc.4} parent=0 // pred_check
    _
  $region11: #{conv_mixer_layer_nhwc.4} parent=0 // pred_check_branch
    %20 = sbr.rel (0) target = $region13
  $region12: #{conv_mixer_layer_nhwc.4} parent=0 // pred_region
    _
  $region13: #{conv_mixer_layer_nhwc.4} parent=0 // pred_fallthru
    _
  // Predicated region
  $region14: #{conv_mixer_layer_nhwc.4} parent=0 // pred_check
    _
  $region15: #{conv_mixer_layer_nhwc.4} parent=0 // pred_check_branch
    %22 = sbr.rel (0) target = $region17
  $region16: #{conv_mixer_layer_nhwc.4} parent=0 // pred_region
    _
  $region17: #{conv_mixer_layer_nhwc.4} parent=0 // pred_fallthru
    _
  // Predicated region
  $region18: #{conv_mixer_layer_nhwc.4} parent=0 // pred_check
    _
  $region19: #{conv_mixer_layer_nhwc.4} parent=0 // pred_check_branch
    %24 = sbr.rel (0) target = $region21
  $region20: #{conv_mixer_layer_nhwc.4} parent=0 // pred_region
    _
  $region21: #{conv_mixer_layer_nhwc.4} parent=0 // pred_fallthru
    _
  // Predicated region
  $region22: #{conv_mixer_layer_nhwc.4} parent=0 // pred_check
    _
  $region23: #{conv_mixer_layer_nhwc.4} parent=0 // pred_check_branch
    %26 = sbr.rel (0) target = $region25
  $region24: #{conv_mixer_layer_nhwc.4} parent=0 // pred_region
    _
  $region25: #{conv_mixer_layer_nhwc.4} parent=0 // pred_fallthru
    _
  %v27 = vld [vmem:[%s0] sm:$0xff]
  %v28 = vld [vmem:[%s0 + $0x8] sm:$0xff]
  %v29 = vld [vmem:[%s0 + $0x10] sm:$0xff]
  %v30 = vld [vmem:[%s0 + $0x18] sm:$0xff]
  %v31 = vld [vmem:[%s0 + $0x20] sm:$0xff]
  %v32 = vld [vmem:[%s0 + $0x28] sm:$0xff]
  %v33 = vld [vmem:[%s0 + $0x30] sm:$0xff]
  %v34 = vld [vmem:[%s0 + $0x38] sm:$0xff]
  %v35 = vld [vmem:[%s0 + $0x40] sm:$0xff]
  %v36 = vld [vmem:[%s0 + $0x48] sm:$0xff]
  %v37 = vld [vmem:[%s0 + $0x50] sm:$0xff]
  %v38 = vld [vmem:[%s0 + $0x58] sm:$0xff]
  %v39 = vld [vmem:[%s0 + $0x60] sm:$0xff]
  %v40 = vld [vmem:[%s0 + $0x68] sm:$0xff]
  %v41 = vld [vmem:[%s0 + $0x70] sm:$0xff]
  %v42 = vld [vmem:[%s0 + $0x78] sm:$0xff]
  %v43 = vld [vmem:[%s0 + $0x80] sm:$0xff]
  %v44 = vld [vmem:[%s0 + $0x88] sm:$0xff]
  %v45 = vld [vmem:[%s0 + $0x90] sm:$0xff]
  %v46 = vld [vmem:[%s0 + $0x98] sm:$0xff]
  %v47 = vld [vmem:[%s0 + $0xa0] sm:$0xff]
  %v48 = vld [vmem:[%s0 + $0xa8] sm:$0xff]
  %v49 = vld [vmem:[%s0 + $0xb0] sm:$0xff]
  %v50 = vld [vmem:[%s0 + $0xb8] sm:$0xff]
  %v51 = vld [vmem:[%s0 + $0xc0] sm:$0xff]
  %v52 = vld [vmem:[%s0 + $0xc8] sm:$0xff]
  %v53 = vld [vmem:[%s0 + $0xd0] sm:$0xff]
  %v54 = vld [vmem:[%s0 + $0xd8] sm:$0xff]
  %v55 = vld [vmem:[%s0 + $0xe0] sm:$0xff]
  %v56 = vld [vmem:[%s0 + $0xe8] sm:$0xff]
  %v57 = vld [vmem:[%s0 + $0xf0] sm:$0xff]
  %v58 = vld [vmem:[%s0 + $0xf8] sm:$0xff]
  %v59 = vld [vmem:[%s0 + $0x100] sm:$0xff]
  %v60 = vld [vmem:[%s0 + $0x108] sm:$0xff]
  %v61 = vld [vmem:[%s0 + $0x110] sm:$0xff]
  %v62 = vld [vmem:[%s0 + $0x118] sm:$0xff]
  %v63 = vld [vmem:[%s0 + $0x120] sm:$0xff]
  %v64 = vld [vmem:[%s0 + $0x128] sm:$0xff]
  %v65 = vld [vmem:[%s0 + $0x130] sm:$0xff]
  %v66 = vld [vmem:[%s0 + $0x138] sm:$0xff]
  %v67 = vld [vmem:[%s0 + $0x140] sm:$0xff]
  %v68 = vld [vmem:[%s0 + $0x148] sm:$0xff]
  %v69 = vld [vmem:[%s0 + $0x150] sm:$0xff]
  %v70 = vld [vmem:[%s0 + $0x158] sm:$0xff]
  %v71 = vld [vmem:[%s0 + $0x160] sm:$0xff]
  %v72 = vld [vmem:[%s0 + $0x168] sm:$0xff]
  %v73 = vld [vmem:[%s0 + $0x170] sm:$0xff]
  %v74 = vld [vmem:[%s0 + $0x178] sm:$0xff]
  %v75 = vld [vmem:[%s0 + $0x180] sm:$0xff]
  %v76 = vld [vmem:[%s0 + $0x188] sm:$0xff]
  %v77 = vld [vmem:[%s0 + $0x190] sm:$0xff]
  %v78 = vld [vmem:[%s0 + $0x198] sm:$0xff]
  %v79 = vld [vmem:[%s0 + $0x1a0] sm:$0xff]
  %v80 = vld [vmem:[%s0 + $0x1a8] sm:$0xff]
  %v81 = vld [vmem:[%s0 + $0x1b0] sm:$0xff]
  %v82 = vld [vmem:[%s0 + $0x1b8] sm:$0xff]
  %v83 = vld [vmem:[%s0 + $0x1c0] sm:$0xff]
  %v84 = vld [vmem:[%s0 + $0x1c8] sm:$0xff]
  %v85 = vld [vmem:[%s0 + $0x1d0] sm:$0xff]
  %v86 = vld [vmem:[%s0 + $0x1d8] sm:$0xff]
  %v87 = vld [vmem:[%s0 + $0x1e0] sm:$0xff]
  %v88 = vld [vmem:[%s0 + $0x1e8] sm:$0xff]
  %v89 = vld [vmem:[%s0 + $0x1f0] sm:$0xff]
  %v90 = vld [vmem:[%s0 + $0x1f8] sm:$0xff]
  %v91 = vld [vmem:[%s2] sm:$0x1]
  %v93 = vlaneseq
  %v94 = vshrl.u32 %v93, 7
  %v95 = vsub.s32 0, %v94
  %v96 = vrot.slane %v91, %v95
  %v98 = vmul.f32 %v27, %v96
  %v99 = vmul.f32 %v28, %v96
  %v100 = vmul.f32 %v29, %v96
  %v101 = vmul.f32 %v30, %v96
  %v102 = vmul.f32 %v31, %v96
  %v103 = vmul.f32 %v32, %v96
  %v104 = vmul.f32 %v33, %v96
  %v105 = vmul.f32 %v34, %v96
  %v106 = vmul.f32 %v35, %v96
  %v107 = vmul.f32 %v36, %v96
  %v108 = vmul.f32 %v37, %v96
  %v109 = vmul.f32 %v38, %v96
  %v110 = vmul.f32 %v39, %v96
  %v111 = vmul.f32 %v40, %v96
  %v112 = vmul.f32 %v41, %v96
  %v113 = vmul.f32 %v42, %v96
  %v114 = vmul.f32 %v43, %v96
  %v115 = vmul.f32 %v44, %v96
  %v116 = vmul.f32 %v45, %v96
  %v117 = vmul.f32 %v46, %v96
  %v118 = vmul.f32 %v47, %v96
  %v119 = vmul.f32 %v48, %v96
  %v120 = vmul.f32 %v49, %v96
  %v121 = vmul.f32 %v50, %v96
  %v122 = vmul.f32 %v51, %v96
  %v123 = vmul.f32 %v52, %v96
  %v124 = vmul.f32 %v53, %v96
  %v125 = vmul.f32 %v54, %v96
  %v126 = vmul.f32 %v55, %v96
  %v127 = vmul.f32 %v56, %v96
  %v128 = vmul.f32 %v57, %v96
  %v129 = vmul.f32 %v58, %v96
  %v130 = vmul.f32 %v59, %v96
  %v131 = vmul.f32 %v60, %v96
  %v132 = vmul.f32 %v61, %v96
  %v133 = vmul.f32 %v62, %v96
  %v134 = vmul.f32 %v63, %v96
  %v135 = vmul.f32 %v64, %v96
  %v136 = vmul.f32 %v65, %v96
  %v137 = vmul.f32 %v66, %v96
  %v138 = vmul.f32 %v67, %v96
  %v139 = vmul.f32 %v68, %v96
  %v140 = vmul.f32 %v69, %v96
  %v141 = vmul.f32 %v70, %v96
  %v142 = vmul.f32 %v71, %v96
  %v143 = vmul.f32 %v72, %v96
  %v144 = vmul.f32 %v73, %v96
  %v145 = vmul.f32 %v74, %v96
  %v146 = vmul.f32 %v75, %v96
  %v147 = vmul.f32 %v76, %v96
  %v148 = vmul.f32 %v77, %v96
  %v149 = vmul.f32 %v78, %v96
  %v150 = vmul.f32 %v79, %v96
  %v151 = vmul.f32 %v80, %v96
  %v152 = vmul.f32 %v81, %v96
  %v153 = vmul.f32 %v82, %v96
  %v154 = vmul.f32 %v83, %v96
  %v155 = vmul.f32 %v84, %v96
  %v156 = vmul.f32 %v85, %v96
  %v157 = vmul.f32 %v86, %v96
  %v158 = vmul.f32 %v87, %v96
  %v159 = vmul.f32 %v88, %v96
  %v160 = vmul.f32 %v89, %v96
  %v161 = vmul.f32 %v90, %v96
  %v162 = vld [vmem:[%s3] sm:$0x1]
  %v164 = vlaneseq
  %v165 = vshrl.u32 %v164, 7
  %v166 = vsub.s32 0, %v165
  %v167 = vrot.slane %v162, %v166
  %v169 = vadd.f32 %v98, %v167
  %v170 = vadd.f32 %v99, %v167
  %v171 = vadd.f32 %v100, %v167
  %v172 = vadd.f32 %v101, %v167
  %v173 = vadd.f32 %v102, %v167
  %v174 = vadd.f32 %v103, %v167
  %v175 = vadd.f32 %v104, %v167
  %v176 = vadd.f32 %v105, %v167
  %v177 = vadd.f32 %v106, %v167
  %v178 = vadd.f32 %v107, %v167
  %v179 = vadd.f32 %v108, %v167
  %v180 = vadd.f32 %v109, %v167
  %v181 = vadd.f32 %v110, %v167
  %v182 = vadd.f32 %v111, %v167
  %v183 = vadd.f32 %v112, %v167
  %v184 = vadd.f32 %v113, %v167
  %v185 = vadd.f32 %v114, %v167
  %v186 = vadd.f32 %v115, %v167
  %v187 = vadd.f32 %v116, %v167
  %v188 = vadd.f32 %v117, %v167
  %v189 = vadd.f32 %v118, %v167
  %v190 = vadd.f32 %v119, %v167
  %v191 = vadd.f32 %v120, %v167
  %v192 = vadd.f32 %v121, %v167
  %v193 = vadd.f32 %v122, %v167
  %v194 = vadd.f32 %v123, %v167
  %v195 = vadd.f32 %v124, %v167
  %v196 = vadd.f32 %v125, %v167
  %v197 = vadd.f32 %v126, %v167
  %v198 = vadd.f32 %v127, %v167
  %v199 = vadd.f32 %v128, %v167
  %v200 = vadd.f32 %v129, %v167
  %v201 = vadd.f32 %v130, %v167
  %v202 = vadd.f32 %v131, %v167
  %v203 = vadd.f32 %v132, %v167
  %v204 = vadd.f32 %v133, %v167
  %v205 = vadd.f32 %v134, %v167
  %v206 = vadd.f32 %v135, %v167
  %v207 = vadd.f32 %v136, %v167
  %v208 = vadd.f32 %v137, %v167
  %v209 = vadd.f32 %v138, %v167
  %v210 = vadd.f32 %v139, %v167
  %v211 = vadd.f32 %v140, %v167
  %v212 = vadd.f32 %v141, %v167
  %v213 = vadd.f32 %v142, %v167
  %v214 = vadd.f32 %v143, %v167
  %v215 = vadd.f32 %v144, %v167
  %v216 = vadd.f32 %v145, %v167
  %v217 = vadd.f32 %v146, %v167
  %v218 = vadd.f32 %v147, %v167
  %v219 = vadd.f32 %v148, %v167
  %v220 = vadd.f32 %v149, %v167
  %v221 = vadd.f32 %v150, %v167
  %v222 = vadd.f32 %v151, %v167
  %v223 = vadd.f32 %v152, %v167
  %v224 = vadd.f32 %v153, %v167
  %v225 = vadd.f32 %v154, %v167
  %v226 = vadd.f32 %v155, %v167
  %v227 = vadd.f32 %v156, %v167
  %v228 = vadd.f32 %v157, %v167
  %v229 = vadd.f32 %v158, %v167
  %v230 = vadd.f32 %v159, %v167
  %v231 = vadd.f32 %v160, %v167
  %v232 = vadd.f32 %v161, %v167
  %v233 = vld [vmem:[%s1] sm:$0xff]
  %v234 = vld [vmem:[%s1 + $0x8] sm:$0xff]
  %v235 = vld [vmem:[%s1 + $0x10] sm:$0xff]
  %v236 = vld [vmem:[%s1 + $0x18] sm:$0xff]
  %v237 = vld [vmem:[%s1 + $0x20] sm:$0xff]
  %v238 = vld [vmem:[%s1 + $0x28] sm:$0xff]
  %v239 = vld [vmem:[%s1 + $0x30] sm:$0xff]
  %v240 = vld [vmem:[%s1 + $0x38] sm:$0xff]
  %v241 = vld [vmem:[%s1 + $0x40] sm:$0xff]
  %v242 = vld [vmem:[%s1 + $0x48] sm:$0xff]
  %v243 = vld [vmem:[%s1 + $0x50] sm:$0xff]
  %v244 = vld [vmem:[%s1 + $0x58] sm:$0xff]
  %v245 = vld [vmem:[%s1 + $0x60] sm:$0xff]
  %v246 = vld [vmem:[%s1 + $0x68] sm:$0xff]
  %v247 = vld [vmem:[%s1 + $0x70] sm:$0xff]
  %v248 = vld [vmem:[%s1 + $0x78] sm:$0xff]
  %v249 = vld [vmem:[%s1 + $0x80] sm:$0xff]
  %v250 = vld [vmem:[%s1 + $0x88] sm:$0xff]
  %v251 = vld [vmem:[%s1 + $0x90] sm:$0xff]
  %v252 = vld [vmem:[%s1 + $0x98] sm:$0xff]
  %v253 = vld [vmem:[%s1 + $0xa0] sm:$0xff]
  %v254 = vld [vmem:[%s1 + $0xa8] sm:$0xff]
  %v255 = vld [vmem:[%s1 + $0xb0] sm:$0xff]
  %v256 = vld [vmem:[%s1 + $0xb8] sm:$0xff]
  %v257 = vld [vmem:[%s1 + $0xc0] sm:$0xff]
  %v258 = vld [vmem:[%s1 + $0xc8] sm:$0xff]
  %v259 = vld [vmem:[%s1 + $0xd0] sm:$0xff]
  %v260 = vld [vmem:[%s1 + $0xd8] sm:$0xff]
  %v261 = vld [vmem:[%s1 + $0xe0] sm:$0xff]
  %v262 = vld [vmem:[%s1 + $0xe8] sm:$0xff]
  %v263 = vld [vmem:[%s1 + $0xf0] sm:$0xff]
  %v264 = vld [vmem:[%s1 + $0xf8] sm:$0xff]
  %v265 = vld [vmem:[%s1 + $0x100] sm:$0xff]
  %v266 = vld [vmem:[%s1 + $0x108] sm:$0xff]
  %v267 = vld [vmem:[%s1 + $0x110] sm:$0xff]
  %v268 = vld [vmem:[%s1 + $0x118] sm:$0xff]
  %v269 = vld [vmem:[%s1 + $0x120] sm:$0xff]
  %v270 = vld [vmem:[%s1 + $0x128] sm:$0xff]
  %v271 = vld [vmem:[%s1 + $0x130] sm:$0xff]
  %v272 = vld [vmem:[%s1 + $0x138] sm:$0xff]
  %v273 = vld [vmem:[%s1 + $0x140] sm:$0xff]
  %v274 = vld [vmem:[%s1 + $0x148] sm:$0xff]
  %v275 = vld [vmem:[%s1 + $0x150] sm:$0xff]
  %v276 = vld [vmem:[%s1 + $0x158] sm:$0xff]
  %v277 = vld [vmem:[%s1 + $0x160] sm:$0xff]
  %v278 = vld [vmem:[%s1 + $0x168] sm:$0xff]
  %v279 = vld [vmem:[%s1 + $0x170] sm:$0xff]
  %v280 = vld [vmem:[%s1 + $0x178] sm:$0xff]
  %v281 = vld [vmem:[%s1 + $0x180] sm:$0xff]
  %v282 = vld [vmem:[%s1 + $0x188] sm:$0xff]
  %v283 = vld [vmem:[%s1 + $0x190] sm:$0xff]
  %v284 = vld [vmem:[%s1 + $0x198] sm:$0xff]
  %v285 = vld [vmem:[%s1 + $0x1a0] sm:$0xff]
  %v286 = vld [vmem:[%s1 + $0x1a8] sm:$0xff]
  %v287 = vld [vmem:[%s1 + $0x1b0] sm:$0xff]
  %v288 = vld [vmem:[%s1 + $0x1b8] sm:$0xff]
  %v289 = vld [vmem:[%s1 + $0x1c0] sm:$0xff]
  %v290 = vld [vmem:[%s1 + $0x1c8] sm:$0xff]
  %v291 = vld [vmem:[%s1 + $0x1d0] sm:$0xff]
  %v292 = vld [vmem:[%s1 + $0x1d8] sm:$0xff]
  %v293 = vld [vmem:[%s1 + $0x1e0] sm:$0xff]
  %v294 = vld [vmem:[%s1 + $0x1e8] sm:$0xff]
  %v295 = vld [vmem:[%s1 + $0x1f0] sm:$0xff]
  %v296 = vld [vmem:[%s1 + $0x1f8] sm:$0xff]
  %v297 = vadd.f32 %v169, %v233
  %v298 = vadd.f32 %v170, %v234
  %v299 = vadd.f32 %v171, %v235
  %v300 = vadd.f32 %v172, %v236
  %v301 = vadd.f32 %v173, %v237
  %v302 = vadd.f32 %v174, %v238
  %v303 = vadd.f32 %v175, %v239
  %v304 = vadd.f32 %v176, %v240
  %v305 = vadd.f32 %v177, %v241
  %v306 = vadd.f32 %v178, %v242
  %v307 = vadd.f32 %v179, %v243
  %v308 = vadd.f32 %v180, %v244
  %v309 = vadd.f32 %v181, %v245
  %v310 = vadd.f32 %v182, %v246
  %v311 = vadd.f32 %v183, %v247
  %v312 = vadd.f32 %v184, %v248
  %v313 = vadd.f32 %v185, %v249
  %v314 = vadd.f32 %v186, %v250
  %v315 = vadd.f32 %v187, %v251
  %v316 = vadd.f32 %v188, %v252
  %v317 = vadd.f32 %v189, %v253
  %v318 = vadd.f32 %v190, %v254
  %v319 = vadd.f32 %v191, %v255
  %v320 = vadd.f32 %v192, %v256
  %v321 = vadd.f32 %v193, %v257
  %v322 = vadd.f32 %v194, %v258
  %v323 = vadd.f32 %v195, %v259
  %v324 = vadd.f32 %v196, %v260
  %v325 = vadd.f32 %v197, %v261
  %v326 = vadd.f32 %v198, %v262
  %v327 = vadd.f32 %v199, %v263
  %v328 = vadd.f32 %v200, %v264
  %v329 = vadd.f32 %v201, %v265
  %v330 = vadd.f32 %v202, %v266
  %v331 = vadd.f32 %v203, %v267
  %v332 = vadd.f32 %v204, %v268
  %v333 = vadd.f32 %v205, %v269
  %v334 = vadd.f32 %v206, %v270
  %v335 = vadd.f32 %v207, %v271
  %v336 = vadd.f32 %v208, %v272
  %v337 = vadd.f32 %v209, %v273
  %v338 = vadd.f32 %v210, %v274
  %v339 = vadd.f32 %v211, %v275
  %v340 = vadd.f32 %v212, %v276
  %v341 = vadd.f32 %v213, %v277
  %v342 = vadd.f32 %v214, %v278
  %v343 = vadd.f32 %v215, %v279
  %v344 = vadd.f32 %v216, %v280
  %v345 = vadd.f32 %v217, %v281
  %v346 = vadd.f32 %v218, %v282
  %v347 = vadd.f32 %v219, %v283
  %v348 = vadd.f32 %v220, %v284
  %v349 = vadd.f32 %v221, %v285
  %v350 = vadd.f32 %v222, %v286
  %v351 = vadd.f32 %v223, %v287
  %v352 = vadd.f32 %v224, %v288
  %v353 = vadd.f32 %v225, %v289
  %v354 = vadd.f32 %v226, %v290
  %v355 = vadd.f32 %v227, %v291
  %v356 = vadd.f32 %v228, %v292
  %v357 = vadd.f32 %v229, %v293
  %v358 = vadd.f32 %v230, %v294
  %v359 = vadd.f32 %v231, %v295
  %v360 = vadd.f32 %v232, %v296
  %361 = vst [vmem:[%s6] sm:$0xff] %v297
  %362 = vst [vmem:[%s6 + $0x8] sm:$0xff] %v298
  %363 = vst [vmem:[%s6 + $0x10] sm:$0xff] %v299
  %364 = vst [vmem:[%s6 + $0x18] sm:$0xff] %v300
  %365 = vst [vmem:[%s6 + $0x20] sm:$0xff] %v301
  %366 = vst [vmem:[%s6 + $0x28] sm:$0xff] %v302
  %367 = vst [vmem:[%s6 + $0x30] sm:$0xff] %v303
  %368 = vst [vmem:[%s6 + $0x38] sm:$0xff] %v304
  %369 = vst [vmem:[%s6 + $0x40] sm:$0xff] %v305
  %370 = vst [vmem:[%s6 + $0x48] sm:$0xff] %v306
  %371 = vst [vmem:[%s6 + $0x50] sm:$0xff] %v307
  %372 = vst [vmem:[%s6 + $0x58] sm:$0xff] %v308
  %373 = vst [vmem:[%s6 + $0x60] sm:$0xff] %v309
  %374 = vst [vmem:[%s6 + $0x68] sm:$0xff] %v310
  %375 = vst [vmem:[%s6 + $0x70] sm:$0xff] %v311
  %376 = vst [vmem:[%s6 + $0x78] sm:$0xff] %v312
  %377 = vst [vmem:[%s6 + $0x80] sm:$0xff] %v313
  %378 = vst [vmem:[%s6 + $0x88] sm:$0xff] %v314
  %379 = vst [vmem:[%s6 + $0x90] sm:$0xff] %v315
  %380 = vst [vmem:[%s6 + $0x98] sm:$0xff] %v316
  %381 = vst [vmem:[%s6 + $0xa0] sm:$0xff] %v317
  %382 = vst [vmem:[%s6 + $0xa8] sm:$0xff] %v318
  %383 = vst [vmem:[%s6 + $0xb0] sm:$0xff] %v319
  %384 = vst [vmem:[%s6 + $0xb8] sm:$0xff] %v320
  %385 = vst [vmem:[%s6 + $0xc0] sm:$0xff] %v321
  %386 = vst [vmem:[%s6 + $0xc8] sm:$0xff] %v322
  %387 = vst [vmem:[%s6 + $0xd0] sm:$0xff] %v323
  %388 = vst [vmem:[%s6 + $0xd8] sm:$0xff] %v324
  %389 = vst [vmem:[%s6 + $0xe0] sm:$0xff] %v325
  %390 = vst [vmem:[%s6 + $0xe8] sm:$0xff] %v326
  %391 = vst [vmem:[%s6 + $0xf0] sm:$0xff] %v327
  %392 = vst [vmem:[%s6 + $0xf8] sm:$0xff] %v328
  %393 = vst [vmem:[%s6 + $0x100] sm:$0xff] %v329
  %394 = vst [vmem:[%s6 + $0x108] sm:$0xff] %v330
  %395 = vst [vmem:[%s6 + $0x110] sm:$0xff] %v331
  %396 = vst [vmem:[%s6 + $0x118] sm:$0xff] %v332
  %397 = vst [vmem:[%s6 + $0x120] sm:$0xff] %v333
  %398 = vst [vmem:[%s6 + $0x128] sm:$0xff] %v334
  %399 = vst [vmem:[%s6 + $0x130] sm:$0xff] %v335
  %400 = vst [vmem:[%s6 + $0x138] sm:$0xff] %v336
  %401 = vst [vmem:[%s6 + $0x140] sm:$0xff] %v337
  %402 = vst [vmem:[%s6 + $0x148] sm:$0xff] %v338
  %403 = vst [vmem:[%s6 + $0x150] sm:$0xff] %v339
  %404 = vst [vmem:[%s6 + $0x158] sm:$0xff] %v340
  %405 = vst [vmem:[%s6 + $0x160] sm:$0xff] %v341
  %406 = vst [vmem:[%s6 + $0x168] sm:$0xff] %v342
  %407 = vst [vmem:[%s6 + $0x170] sm:$0xff] %v343
  %408 = vst [vmem:[%s6 + $0x178] sm:$0xff] %v344
  %409 = vst [vmem:[%s6 + $0x180] sm:$0xff] %v345
  %410 = vst [vmem:[%s6 + $0x188] sm:$0xff] %v346
  %411 = vst [vmem:[%s6 + $0x190] sm:$0xff] %v347
  %412 = vst [vmem:[%s6 + $0x198] sm:$0xff] %v348
  %413 = vst [vmem:[%s6 + $0x1a0] sm:$0xff] %v349
  %414 = vst [vmem:[%s6 + $0x1a8] sm:$0xff] %v350
  %415 = vst [vmem:[%s6 + $0x1b0] sm:$0xff] %v351
  %416 = vst [vmem:[%s6 + $0x1b8] sm:$0xff] %v352
  %417 = vst [vmem:[%s6 + $0x1c0] sm:$0xff] %v353
  %418 = vst [vmem:[%s6 + $0x1c8] sm:$0xff] %v354
  %419 = vst [vmem:[%s6 + $0x1d0] sm:$0xff] %v355
  %420 = vst [vmem:[%s6 + $0x1d8] sm:$0xff] %v356
  %421 = vst [vmem:[%s6 + $0x1e0] sm:$0xff] %v357
  %422 = vst [vmem:[%s6 + $0x1e8] sm:$0xff] %v358
  %423 = vst [vmem:[%s6 + $0x1f0] sm:$0xff] %v359
  %424 = vst [vmem:[%s6 + $0x1f8] sm:$0xff] %v360
  %v425 = vld [vmem:[%s4] sm:$0xff]
  %v426 = vld [vmem:[%s4 + $0x8] sm:$0xff]
  %v427 = vld [vmem:[%s4 + $0x10] sm:$0xff]
  %v428 = vld [vmem:[%s4 + $0x18] sm:$0xff]
  %v429 = vld [vmem:[%s4 + $0x20] sm:$0xff]
  %v430 = vld [vmem:[%s4 + $0x28] sm:$0xff]
  %v431 = vld [vmem:[%s4 + $0x30] sm:$0xff]
  %v432 = vld [vmem:[%s4 + $0x38] sm:$0xff]
  %v433 = vld [vmem:[%s4 + $0x40] sm:$0xff]
  %v434 = vld [vmem:[%s4 + $0x48] sm:$0xff]
  %v435 = vld [vmem:[%s4 + $0x50] sm:$0xff]
  %v436 = vld [vmem:[%s4 + $0x58] sm:$0xff]
  %v437 = vld [vmem:[%s4 + $0x60] sm:$0xff]
  %v438 = vld [vmem:[%s4 + $0x68] sm:$0xff]
  %v439 = vld [vmem:[%s4 + $0x70] sm:$0xff]
  %v440 = vld [vmem:[%s4 + $0x78] sm:$0xff]
  %v441 = vld [vmem:[%s5] sm:$0x1]
  %v443 = vlaneseq
  %v444 = vshrl.u32 %v443, 7
  %v445 = vsub.s32 0, %v444
  %v446 = vrot.slane %v441, %v445
  %448 = vmatprep.subr.mxu0 0.0
  %449 = vmatpush1.msra.mxu0 %v440
  %450 = vmatprep.subr.mxu0 0.0
  %451 = vmatpush1.msra.mxu0 %v439
  %452 = vmatprep.subr.mxu0 0.0
  %453 = vmatpush1.msra.mxu0 %v438
  %454 = vmatprep.subr.mxu0 0.0
  %455 = vmatpush1.msra.mxu0 %v437
  %456 = vmatprep.subr.mxu0 0.0
  %457 = vmatpush1.msra.mxu0 %v436
  %458 = vmatprep.subr.mxu0 0.0
  %459 = vmatpush1.msra.mxu0 %v435
  %460 = vmatprep.subr.mxu0 0.0
  %461 = vmatpush1.msra.mxu0 %v434
  %462 = vmatprep.subr.mxu0 0.0
  %463 = vmatpush1.msra.mxu0 %v433
  %464 = vmatprep.subr.mxu0 0.0
  %465 = vmatpush1.msra.mxu0 %v432
  %466 = vmatprep.subr.mxu0 0.0
  %467 = vmatpush1.msra.mxu0 %v431
  %468 = vmatprep.subr.mxu0 0.0
  %469 = vmatpush1.msra.mxu0 %v430
  %470 = vmatprep.subr.mxu0 0.0
  %471 = vmatpush1.msra.mxu0 %v429
  %472 = vmatprep.subr.mxu0 0.0
  %473 = vmatpush1.msra.mxu0 %v428
  %474 = vmatprep.subr.mxu0 0.0
  %475 = vmatpush1.msra.mxu0 %v427
  %476 = vmatprep.subr.mxu0 0.0
  %477 = vmatpush1.msra.mxu0 %v426
  %478 = vmatprep.subr.mxu0 0.0
  %479 = vmatpush1.msra.mxu0 %v425
  %480 = vmatprep.subr.mxu0 0.0
  %481 = vmatpush2.msra.mxu0 0.0
  %482 = vmatprep.subr.mxu0 0.0
  %483 = vmatpush2.msra.mxu0 0.0
  %484 = vmatprep.subr.mxu0 0.0
  %485 = vmatpush2.msra.mxu0 0.0
  %486 = vmatprep.subr.mxu0 0.0
  %487 = vmatpush2.msra.mxu0 0.0
  %488 = vmatprep.subr.mxu0 0.0
  %489 = vmatpush2.msra.mxu0 0.0
  %490 = vmatprep.subr.mxu0 0.0
  %491 = vmatpush2.msra.mxu0 0.0
  %492 = vmatprep.subr.mxu0 0.0
  %493 = vmatpush2.msra.mxu0 0.0
  %494 = vmatprep.subr.mxu0 0.0
  %495 = vmatpush2.msra.mxu0 0.0
  %496 = vmatprep.subr.mxu0 0.0
  %497 = vmatpush2.msra.mxu0 0.0
  %498 = vmatprep.subr.mxu0 0.0
  %499 = vmatpush2.msra.mxu0 0.0
  %500 = vmatprep.subr.mxu0 0.0
  %501 = vmatpush2.msra.mxu0 0.0
  %502 = vmatprep.subr.mxu0 0.0
  %503 = vmatpush2.msra.mxu0 0.0
  %504 = vmatprep.subr.mxu0 0.0
  %505 = vmatpush2.msra.mxu0 0.0
  %506 = vmatprep.subr.mxu0 0.0
  %507 = vmatpush2.msra.mxu0 0.0
  %508 = vmatprep.subr.mxu0 0.0
  %509 = vmatpush2.msra.mxu0 0.0
  %510 = vmatprep.subr.mxu0 0.0
  %511 = vmatpush2.msra.mxu0 0.0
  %512 = vmatprep.mubr.f32.mxu0 0.0
  %513 = vmatmul.mubr.f32.gmra.mxu0 %v297
  %v514 = vpop.f32.mrf.mxu0
  %v515 = vadd.f32 %v446, %v514
  %v516 = vpop.f32.mrf.mxu0
  %517 = vmatprep.mubr.f32.mxu0 0.0
  %518 = vmatmul.mubr.f32.gmra.mxu0 %v298
  %v519 = vpop.f32.mrf.mxu0
  %v520 = vadd.f32 %v446, %v519
  %v521 = vpop.f32.mrf.mxu0
  %522 = vmatprep.mubr.f32.mxu0 0.0
  %523 = vmatmul.mubr.f32.gmra.mxu0 %v299
  %v524 = vpop.f32.mrf.mxu0
  %v525 = vadd.f32 %v446, %v524
  %v526 = vpop.f32.mrf.mxu0
  %527 = vmatprep.mubr.f32.mxu0 0.0
  %528 = vmatmul.mubr.f32.gmra.mxu0 %v300
  %v529 = vpop.f32.mrf.mxu0
  %v530 = vadd.f32 %v446, %v529
  %v531 = vpop.f32.mrf.mxu0
  %532 = vmatprep.mubr.f32.mxu0 0.0
  %533 = vmatmul.mubr.f32.gmra.mxu0 %v301
  %v534 = vpop.f32.mrf.mxu0
  %v535 = vadd.f32 %v446, %v534
  %v536 = vpop.f32.mrf.mxu0
  %537 = vmatprep.mubr.f32.mxu0 0.0
  %538 = vmatmul.mubr.f32.gmra.mxu0 %v302
  %v539 = vpop.f32.mrf.mxu0
  %v540 = vadd.f32 %v446, %v539
  %v541 = vpop.f32.mrf.mxu0
  %542 = vmatprep.mubr.f32.mxu0 0.0
  %543 = vmatmul.mubr.f32.gmra.mxu0 %v303
  %v544 = vpop.f32.mrf.mxu0
  %v545 = vadd.f32 %v446, %v544
  %v546 = vpop.f32.mrf.mxu0
  %547 = vmatprep.mubr.f32.mxu0 0.0
  %548 = vmatmul.mubr.f32.gmra.mxu0 %v304
  %v549 = vpop.f32.mrf.mxu0
  %v550 = vadd.f32 %v446, %v549
  %v551 = vpop.f32.mrf.mxu0
  %552 = vmatprep.mubr.f32.mxu0 0.0
  %553 = vmatmul.mubr.f32.gmra.mxu0 %v305
  %v554 = vpop.f32.mrf.mxu0
  %v555 = vadd.f32 %v446, %v554
  %v556 = vpop.f32.mrf.mxu0
  %557 = vmatprep.mubr.f32.mxu0 0.0
  %558 = vmatmul.mubr.f32.gmra.mxu0 %v306
  %v559 = vpop.f32.mrf.mxu0
  %v560 = vadd.f32 %v446, %v559
  %v561 = vpop.f32.mrf.mxu0
  %562 = vmatprep.mubr.f32.mxu0 0.0
  %563 = vmatmul.mubr.f32.gmra.mxu0 %v307
  %v564 = vpop.f32.mrf.mxu0
  %v565 = vadd.f32 %v446, %v564
  %v566 = vpop.f32.mrf.mxu0
  %567 = vmatprep.mubr.f32.mxu0 0.0
  %568 = vmatmul.mubr.f32.gmra.mxu0 %v308
  %v569 = vpop.f32.mrf.mxu0
  %v570 = vadd.f32 %v446, %v569
  %v571 = vpop.f32.mrf.mxu0
  %572 = vmatprep.mubr.f32.mxu0 0.0
  %573 = vmatmul.mubr.f32.gmra.mxu0 %v309
  %v574 = vpop.f32.mrf.mxu0
  %v575 = vadd.f32 %v446, %v574
  %v576 = vpop.f32.mrf.mxu0
  %577 = vmatprep.mubr.f32.mxu0 0.0
  %578 = vmatmul.mubr.f32.gmra.mxu0 %v310
  %v579 = vpop.f32.mrf.mxu0
  %v580 = vadd.f32 %v446, %v579
  %v581 = vpop.f32.mrf.mxu0
  %582 = vmatprep.mubr.f32.mxu0 0.0
  %583 = vmatmul.mubr.f32.gmra.mxu0 %v311
  %v584 = vpop.f32.mrf.mxu0
  %v585 = vadd.f32 %v446, %v584
  %v586 = vpop.f32.mrf.mxu0
  %587 = vmatprep.mubr.f32.mxu0 0.0
  %588 = vmatmul.mubr.f32.gmra.mxu0 %v312
  %v589 = vpop.f32.mrf.mxu0
  %v590 = vadd.f32 %v446, %v589
  %v591 = vpop.f32.mrf.mxu0
  %592 = vmatprep.mubr.f32.mxu0 0.0
  %593 = vmatmul.mubr.f32.gmra.mxu0 %v313
  %v594 = vpop.f32.mrf.mxu0
  %v595 = vadd.f32 %v446, %v594
  %v596 = vpop.f32.mrf.mxu0
  %597 = vmatprep.mubr.f32.mxu0 0.0
  %598 = vmatmul.mubr.f32.gmra.mxu0 %v314
  %v599 = vpop.f32.mrf.mxu0
  %v600 = vadd.f32 %v446, %v599
  %v601 = vpop.f32.mrf.mxu0
  %602 = vmatprep.mubr.f32.mxu0 0.0
  %603 = vmatmul.mubr.f32.gmra.mxu0 %v315
  %v604 = vpop.f32.mrf.mxu0
  %v605 = vadd.f32 %v446, %v604
  %v606 = vpop.f32.mrf.mxu0
  %607 = vmatprep.mubr.f32.mxu0 0.0
  %608 = vmatmul.mubr.f32.gmra.mxu0 %v316
  %v609 = vpop.f32.mrf.mxu0
  %v610 = vadd.f32 %v446, %v609
  %v611 = vpop.f32.mrf.mxu0
  %612 = vmatprep.mubr.f32.mxu0 0.0
  %613 = vmatmul.mubr.f32.gmra.mxu0 %v317
  %v614 = vpop.f32.mrf.mxu0
  %v615 = vadd.f32 %v446, %v614
  %v616 = vpop.f32.mrf.mxu0
  %617 = vmatprep.mubr.f32.mxu0 0.0
  %618 = vmatmul.mubr.f32.gmra.mxu0 %v318
  %v619 = vpop.f32.mrf.mxu0
  %v620 = vadd.f32 %v446, %v619
  %v621 = vpop.f32.mrf.mxu0
  %622 = vmatprep.mubr.f32.mxu0 0.0
  %623 = vmatmul.mubr.f32.gmra.mxu0 %v319
  %v624 = vpop.f32.mrf.mxu0
  %v625 = vadd.f32 %v446, %v624
  %v626 = vpop.f32.mrf.mxu0
  %627 = vmatprep.mubr.f32.mxu0 0.0
  %628 = vmatmul.mubr.f32.gmra.mxu0 %v320
  %v629 = vpop.f32.mrf.mxu0
  %v630 = vadd.f32 %v446, %v629
  %v631 = vpop.f32.mrf.mxu0
  %632 = vmatprep.mubr.f32.mxu0 0.0
  %633 = vmatmul.mubr.f32.gmra.mxu0 %v321
  %v634 = vpop.f32.mrf.mxu0
  %v635 = vadd.f32 %v446, %v634
  %v636 = vpop.f32.mrf.mxu0
  %637 = vmatprep.mubr.f32.mxu0 0.0
  %638 = vmatmul.mubr.f32.gmra.mxu0 %v322
  %v639 = vpop.f32.mrf.mxu0
  %v640 = vadd.f32 %v446, %v639
  %v641 = vpop.f32.mrf.mxu0
  %642 = vmatprep.mubr.f32.mxu0 0.0
  %643 = vmatmul.mubr.f32.gmra.mxu0 %v323
  %v644 = vpop.f32.mrf.mxu0
  %v645 = vadd.f32 %v446, %v644
  %v646 = vpop.f32.mrf.mxu0
  %647 = vmatprep.mubr.f32.mxu0 0.0
  %648 = vmatmul.mubr.f32.gmra.mxu0 %v324
  %v649 = vpop.f32.mrf.mxu0
  %v650 = vadd.f32 %v446, %v649
  %v651 = vpop.f32.mrf.mxu0
  %652 = vmatprep.mubr.f32.mxu0 0.0
  %653 = vmatmul.mubr.f32.gmra.mxu0 %v325
  %v654 = vpop.f32.mrf.mxu0
  %v655 = vadd.f32 %v446, %v654
  %v656 = vpop.f32.mrf.mxu0
  %657 = vmatprep.mubr.f32.mxu0 0.0
  %658 = vmatmul.mubr.f32.gmra.mxu0 %v326
  %v659 = vpop.f32.mrf.mxu0
  %v660 = vadd.f32 %v446, %v659
  %v661 = vpop.f32.mrf.mxu0
  %662 = vmatprep.mubr.f32.mxu0 0.0
  %663 = vmatmul.mubr.f32.gmra.mxu0 %v327
  %v664 = vpop.f32.mrf.mxu0
  %v665 = vadd.f32 %v446, %v664
  %v666 = vpop.f32.mrf.mxu0
  %667 = vmatprep.mubr.f32.mxu0 0.0
  %668 = vmatmul.mubr.f32.gmra.mxu0 %v328
  %v669 = vpop.f32.mrf.mxu0
  %v670 = vadd.f32 %v446, %v669
  %v671 = vpop.f32.mrf.mxu0
  %672 = vmatprep.mubr.f32.mxu0 0.0
  %673 = vmatmul.mubr.f32.gmra.mxu0 %v329
  %v674 = vpop.f32.mrf.mxu0
  %v675 = vadd.f32 %v446, %v674
  %v676 = vpop.f32.mrf.mxu0
  %677 = vmatprep.mubr.f32.mxu0 0.0
  %678 = vmatmul.mubr.f32.gmra.mxu0 %v330
  %v679 = vpop.f32.mrf.mxu0
  %v680 = vadd.f32 %v446, %v679
  %v681 = vpop.f32.mrf.mxu0
  %682 = vmatprep.mubr.f32.mxu0 0.0
  %683 = vmatmul.mubr.f32.gmra.mxu0 %v331
  %v684 = vpop.f32.mrf.mxu0
  %v685 = vadd.f32 %v446, %v684
  %v686 = vpop.f32.mrf.mxu0
  %687 = vmatprep.mubr.f32.mxu0 0.0
  %688 = vmatmul.mubr.f32.gmra.mxu0 %v332
  %v689 = vpop.f32.mrf.mxu0
  %v690 = vadd.f32 %v446, %v689
  %v691 = vpop.f32.mrf.mxu0
  %692 = vmatprep.mubr.f32.mxu0 0.0
  %693 = vmatmul.mubr.f32.gmra.mxu0 %v333
  %v694 = vpop.f32.mrf.mxu0
  %v695 = vadd.f32 %v446, %v694
  %v696 = vpop.f32.mrf.mxu0
  %697 = vmatprep.mubr.f32.mxu0 0.0
  %698 = vmatmul.mubr.f32.gmra.mxu0 %v334
  %v699 = vpop.f32.mrf.mxu0
  %v700 = vadd.f32 %v446, %v699
  %v701 = vpop.f32.mrf.mxu0
  %702 = vmatprep.mubr.f32.mxu0 0.0
  %703 = vmatmul.mubr.f32.gmra.mxu0 %v335
  %v704 = vpop.f32.mrf.mxu0
  %v705 = vadd.f32 %v446, %v704
  %v706 = vpop.f32.mrf.mxu0
  %707 = vmatprep.mubr.f32.mxu0 0.0
  %708 = vmatmul.mubr.f32.gmra.mxu0 %v336
  %v709 = vpop.f32.mrf.mxu0
  %v710 = vadd.f32 %v446, %v709
  %v711 = vpop.f32.mrf.mxu0
  %712 = vmatprep.mubr.f32.mxu0 0.0
  %713 = vmatmul.mubr.f32.gmra.mxu0 %v337
  %v714 = vpop.f32.mrf.mxu0
  %v715 = vadd.f32 %v446, %v714
  %v716 = vpop.f32.mrf.mxu0
  %717 = vmatprep.mubr.f32.mxu0 0.0
  %718 = vmatmul.mubr.f32.gmra.mxu0 %v338
  %v719 = vpop.f32.mrf.mxu0
  %v720 = vadd.f32 %v446, %v719
  %v721 = vpop.f32.mrf.mxu0
  %722 = vmatprep.mubr.f32.mxu0 0.0
  %723 = vmatmul.mubr.f32.gmra.mxu0 %v339
  %v724 = vpop.f32.mrf.mxu0
  %v725 = vadd.f32 %v446, %v724
  %v726 = vpop.f32.mrf.mxu0
  %727 = vmatprep.mubr.f32.mxu0 0.0
  %728 = vmatmul.mubr.f32.gmra.mxu0 %v340
  %v729 = vpop.f32.mrf.mxu0
  %v730 = vadd.f32 %v446, %v729
  %v731 = vpop.f32.mrf.mxu0
  %732 = vmatprep.mubr.f32.mxu0 0.0
  %733 = vmatmul.mubr.f32.gmra.mxu0 %v341
  %v734 = vpop.f32.mrf.mxu0
  %v735 = vadd.f32 %v446, %v734
  %v736 = vpop.f32.mrf.mxu0
  %737 = vmatprep.mubr.f32.mxu0 0.0
  %738 = vmatmul.mubr.f32.gmra.mxu0 %v342
  %v739 = vpop.f32.mrf.mxu0
  %v740 = vadd.f32 %v446, %v739
  %v741 = vpop.f32.mrf.mxu0
  %742 = vmatprep.mubr.f32.mxu0 0.0
  %743 = vmatmul.mubr.f32.gmra.mxu0 %v343
  %v744 = vpop.f32.mrf.mxu0
  %v745 = vadd.f32 %v446, %v744
  %v746 = vpop.f32.mrf.mxu0
  %747 = vmatprep.mubr.f32.mxu0 0.0
  %748 = vmatmul.mubr.f32.gmra.mxu0 %v344
  %v749 = vpop.f32.mrf.mxu0
  %v750 = vadd.f32 %v446, %v749
  %v751 = vpop.f32.mrf.mxu0
  %752 = vmatprep.mubr.f32.mxu0 0.0
  %753 = vmatmul.mubr.f32.gmra.mxu0 %v345
  %v754 = vpop.f32.mrf.mxu0
  %v755 = vadd.f32 %v446, %v754
  %v756 = vpop.f32.mrf.mxu0
  %757 = vmatprep.mubr.f32.mxu0 0.0
  %758 = vmatmul.mubr.f32.gmra.mxu0 %v346
  %v759 = vpop.f32.mrf.mxu0
  %v760 = vadd.f32 %v446, %v759
  %v761 = vpop.f32.mrf.mxu0
  %762 = vmatprep.mubr.f32.mxu0 0.0
  %763 = vmatmul.mubr.f32.gmra.mxu0 %v347
  %v764 = vpop.f32.mrf.mxu0
  %v765 = vadd.f32 %v446, %v764
  %v766 = vpop.f32.mrf.mxu0
  %767 = vmatprep.mubr.f32.mxu0 0.0
  %768 = vmatmul.mubr.f32.gmra.mxu0 %v348
  %v769 = vpop.f32.mrf.mxu0
  %v770 = vadd.f32 %v446, %v769
  %v771 = vpop.f32.mrf.mxu0
  %772 = vmatprep.mubr.f32.mxu0 0.0
  %773 = vmatmul.mubr.f32.gmra.mxu0 %v349
  %v774 = vpop.f32.mrf.mxu0
  %v775 = vadd.f32 %v446, %v774
  %v776 = vpop.f32.mrf.mxu0
  %777 = vmatprep.mubr.f32.mxu0 0.0
  %778 = vmatmul.mubr.f32.gmra.mxu0 %v350
  %v779 = vpop.f32.mrf.mxu0
  %v780 = vadd.f32 %v446, %v779
  %v781 = vpop.f32.mrf.mxu0
  %782 = vmatprep.mubr.f32.mxu0 0.0
  %783 = vmatmul.mubr.f32.gmra.mxu0 %v351
  %v784 = vpop.f32.mrf.mxu0
  %v785 = vadd.f32 %v446, %v784
  %v786 = vpop.f32.mrf.mxu0
  %787 = vmatprep.mubr.f32.mxu0 0.0
  %788 = vmatmul.mubr.f32.gmra.mxu0 %v352
  %v789 = vpop.f32.mrf.mxu0
  %v790 = vadd.f32 %v446, %v789
  %v791 = vpop.f32.mrf.mxu0
  %792 = vmatprep.mubr.f32.mxu0 0.0
  %793 = vmatmul.mubr.f32.gmra.mxu0 %v353
  %v794 = vpop.f32.mrf.mxu0
  %v795 = vadd.f32 %v446, %v794
  %v796 = vpop.f32.mrf.mxu0
  %797 = vmatprep.mubr.f32.mxu0 0.0
  %798 = vmatmul.mubr.f32.gmra.mxu0 %v354
  %v799 = vpop.f32.mrf.mxu0
  %v800 = vadd.f32 %v446, %v799
  %v801 = vpop.f32.mrf.mxu0
  %802 = vmatprep.mubr.f32.mxu0 0.0
  %803 = vmatmul.mubr.f32.gmra.mxu0 %v355
  %v804 = vpop.f32.mrf.mxu0
  %v805 = vadd.f32 %v446, %v804
  %v806 = vpop.f32.mrf.mxu0
  %807 = vmatprep.mubr.f32.mxu0 0.0
  %808 = vmatmul.mubr.f32.gmra.mxu0 %v356
  %v809 = vpop.f32.mrf.mxu0
  %v810 = vadd.f32 %v446, %v809
  %v811 = vpop.f32.mrf.mxu0
  %812 = vmatprep.mubr.f32.mxu0 0.0
  %813 = vmatmul.mubr.f32.gmra.mxu0 %v357
  %v814 = vpop.f32.mrf.mxu0
  %v815 = vadd.f32 %v446, %v814
  %v816 = vpop.f32.mrf.mxu0
  %817 = vmatprep.mubr.f32.mxu0 0.0
  %818 = vmatmul.mubr.f32.gmra.mxu0 %v358
  %v819 = vpop.f32.mrf.mxu0
  %v820 = vadd.f32 %v446, %v819
  %v821 = vpop.f32.mrf.mxu0
  %822 = vmatprep.mubr.f32.mxu0 0.0
  %823 = vmatmul.mubr.f32.gmra.mxu0 %v359
  %v824 = vpop.f32.mrf.mxu0
  %v825 = vadd.f32 %v446, %v824
  %v826 = vpop.f32.mrf.mxu0
  %827 = vmatprep.mubr.f32.mxu0 0.0
  %828 = vmatmul.mubr.f32.gmra.mxu0 %v360
  %v829 = vpop.f32.mrf.mxu0
  %v830 = vadd.f32 %v446, %v829
  %v831 = vpop.f32.mrf.mxu0
  %832 = vdwg.mxu0
  %v833 = vmul.f32 %v515, 0.5
  %v834 = vmul.f32 %v520, 0.5
  %v835 = vmul.f32 %v525, 0.5
  %v836 = vmul.f32 %v530, 0.5
  %v837 = vmul.f32 %v535, 0.5
  %v838 = vmul.f32 %v540, 0.5
  %v839 = vmul.f32 %v545, 0.5
  %v840 = vmul.f32 %v550, 0.5
  %v841 = vmul.f32 %v555, 0.5
  %v842 = vmul.f32 %v560, 0.5
  %v843 = vmul.f32 %v565, 0.5
  %v844 = vmul.f32 %v570, 0.5
  %v845 = vmul.f32 %v575, 0.5
  %v846 = vmul.f32 %v580, 0.5
  %v847 = vmul.f32 %v585, 0.5
  %v848 = vmul.f32 %v590, 0.5
  %v849 = vmul.f32 %v595, 0.5
  %v850 = vmul.f32 %v600, 0.5
  %v851 = vmul.f32 %v605, 0.5
  %v852 = vmul.f32 %v610, 0.5
  %v853 = vmul.f32 %v615, 0.5
  %v854 = vmul.f32 %v620, 0.5
  %v855 = vmul.f32 %v625, 0.5
  %v856 = vmul.f32 %v630, 0.5
  %v857 = vmul.f32 %v635, 0.5
  %v858 = vmul.f32 %v640, 0.5
  %v859 = vmul.f32 %v645, 0.5
  %v860 = vmul.f32 %v650, 0.5
  %v861 = vmul.f32 %v655, 0.5
  %v862 = vmul.f32 %v660, 0.5
  %v863 = vmul.f32 %v665, 0.5
  %v864 = vmul.f32 %v670, 0.5
  %v865 = vmul.f32 %v675, 0.5
  %v866 = vmul.f32 %v680, 0.5
  %v867 = vmul.f32 %v685, 0.5
  %v868 = vmul.f32 %v690, 0.5
  %v869 = vmul.f32 %v695, 0.5
  %v870 = vmul.f32 %v700, 0.5
  %v871 = vmul.f32 %v705, 0.5
  %v872 = vmul.f32 %v710, 0.5
  %v873 = vmul.f32 %v715, 0.5
  %v874 = vmul.f32 %v720, 0.5
  %v875 = vmul.f32 %v725, 0.5
  %v876 = vmul.f32 %v730, 0.5
  %v877 = vmul.f32 %v735, 0.5
  %v878 = vmul.f32 %v740, 0.5
  %v879 = vmul.f32 %v745, 0.5
  %v880 = vmul.f32 %v750, 0.5
  %v881 = vmul.f32 %v755, 0.5
  %v882 = vmul.f32 %v760, 0.5
  %v883 = vmul.f32 %v765, 0.5
  %v884 = vmul.f32 %v770, 0.5
  %v885 = vmul.f32 %v775, 0.5
  %v886 = vmul.f32 %v780, 0.5
  %v887 = vmul.f32 %v785, 0.5
  %v888 = vmul.f32 %v790, 0.5
  %v889 = vmul.f32 %v795, 0.5
  %v890 = vmul.f32 %v800, 0.5
  %v891 = vmul.f32 %v805, 0.5
  %v892 = vmul.f32 %v810, 0.5
  %v893 = vmul.f32 %v815, 0.5
  %v894 = vmul.f32 %v820, 0.5
  %v895 = vmul.f32 %v825, 0.5
  %v896 = vmul.f32 %v830, 0.5
  %v897 = vmul.f32 %v515, 0.70710677
  %v898 = vmul.f32 %v520, 0.70710677
  %v899 = vmul.f32 %v525, 0.70710677
  %v900 = vmul.f32 %v530, 0.70710677
  %v901 = vmul.f32 %v535, 0.70710677
  %v902 = vmul.f32 %v540, 0.70710677
  %v903 = vmul.f32 %v545, 0.70710677
  %v904 = vmul.f32 %v550, 0.70710677
  %v905 = vmul.f32 %v555, 0.70710677
  %v906 = vmul.f32 %v560, 0.70710677
  %v907 = vmul.f32 %v565, 0.70710677
  %v908 = vmul.f32 %v570, 0.70710677
  %v909 = vmul.f32 %v575, 0.70710677
  %v910 = vmul.f32 %v580, 0.70710677
  %v911 = vmul.f32 %v585, 0.70710677
  %v912 = vmul.f32 %v590, 0.70710677
  %v913 = vmul.f32 %v595, 0.70710677
  %v914 = vmul.f32 %v600, 0.70710677
  %v915 = vmul.f32 %v605, 0.70710677
  %v916 = vmul.f32 %v610, 0.70710677
  %v917 = vmul.f32 %v615, 0.70710677
  %v918 = vmul.f32 %v620, 0.70710677
  %v919 = vmul.f32 %v625, 0.70710677
  %v920 = vmul.f32 %v630, 0.70710677
  %v921 = vmul.f32 %v635, 0.70710677
  %v922 = vmul.f32 %v640, 0.70710677
  %v923 = vmul.f32 %v645, 0.70710677
  %v924 = vmul.f32 %v650, 0.70710677
  %v925 = vmul.f32 %v655, 0.70710677
  %v926 = vmul.f32 %v660, 0.70710677
  %v927 = vmul.f32 %v665, 0.70710677
  %v928 = vmul.f32 %v670, 0.70710677
  %v929 = vmul.f32 %v675, 0.70710677
  %v930 = vmul.f32 %v680, 0.70710677
  %v931 = vmul.f32 %v685, 0.70710677
  %v932 = vmul.f32 %v690, 0.70710677
  %v933 = vmul.f32 %v695, 0.70710677
  %v934 = vmul.f32 %v700, 0.70710677
  %v935 = vmul.f32 %v705, 0.70710677
  %v936 = vmul.f32 %v710, 0.70710677
  %v937 = vmul.f32 %v715, 0.70710677
  %v938 = vmul.f32 %v720, 0.70710677
  %v939 = vmul.f32 %v725, 0.70710677
  %v940 = vmul.f32 %v730, 0.70710677
  %v941 = vmul.f32 %v735, 0.70710677
  %v942 = vmul.f32 %v740, 0.70710677
  %v943 = vmul.f32 %v745, 0.70710677
  %v944 = vmul.f32 %v750, 0.70710677
  %v945 = vmul.f32 %v755, 0.70710677
  %v946 = vmul.f32 %v760, 0.70710677
  %v947 = vmul.f32 %v765, 0.70710677
  %v948 = vmul.f32 %v770, 0.70710677
  %v949 = vmul.f32 %v775, 0.70710677
  %v950 = vmul.f32 %v780, 0.70710677
  %v951 = vmul.f32 %v785, 0.70710677
  %v952 = vmul.f32 %v790, 0.70710677
  %v953 = vmul.f32 %v795, 0.70710677
  %v954 = vmul.f32 %v800, 0.70710677
  %v955 = vmul.f32 %v805, 0.70710677
  %v956 = vmul.f32 %v810, 0.70710677
  %v957 = vmul.f32 %v815, 0.70710677
  %v958 = vmul.f32 %v820, 0.70710677
  %v959 = vmul.f32 %v825, 0.70710677
  %v960 = vmul.f32 %v830, 0.70710677
  %v961 = verf.f32.pop %v897
  %v962 = verf.f32.pop %v898
  %v963 = verf.f32.pop %v899
  %v964 = verf.f32.pop %v900
  %v965 = verf.f32.pop %v901
  %v966 = verf.f32.pop %v902
  %v967 = verf.f32.pop %v903
  %v968 = verf.f32.pop %v904
  %v969 = verf.f32.pop %v905
  %v970 = verf.f32.pop %v906
  %v971 = verf.f32.pop %v907
  %v972 = verf.f32.pop %v908
  %v973 = verf.f32.pop %v909
  %v974 = verf.f32.pop %v910
  %v975 = verf.f32.pop %v911
  %v976 = verf.f32.pop %v912
  %v977 = verf.f32.pop %v913
  %v978 = verf.f32.pop %v914
  %v979 = verf.f32.pop %v915
  %v980 = verf.f32.pop %v916
  %v981 = verf.f32.pop %v917
  %v982 = verf.f32.pop %v918
  %v983 = verf.f32.pop %v919
  %v984 = verf.f32.pop %v920
  %v985 = verf.f32.pop %v921
  %v986 = verf.f32.pop %v922
  %v987 = verf.f32.pop %v923
  %v988 = verf.f32.pop %v924
  %v989 = verf.f32.pop %v925
  %v990 = verf.f32.pop %v926
  %v991 = verf.f32.pop %v927
  %v992 = verf.f32.pop %v928
  %v993 = verf.f32.pop %v929
  %v994 = verf.f32.pop %v930
  %v995 = verf.f32.pop %v931
  %v996 = verf.f32.pop %v932
  %v997 = verf.f32.pop %v933
  %v998 = verf.f32.pop %v934
  %v999 = verf.f32.pop %v935
  %v1000 = verf.f32.pop %v936
  %v1001 = verf.f32.pop %v937
  %v1002 = verf.f32.pop %v938
  %v1003 = verf.f32.pop %v939
  %v1004 = verf.f32.pop %v940
  %v1005 = verf.f32.pop %v941
  %v1006 = verf.f32.pop %v942
  %v1007 = verf.f32.pop %v943
  %v1008 = verf.f32.pop %v944
  %v1009 = verf.f32.pop %v945
  %v1010 = verf.f32.pop %v946
  %v1011 = verf.f32.pop %v947
  %v1012 = verf.f32.pop %v948
  %v1013 = verf.f32.pop %v949
  %v1014 = verf.f32.pop %v950
  %v1015 = verf.f32.pop %v951
  %v1016 = verf.f32.pop %v952
  %v1017 = verf.f32.pop %v953
  %v1018 = verf.f32.pop %v954
  %v1019 = verf.f32.pop %v955
  %v1020 = verf.f32.pop %v956
  %v1021 = verf.f32.pop %v957
  %v1022 = verf.f32.pop %v958
  %v1023 = verf.f32.pop %v959
  %v1024 = verf.f32.pop %v960
  %v1025 = vadd.f32 %v961, 1.0
  %v1026 = vadd.f32 %v962, 1.0
  %v1027 = vadd.f32 %v963, 1.0
  %v1028 = vadd.f32 %v964, 1.0
  %v1029 = vadd.f32 %v965, 1.0
  %v1030 = vadd.f32 %v966, 1.0
  %v1031 = vadd.f32 %v967, 1.0
  %v1032 = vadd.f32 %v968, 1.0
  %v1033 = vadd.f32 %v969, 1.0
  %v1034 = vadd.f32 %v970, 1.0
  %v1035 = vadd.f32 %v971, 1.0
  %v1036 = vadd.f32 %v972, 1.0
  %v1037 = vadd.f32 %v973, 1.0
  %v1038 = vadd.f32 %v974, 1.0
  %v1039 = vadd.f32 %v975, 1.0
  %v1040 = vadd.f32 %v976, 1.0
  %v1041 = vadd.f32 %v977, 1.0
  %v1042 = vadd.f32 %v978, 1.0
  %v1043 = vadd.f32 %v979, 1.0
  %v1044 = vadd.f32 %v980, 1.0
  %v1045 = vadd.f32 %v981, 1.0
  %v1046 = vadd.f32 %v982, 1.0
  %v1047 = vadd.f32 %v983, 1.0
  %v1048 = vadd.f32 %v984, 1.0
  %v1049 = vadd.f32 %v985, 1.0
  %v1050 = vadd.f32 %v986, 1.0
  %v1051 = vadd.f32 %v987, 1.0
  %v1052 = vadd.f32 %v988, 1.0
  %v1053 = vadd.f32 %v989, 1.0
  %v1054 = vadd.f32 %v990, 1.0
  %v1055 = vadd.f32 %v991, 1.0
  %v1056 = vadd.f32 %v992, 1.0
  %v1057 = vadd.f32 %v993, 1.0
  %v1058 = vadd.f32 %v994, 1.0
  %v1059 = vadd.f32 %v995, 1.0
  %v1060 = vadd.f32 %v996, 1.0
  %v1061 = vadd.f32 %v997, 1.0
  %v1062 = vadd.f32 %v998, 1.0
  %v1063 = vadd.f32 %v999, 1.0
  %v1064 = vadd.f32 %v1000, 1.0
  %v1065 = vadd.f32 %v1001, 1.0
  %v1066 = vadd.f32 %v1002, 1.0
  %v1067 = vadd.f32 %v1003, 1.0
  %v1068 = vadd.f32 %v1004, 1.0
  %v1069 = vadd.f32 %v1005, 1.0
  %v1070 = vadd.f32 %v1006, 1.0
  %v1071 = vadd.f32 %v1007, 1.0
  %v1072 = vadd.f32 %v1008, 1.0
  %v1073 = vadd.f32 %v1009, 1.0
  %v1074 = vadd.f32 %v1010, 1.0
  %v1075 = vadd.f32 %v1011, 1.0
  %v1076 = vadd.f32 %v1012, 1.0
  %v1077 = vadd.f32 %v1013, 1.0
  %v1078 = vadd.f32 %v1014, 1.0
  %v1079 = vadd.f32 %v1015, 1.0
  %v1080 = vadd.f32 %v1016, 1.0
  %v1081 = vadd.f32 %v1017, 1.0
  %v1082 = vadd.f32 %v1018, 1.0
  %v1083 = vadd.f32 %v1019, 1.0
  %v1084 = vadd.f32 %v1020, 1.0
  %v1085 = vadd.f32 %v1021, 1.0
  %v1086 = vadd.f32 %v1022, 1.0
  %v1087 = vadd.f32 %v1023, 1.0
  %v1088 = vadd.f32 %v1024, 1.0
  %v1089 = vmul.f32 %v833, %v1025
  %v1090 = vmul.f32 %v834, %v1026
  %v1091 = vmul.f32 %v835, %v1027
  %v1092 = vmul.f32 %v836, %v1028
  %v1093 = vmul.f32 %v837, %v1029
  %v1094 = vmul.f32 %v838, %v1030
  %v1095 = vmul.f32 %v839, %v1031
  %v1096 = vmul.f32 %v840, %v1032
  %v1097 = vmul.f32 %v841, %v1033
  %v1098 = vmul.f32 %v842, %v1034
  %v1099 = vmul.f32 %v843, %v1035
  %v1100 = vmul.f32 %v844, %v1036
  %v1101 = vmul.f32 %v845, %v1037
  %v1102 = vmul.f32 %v846, %v1038
  %v1103 = vmul.f32 %v847, %v1039
  %v1104 = vmul.f32 %v848, %v1040
  %v1105 = vmul.f32 %v849, %v1041
  %v1106 = vmul.f32 %v850, %v1042
  %v1107 = vmul.f32 %v851, %v1043
  %v1108 = vmul.f32 %v852, %v1044
  %v1109 = vmul.f32 %v853, %v1045
  %v1110 = vmul.f32 %v854, %v1046
  %v1111 = vmul.f32 %v855, %v1047
  %v1112 = vmul.f32 %v856, %v1048
  %v1113 = vmul.f32 %v857, %v1049
  %v1114 = vmul.f32 %v858, %v1050
  %v1115 = vmul.f32 %v859, %v1051
  %v1116 = vmul.f32 %v860, %v1052
  %v1117 = vmul.f32 %v861, %v1053
  %v1118 = vmul.f32 %v862, %v1054
  %v1119 = vmul.f32 %v863, %v1055
  %v1120 = vmul.f32 %v864, %v1056
  %v1121 = vmul.f32 %v865, %v1057
  %v1122 = vmul.f32 %v866, %v1058
  %v1123 = vmul.f32 %v867, %v1059
  %v1124 = vmul.f32 %v868, %v1060
  %v1125 = vmul.f32 %v869, %v1061
  %v1126 = vmul.f32 %v870, %v1062
  %v1127 = vmul.f32 %v871, %v1063
  %v1128 = vmul.f32 %v872, %v1064
  %v1129 = vmul.f32 %v873, %v1065
  %v1130 = vmul.f32 %v874, %v1066
  %v1131 = vmul.f32 %v875, %v1067
  %v1132 = vmul.f32 %v876, %v1068
  %v1133 = vmul.f32 %v877, %v1069
  %v1134 = vmul.f32 %v878, %v1070
  %v1135 = vmul.f32 %v879, %v1071
  %v1136 = vmul.f32 %v880, %v1072
  %v1137 = vmul.f32 %v881, %v1073
  %v1138 = vmul.f32 %v882, %v1074
  %v1139 = vmul.f32 %v883, %v1075
  %v1140 = vmul.f32 %v884, %v1076
  %v1141 = vmul.f32 %v885, %v1077
  %v1142 = vmul.f32 %v886, %v1078
  %v1143 = vmul.f32 %v887, %v1079
  %v1144 = vmul.f32 %v888, %v1080
  %v1145 = vmul.f32 %v889, %v1081
  %v1146 = vmul.f32 %v890, %v1082
  %v1147 = vmul.f32 %v891, %v1083
  %v1148 = vmul.f32 %v892, %v1084
  %v1149 = vmul.f32 %v893, %v1085
  %v1150 = vmul.f32 %v894, %v1086
  %v1151 = vmul.f32 %v895, %v1087
  %v1152 = vmul.f32 %v896, %v1088
  %1153 = vst [vmem:[%s7] sm:$0xff] %v1089
  %1154 = vst [vmem:[%s7 + $0x8] sm:$0xff] %v1090
  %1155 = vst [vmem:[%s7 + $0x10] sm:$0xff] %v1091
  %1156 = vst [vmem:[%s7 + $0x18] sm:$0xff] %v1092
  %1157 = vst [vmem:[%s7 + $0x20] sm:$0xff] %v1093
  %1158 = vst [vmem:[%s7 + $0x28] sm:$0xff] %v1094
  %1159 = vst [vmem:[%s7 + $0x30] sm:$0xff] %v1095
  %1160 = vst [vmem:[%s7 + $0x38] sm:$0xff] %v1096
  %1161 = vst [vmem:[%s7 + $0x40] sm:$0xff] %v1097
  %1162 = vst [vmem:[%s7 + $0x48] sm:$0xff] %v1098
  %1163 = vst [vmem:[%s7 + $0x50] sm:$0xff] %v1099
  %1164 = vst [vmem:[%s7 + $0x58] sm:$0xff] %v1100
  %1165 = vst [vmem:[%s7 + $0x60] sm:$0xff] %v1101
  %1166 = vst [vmem:[%s7 + $0x68] sm:$0xff] %v1102
  %1167 = vst [vmem:[%s7 + $0x70] sm:$0xff] %v1103
  %1168 = vst [vmem:[%s7 + $0x78] sm:$0xff] %v1104
  %1169 = vst [vmem:[%s7 + $0x80] sm:$0xff] %v1105
  %1170 = vst [vmem:[%s7 + $0x88] sm:$0xff] %v1106
  %1171 = vst [vmem:[%s7 + $0x90] sm:$0xff] %v1107
  %1172 = vst [vmem:[%s7 + $0x98] sm:$0xff] %v1108
  %1173 = vst [vmem:[%s7 + $0xa0] sm:$0xff] %v1109
  %1174 = vst [vmem:[%s7 + $0xa8] sm:$0xff] %v1110
  %1175 = vst [vmem:[%s7 + $0xb0] sm:$0xff] %v1111
  %1176 = vst [vmem:[%s7 + $0xb8] sm:$0xff] %v1112
  %1177 = vst [vmem:[%s7 + $0xc0] sm:$0xff] %v1113
  %1178 = vst [vmem:[%s7 + $0xc8] sm:$0xff] %v1114
  %1179 = vst [vmem:[%s7 + $0xd0] sm:$0xff] %v1115
  %1180 = vst [vmem:[%s7 + $0xd8] sm:$0xff] %v1116
  %1181 = vst [vmem:[%s7 + $0xe0] sm:$0xff] %v1117
  %1182 = vst [vmem:[%s7 + $0xe8] sm:$0xff] %v1118
  %1183 = vst [vmem:[%s7 + $0xf0] sm:$0xff] %v1119
  %1184 = vst [vmem:[%s7 + $0xf8] sm:$0xff] %v1120
  %1185 = vst [vmem:[%s7 + $0x100] sm:$0xff] %v1121
  %1186 = vst [vmem:[%s7 + $0x108] sm:$0xff] %v1122
  %1187 = vst [vmem:[%s7 + $0x110] sm:$0xff] %v1123
  %1188 = vst [vmem:[%s7 + $0x118] sm:$0xff] %v1124
  %1189 = vst [vmem:[%s7 + $0x120] sm:$0xff] %v1125
  %1190 = vst [vmem:[%s7 + $0x128] sm:$0xff] %v1126
  %1191 = vst [vmem:[%s7 + $0x130] sm:$0xff] %v1127
  %1192 = vst [vmem:[%s7 + $0x138] sm:$0xff] %v1128
  %1193 = vst [vmem:[%s7 + $0x140] sm:$0xff] %v1129
  %1194 = vst [vmem:[%s7 + $0x148] sm:$0xff] %v1130
  %1195 = vst [vmem:[%s7 + $0x150] sm:$0xff] %v1131
  %1196 = vst [vmem:[%s7 + $0x158] sm:$0xff] %v1132
  %1197 = vst [vmem:[%s7 + $0x160] sm:$0xff] %v1133
  %1198 = vst [vmem:[%s7 + $0x168] sm:$0xff] %v1134
  %1199 = vst [vmem:[%s7 + $0x170] sm:$0xff] %v1135
  %1200 = vst [vmem:[%s7 + $0x178] sm:$0xff] %v1136
  %1201 = vst [vmem:[%s7 + $0x180] sm:$0xff] %v1137
  %1202 = vst [vmem:[%s7 + $0x188] sm:$0xff] %v1138
  %1203 = vst [vmem:[%s7 + $0x190] sm:$0xff] %v1139
  %1204 = vst [vmem:[%s7 + $0x198] sm:$0xff] %v1140
  %1205 = vst [vmem:[%s7 + $0x1a0] sm:$0xff] %v1141
  %1206 = vst [vmem:[%s7 + $0x1a8] sm:$0xff] %v1142
  %1207 = vst [vmem:[%s7 + $0x1b0] sm:$0xff] %v1143
  %1208 = vst [vmem:[%s7 + $0x1b8] sm:$0xff] %v1144
  %1209 = vst [vmem:[%s7 + $0x1c0] sm:$0xff] %v1145
  %1210 = vst [vmem:[%s7 + $0x1c8] sm:$0xff] %v1146
  %1211 = vst [vmem:[%s7 + $0x1d0] sm:$0xff] %v1147
  %1212 = vst [vmem:[%s7 + $0x1d8] sm:$0xff] %v1148
  %1213 = vst [vmem:[%s7 + $0x1e0] sm:$0xff] %v1149
  %1214 = vst [vmem:[%s7 + $0x1e8] sm:$0xff] %v1150
  %1215 = vst [vmem:[%s7 + $0x1f0] sm:$0xff] %v1151
  %1216 = vst [vmem:[%s7 + $0x1f8] sm:$0xff] %v1152
  %v1217 = vadd.f32 %v1089, %v1090
  %v1218 = vadd.f32 %v1217, %v1091
  %v1219 = vadd.f32 %v1218, %v1092
  %v1220 = vadd.f32 %v1219, %v1093
  %v1221 = vadd.f32 %v1220, %v1094
  %v1222 = vadd.f32 %v1221, %v1095
  %v1223 = vadd.f32 %v1222, %v1096
  %v1224 = vadd.f32 %v1223, %v1097
  %v1225 = vadd.f32 %v1224, %v1098
  %v1226 = vadd.f32 %v1225, %v1099
  %v1227 = vadd.f32 %v1226, %v1100
  %v1228 = vadd.f32 %v1227, %v1101
  %v1229 = vadd.f32 %v1228, %v1102
  %v1230 = vadd.f32 %v1229, %v1103
  %v1231 = vadd.f32 %v1230, %v1104
  %v1232 = vadd.f32 %v1231, %v1105
  %v1233 = vadd.f32 %v1232, %v1106
  %v1234 = vadd.f32 %v1233, %v1107
  %v1235 = vadd.f32 %v1234, %v1108
  %v1236 = vadd.f32 %v1235, %v1109
  %v1237 = vadd.f32 %v1236, %v1110
  %v1238 = vadd.f32 %v1237, %v1111
  %v1239 = vadd.f32 %v1238, %v1112
  %v1240 = vadd.f32 %v1239, %v1113
  %v1241 = vadd.f32 %v1240, %v1114
  %v1242 = vadd.f32 %v1241, %v1115
  %v1243 = vadd.f32 %v1242, %v1116
  %v1244 = vadd.f32 %v1243, %v1117
  %v1245 = vadd.f32 %v1244, %v1118
  %v1246 = vadd.f32 %v1245, %v1119
  %v1247 = vadd.f32 %v1246, %v1120
  %v1248 = vadd.f32 %v1247, %v1121
  %v1249 = vadd.f32 %v1248, %v1122
  %v1250 = vadd.f32 %v1249, %v1123
  %v1251 = vadd.f32 %v1250, %v1124
  %v1252 = vadd.f32 %v1251, %v1125
  %v1253 = vadd.f32 %v1252, %v1126
  %v1254 = vadd.f32 %v1253, %v1127
  %v1255 = vadd.f32 %v1254, %v1128
  %v1256 = vadd.f32 %v1255, %v1129
  %v1257 = vadd.f32 %v1256, %v1130
  %v1258 = vadd.f32 %v1257, %v1131
  %v1259 = vadd.f32 %v1258, %v1132
  %v1260 = vadd.f32 %v1259, %v1133
  %v1261 = vadd.f32 %v1260, %v1134
  %v1262 = vadd.f32 %v1261, %v1135
  %v1263 = vadd.f32 %v1262, %v1136
  %v1264 = vadd.f32 %v1263, %v1137
  %v1265 = vadd.f32 %v1264, %v1138
  %v1266 = vadd.f32 %v1265, %v1139
  %v1267 = vadd.f32 %v1266, %v1140
  %v1268 = vadd.f32 %v1267, %v1141
  %v1269 = vadd.f32 %v1268, %v1142
  %v1270 = vadd.f32 %v1269, %v1143
  %v1271 = vadd.f32 %v1270, %v1144
  %v1272 = vadd.f32 %v1271, %v1145
  %v1273 = vadd.f32 %v1272, %v1146
  %v1274 = vadd.f32 %v1273, %v1147
  %v1275 = vadd.f32 %v1274, %v1148
  %v1276 = vadd.f32 %v1275, %v1149
  %v1277 = vadd.f32 %v1276, %v1150
  %v1278 = vadd.f32 %v1277, %v1151
  %v1279 = vadd.f32 %v1278, %v1152
  %v1280 = vrot.slane %v1279, 4
  %v1281 = vadd.f32 %v1279, %v1280
  %v1282 = vrot.slane %v1281, 2
  %v1283 = vadd.f32 %v1281, %v1282
  %v1284 = vrot.slane %v1283, 1
  %v1285 = vadd.f32 %v1283, %v1284
  %1286 = vst [vmem:[%s8] sm:$0x1] %v1285
  %v1287 = vmul.f32 %v1089, %v1089
  %v1288 = vmul.f32 %v1090, %v1090
  %v1289 = vmul.f32 %v1091, %v1091
  %v1290 = vmul.f32 %v1092, %v1092
  %v1291 = vmul.f32 %v1093, %v1093
  %v1292 = vmul.f32 %v1094, %v1094
  %v1293 = vmul.f32 %v1095, %v1095
  %v1294 = vmul.f32 %v1096, %v1096
  %v1295 = vmul.f32 %v1097, %v1097
  %v1296 = vmul.f32 %v1098, %v1098
  %v1297 = vmul.f32 %v1099, %v1099
  %v1298 = vmul.f32 %v1100, %v1100
  %v1299 = vmul.f32 %v1101, %v1101
  %v1300 = vmul.f32 %v1102, %v1102
  %v1301 = vmul.f32 %v1103, %v1103
  %v1302 = vmul.f32 %v1104, %v1104
  %v1303 = vmul.f32 %v1105, %v1105
  %v1304 = vmul.f32 %v1106, %v1106
  %v1305 = vmul.f32 %v1107, %v1107
  %v1306 = vmul.f32 %v1108, %v1108
  %v1307 = vmul.f32 %v1109, %v1109
  %v1308 = vmul.f32 %v1110, %v1110
  %v1309 = vmul.f32 %v1111, %v1111
  %v1310 = vmul.f32 %v1112, %v1112
  %v1311 = vmul.f32 %v1113, %v1113
  %v1312 = vmul.f32 %v1114, %v1114
  %v1313 = vmul.f32 %v1115, %v1115
  %v1314 = vmul.f32 %v1116, %v1116
  %v1315 = vmul.f32 %v1117, %v1117
  %v1316 = vmul.f32 %v1118, %v1118
  %v1317 = vmul.f32 %v1119, %v1119
  %v1318 = vmul.f32 %v1120, %v1120
  %v1319 = vmul.f32 %v1121, %v1121
  %v1320 = vmul.f32 %v1122, %v1122
  %v1321 = vmul.f32 %v1123, %v1123
  %v1322 = vmul.f32 %v1124, %v1124
  %v1323 = vmul.f32 %v1125, %v1125
  %v1324 = vmul.f32 %v1126, %v1126
  %v1325 = vmul.f32 %v1127, %v1127
  %v1326 = vmul.f32 %v1128, %v1128
  %v1327 = vmul.f32 %v1129, %v1129
  %v1328 = vmul.f32 %v1130, %v1130
  %v1329 = vmul.f32 %v1131, %v1131
  %v1330 = vmul.f32 %v1132, %v1132
  %v1331 = vmul.f32 %v1133, %v1133
  %v1332 = vmul.f32 %v1134, %v1134
  %v1333 = vmul.f32 %v1135, %v1135
  %v1334 = vmul.f32 %v1136, %v1136
  %v1335 = vmul.f32 %v1137, %v1137
  %v1336 = vmul.f32 %v1138, %v1138
  %v1337 = vmul.f32 %v1139, %v1139
  %v1338 = vmul.f32 %v1140, %v1140
  %v1339 = vmul.f32 %v1141, %v1141
  %v1340 = vmul.f32 %v1142, %v1142
  %v1341 = vmul.f32 %v1143, %v1143
  %v1342 = vmul.f32 %v1144, %v1144
  %v1343 = vmul.f32 %v1145, %v1145
  %v1344 = vmul.f32 %v1146, %v1146
  %v1345 = vmul.f32 %v1147, %v1147
  %v1346 = vmul.f32 %v1148, %v1148
  %v1347 = vmul.f32 %v1149, %v1149
  %v1348 = vmul.f32 %v1150, %v1150
  %v1349 = vmul.f32 %v1151, %v1151
  %v1350 = vmul.f32 %v1152, %v1152
  %v1351 = vadd.f32 %v1287, %v1288
  %v1352 = vadd.f32 %v1351, %v1289
  %v1353 = vadd.f32 %v1352, %v1290
  %v1354 = vadd.f32 %v1353, %v1291
  %v1355 = vadd.f32 %v1354, %v1292
  %v1356 = vadd.f32 %v1355, %v1293
  %v1357 = vadd.f32 %v1356, %v1294
  %v1358 = vadd.f32 %v1357, %v1295
  %v1359 = vadd.f32 %v1358, %v1296
  %v1360 = vadd.f32 %v1359, %v1297
  %v1361 = vadd.f32 %v1360, %v1298
  %v1362 = vadd.f32 %v1361, %v1299
  %v1363 = vadd.f32 %v1362, %v1300
  %v1364 = vadd.f32 %v1363, %v1301
  %v1365 = vadd.f32 %v1364, %v1302
  %v1366 = vadd.f32 %v1365, %v1303
  %v1367 = vadd.f32 %v1366, %v1304
  %v1368 = vadd.f32 %v1367, %v1305
  %v1369 = vadd.f32 %v1368, %v1306
  %v1370 = vadd.f32 %v1369, %v1307
  %v1371 = vadd.f32 %v1370, %v1308
  %v1372 = vadd.f32 %v1371, %v1309
  %v1373 = vadd.f32 %v1372, %v1310
  %v1374 = vadd.f32 %v1373, %v1311
  %v1375 = vadd.f32 %v1374, %v1312
  %v1376 = vadd.f32 %v1375, %v1313
  %v1377 = vadd.f32 %v1376, %v1314
  %v1378 = vadd.f32 %v1377, %v1315
  %v1379 = vadd.f32 %v1378, %v1316
  %v1380 = vadd.f32 %v1379, %v1317
  %v1381 = vadd.f32 %v1380, %v1318
  %v1382 = vadd.f32 %v1381, %v1319
  %v1383 = vadd.f32 %v1382, %v1320
  %v1384 = vadd.f32 %v1383, %v1321
  %v1385 = vadd.f32 %v1384, %v1322
  %v1386 = vadd.f32 %v1385, %v1323
  %v1387 = vadd.f32 %v1386, %v1324
  %v1388 = vadd.f32 %v1387, %v1325
  %v1389 = vadd.f32 %v1388, %v1326
  %v1390 = vadd.f32 %v1389, %v1327
  %v1391 = vadd.f32 %v1390, %v1328
  %v1392 = vadd.f32 %v1391, %v1329
  %v1393 = vadd.f32 %v1392, %v1330
  %v1394 = vadd.f32 %v1393, %v1331
  %v1395 = vadd.f32 %v1394, %v1332
  %v1396 = vadd.f32 %v1395, %v1333
  %v1397 = vadd.f32 %v1396, %v1334
  %v1398 = vadd.f32 %v1397, %v1335
  %v1399 = vadd.f32 %v1398, %v1336
  %v1400 = vadd.f32 %v1399, %v1337
  %v1401 = vadd.f32 %v1400, %v1338
  %v1402 = vadd.f32 %v1401, %v1339
  %v1403 = vadd.f32 %v1402, %v1340
  %v1404 = vadd.f32 %v1403, %v1341
  %v1405 = vadd.f32 %v1404, %v1342
  %v1406 = vadd.f32 %v1405, %v1343
  %v1407 = vadd.f32 %v1406, %v1344
  %v1408 = vadd.f32 %v1407, %v1345
  %v1409 = vadd.f32 %v1408, %v1346
  %v1410 = vadd.f32 %v1409, %v1347
  %v1411 = vadd.f32 %v1410, %v1348
  %v1412 = vadd.f32 %v1411, %v1349
  %v1413 = vadd.f32 %v1412, %v1350
  %v1414 = vrot.slane %v1413, 4
  %v1415 = vadd.f32 %v1413, %v1414
  %v1416 = vrot.slane %v1415, 2
  %v1417 = vadd.f32 %v1415, %v1416
  %v1418 = vrot.slane %v1417, 1
  %v1419 = vadd.f32 %v1417, %v1418
  %1420 = vst [vmem:[%s9] sm:$0x1] %v1419
  // Predicated region
  $region26: #{conv_mixer_layer_nhwc.4} parent=0 // pred_check
    _
  $region27: #{conv_mixer_layer_nhwc.4} parent=0 // pred_check_branch
    %1422 = sbr.rel (0) target = $region29
  $region28: #{conv_mixer_layer_nhwc.4} parent=0 // pred_region
    _
  $region29: #{conv_mixer_layer_nhwc.4} parent=0 // pred_fallthru
    _
  // Predicated region
  $region30: #{conv_mixer_layer_nhwc.4} parent=0 // pred_check
    _
  $region31: #{conv_mixer_layer_nhwc.4} parent=0 // pred_check_branch
    %1424 = sbr.rel (0) target = $region33
  $region32: #{conv_mixer_layer_nhwc.4} parent=0 // pred_region
    _
  $region33: #{conv_mixer_layer_nhwc.4} parent=0 // pred_fallthru
    _
  // Predicated region
  $region34: #{conv_mixer_layer_nhwc.4} parent=0 // pred_check
    _
  $region35: #{conv_mixer_layer_nhwc.4} parent=0 // pred_check_branch
    %1426 = sbr.rel (0) target = $region37
  $region36: #{conv_mixer_layer_nhwc.4} parent=0 // pred_region
    _
  $region37: #{conv_mixer_layer_nhwc.4} parent=0 // pred_fallthru
    _
  // Predicated region
  $region38: #{conv_mixer_layer_nhwc.4} parent=0 // pred_check
    _
  $region39: #{conv_mixer_layer_nhwc.4} parent=0 // pred_check_branch
    %1428 = sbr.rel (0) target = $region41
  $region40: #{conv_mixer_layer_nhwc.4} parent=0 // pred_region
    _
  $region41: #{conv_mixer_layer_nhwc.4} parent=0 // pred_fallthru
    _
  // Predicated region
  $region42: #{conv_mixer_layer_nhwc.4} parent=0 // pred_check
    _
  $region43: #{conv_mixer_layer_nhwc.4} parent=0 // pred_check_branch
    %1430 = sbr.rel (0) target = $region45
  $region44: #{conv_mixer_layer_nhwc.4} parent=0 // pred_region
    _
  $region45: #{conv_mixer_layer_nhwc.4} parent=0 // pred_fallthru
    _
  // Predicated region
  $region46: #{conv_mixer_layer_nhwc.4} parent=0 // pred_check
    _
  $region47: #{conv_mixer_layer_nhwc.4} parent=0 // pred_check_branch
    %1432 = sbr.rel (0) target = $region49
  $region48: #{conv_mixer_layer_nhwc.4} parent=0 // pred_region
    _
  $region49: #{conv_mixer_layer_nhwc.4} parent=0 // pred_fallthru
    _
  // Predicated region
  $region50: #{conv_mixer_layer_nhwc.4} parent=0 // pred_check
    _
  $region51: #{conv_mixer_layer_nhwc.4} parent=0 // pred_check_branch
    %1434 = sbr.rel (0) target = $region53
  $region52: #{conv_mixer_layer_nhwc.4} parent=0 // pred_region
    _
  $region53: #{conv_mixer_layer_nhwc.4} parent=0 // pred_fallthru
    _
  // Predicated region
  $region54: #{conv_mixer_layer_nhwc.4} parent=0 // pred_check
    _
  $region55: #{conv_mixer_layer_nhwc.4} parent=0 // pred_check_branch
    %1436 = sbr.rel (0) target = $region57
  $region56: #{conv_mixer_layer_nhwc.4} parent=0 // pred_region
    _
  $region57: #{conv_mixer_layer_nhwc.4} parent=0 // pred_fallthru
    _

</llo_original>
